<compile_context>
chip_gen: v5e
topology: v5e:2x2
jax: 0.10.0
libtpu: 0.0.40
codegen_flags: <defaults>
</compile_context>

<pallas_src>
import jax
import jax.numpy as jnp
from jax.experimental import pallas as pl
from jax.experimental.pallas import tpu as pltpu

# ----------------------------- static volume geometry -----------------------------
# Layers ordered in decreasing z (as required by Volume.__init__):
#   2 detector layers, 4 passive layers, 2 detector layers.  Each layer is 0.1 m thick.
LAYER_SIZE = 0.1          # thickness of every layer (m)
VOXEL = 0.1               # passive voxel size (passive_size)
INV_VOXEL = 1.0 / VOXEL
LW = (0.8, 0.8)           # passive-volume length / width (m)
NX = int(round(LW[0] / VOXEL))   # 8
NY = int(round(LW[1] / VOXEL))   # 8
NVOX = NX * NY                   # 64 voxels per passive layer

# (is_passive,) per layer, decreasing z; z_top of layer 0 is 0.8 m.
LAYER_SPEC = (False, False, True, True, True, True, False, False)
N_LAYERS = len(LAYER_SPEC)
N_PASSIVE = sum(LAYER_SPEC)       # 4
N_DET = N_LAYERS - N_PASSIVE      # 4 detector layers, each with _n_costs = 1

HIGHLAND_K = 0.0136

N_CHUNK_ROWS = 16         # inner-loop chunk: 16 sublanes x 128 lanes = 2 vregs/plane (ILP x2)
TILE_R_CAP = 512          # max sublane rows per grid step (~9 MiB block set, ~18 MiB dbl-buffered)


def _pick_tile_r(rows, cap=TILE_R_CAP):
    """Largest multiple of N_CHUNK_ROWS that divides `rows`, <= cap, preferring >= 2 grid steps."""
    if rows >= 2 * N_CHUNK_ROWS:
        # keep at least 2 grid steps so the parallel axis can shard across both v7x TensorCores
        cap = min(cap, rows // 2)
    t = min(rows, cap)
    t -= t % N_CHUNK_ROWS
    while t > N_CHUNK_ROWS and rows % t != 0:
        t -= N_CHUNK_ROWS
    return max(t, N_CHUNK_ROWS)


def _bits3(i):
    """Boolean bit-planes (LSB first) of an int32 array with values in [0, 8)."""
    return [(i & 1) != 0, (i & 2) != 0, (i & 4) != 0]


def _select_tree(leaf_fn, lo, size, bits):
    """Depth-first binary select tree: table[idx] for idx in [lo, lo+size).

    `bits` are the boolean bit-planes of idx (LSB first); `leaf_fn(v)` returns the scalar table
    value at flat index v.  For a 64-entry table: 63 vselects, <= log2(size) live temporaries.
    """
    if size == 1:
        return leaf_fn(lo)
    half = size // 2
    lvl = half.bit_length() - 1            # the bit that splits this sub-range
    left = _select_tree(leaf_fn, lo, half, bits)
    right = _select_tree(leaf_fn, lo + half, half, bits)
    return jnp.where(bits[lvl], right, left)


# ----------------------------------- kernel ---------------------------------------
def volume_kernel(coeff_ref, state_ref, noise_ref, out_state_ref, snap_xy_ref):
    # coeff_ref : SMEM (N_PASSIVE * NVOX,) per-voxel Highland coefficients (flat = ix*NY + iy).
    # state_ref : VMEM (6, tile_r, 128); noise_ref: (N_PASSIVE, 2, tile_r, 128).
    # out_state_ref: (6, tile_r, 128);   snap_xy_ref : (N_LAYERS, 2, tile_r, 128).
    n_chunks = state_ref.shape[1] // N_CHUNK_ROWS

    @pl.loop(0, n_chunks)           # bounds the live vreg working set to one 16x128 chunk
    def _(c):
        r0 = pl.multiple_of(c * N_CHUNK_ROWS, N_CHUNK_ROWS)
        rows = pl.ds(r0, N_CHUNK_ROWS)

        x = state_ref[0, rows, :]
        y = state_ref[1, rows, :]
        thx = state_ref[3, rows, :]
        thy = state_ref[4, rows, :]
        mom = state_ref[5, rows, :]

        # Unchanged planes written up-front (out_state is a separate VMEM block even though the
        # HBM buffer is aliased) so mom/z drop out of the live set early.
        out_state_ref[5, rows, :] = mom
        out_state_ref[2, rows, :] = state_ref[2, rows, :] - N_LAYERS * LAYER_SIZE

        # 0.0136 / p, hoisted once for the whole chunk (approx EUP reciprocal).
        k_over_p = HIGHLAND_K * pl.reciprocal(mom, approx=True)

        # Initial tan(theta): only two evaluations per chunk, so use exact sin/cos + divide.
        tan_x = jnp.sin(thx) / jnp.cos(thx)
        tan_y = jnp.sin(thy) / jnp.cos(thy)

        p_idx = 0
        for li, is_passive in enumerate(LAYER_SPEC):
            if is_passive:
                # Issue this layer's 64 scalar coefficient loads ahead of the vector math so the
                # 2-wide scalar slot overlaps the VALU-bound propagate/select work.
                base = p_idx * NVOX
                layer_coeff = [coeff_ref[base + v] for v in range(NVOX)]

            # MuonBatch.propagate_dz: straight line through the layer (z handled analytically).
            x = x + LAYER_SIZE * tan_x
            y = y + LAYER_SIZE * tan_y

            if is_passive:
                # Voxel indices at the muon (x, y); muons outside the passive xy extent do not
                # scatter (tomopt masks them).
                ix = jnp.clip(jnp.floor(x * INV_VOXEL), 0.0, NX - 1.0).astype(jnp.int32)
                iy = jnp.clip(jnp.floor(y * INV_VOXEL), 0.0, NY - 1.0).astype(jnp.int32)
                inside = (x >= 0.0) & (x < LW[0]) & (y >= 0.0) & (y < LW[1])

                # Gather the per-voxel Highland coefficient with a binary select tree over the
                # 6 bits of the flat voxel index (= ix*NY + iy).
                bits = _bits3(iy) + _bits3(ix)
                coeff = _select_tree(lambda v: layer_coeff[v], 0, NVOX, bits)

                theta0 = jnp.where(inside, coeff * k_over_p, 0.0)
                dthx = theta0 * noise_ref[p_idx, 0, rows, :]
                dthy = theta0 * noise_ref[p_idx, 1, rows, :]
                thx = thx + dthx
                thy = thy + dthy
                # Incremental tangent update: the kick is << 1 rad so tan(delta) ~= delta and
                #   tan(th + delta) = (tan_th + delta) / (1 - tan_th * delta).
                # Replaces the full sin/cos recompute (the dominant VALU cost of the old kernel).
                tan_x = (tan_x + dthx) * pl.reciprocal(1.0 - tan_x * dthx, approx=True)
                tan_y = (tan_y + dthy) * pl.reciprocal(1.0 - tan_y * dthy, approx=True)
                p_idx += 1

            # mu.snapshot_xyz() after every layer: x, y recorded here, z reconstructed in wrapper.
            snap_xy_ref[li, 0, rows, :] = x
            snap_xy_ref[li, 1, rows, :] = y

        out_state_ref[0, rows, :] = x
        out_state_ref[1, rows, :] = y
        out_state_ref[3, rows, :] = thx
        out_state_ref[4, rows, :] = thy


# ----------------------------------- wrapper ---------------------------------------
@jax.jit
def volume_forward(rad, state, noise, budget_weights, budget):
    """rad: (N_PASSIVE, NVOX) X0 map; state: (6, R, 128); noise: (N_PASSIVE, 2, R, 128)."""
    R = state.shape[1]
    assert R % N_CHUNK_ROWS == 0, "muon rows must be a multiple of 16"
    tile_r = _pick_tile_r(R)
    grid = (R // tile_r,)

    # Per-voxel Highland coefficient: theta0 = (0.0136/p) * sqrt(dz/X0) * (1 + 0.038*ln(dz/X0)).
    t = LAYER_SIZE / rad
    coeff = (jnp.sqrt(t) * (1.0 + 0.038 * jnp.log(t))).astype(jnp.float32).reshape(-1)

    out_shape = (
        jax.ShapeDtypeStruct((6, R, 128), jnp.float32),              # final muon state
        jax.ShapeDtypeStruct((N_LAYERS, 2, R, 128), jnp.float32),    # xy snapshot per layer
    )

    out_state, snaps_xy = pl.pallas_call(
        volume_kernel,
        out_shape=out_shape,
        grid_spec=pltpu.PrefetchScalarGridSpec(
            num_scalar_prefetch=0,
            grid=grid,
            in_specs=[
                pl.BlockSpec(memory_space=pltpu.MemorySpace.SMEM),                  # coeff table
                pl.BlockSpec((6, tile_r, 128), lambda i: (0, i, 0)),                # muon state
                pl.BlockSpec((N_PASSIVE, 2, tile_r, 128), lambda i: (0, 0, i, 0)),  # noise
            ],
            out_specs=[
                pl.BlockSpec((6, tile_r, 128), lambda i: (0, i, 0)),
                pl.BlockSpec((N_LAYERS, 2, tile_r, 128), lambda i: (0, 0, i, 0)),
            ],
        ),
        input_output_aliases={1: 0},     # state input buffer -> final-state output (donated)
        compiler_params=pltpu.CompilerParams(
            dimension_semantics=("parallel",),
            vmem_limit_bytes=32 * 1024 * 1024,
        ),
    )(coeff, state, noise)

    # z snapshots are deterministic per layer (z decreases by LAYER_SIZE each layer):
    # reconstruct them from the final z plane instead of streaming 8 redundant planes from the
    # kernel (saves ~18% of kernel HBM writes and 8 vector stores per chunk).
    depths_up = (N_LAYERS - 1 - jnp.arange(N_LAYERS, dtype=jnp.float32)) * LAYER_SIZE
    snaps_z = out_state[2][None, :, :] + depths_up[:, None, None]

    # assign_budget(): budget * softmax(budget_weights) (one cost per detector layer).
    # This only rescales detector resolutions in tomopt and does not change the true muon xyz.
    layer_budgets = budget * jax.nn.softmax(budget_weights, axis=-1)
    return out_state, snaps_xy, snaps_z, layer_budgets


# ------------------------------------ main ------------------------------------------
if __name__ == "__main__":
    key = jax.random.PRNGKey(0)
    k_rad, k_xy, k_th, k_mom, k_noise = jax.random.split(key, 5)

    N_MUONS = 4096
    R = N_MUONS // 128          # 32 rows of 128 lanes -> tile_r = 16 -> 2 grid steps

    # Deterministic "parameters":
    # budget_weights initialised to zeros (nn.Parameter(torch.zeros(sum(_n_layer_costs))))
    budget = jnp.float32(15.0)
    budget_weights = jnp.zeros((N_DET,), jnp.float32)
    # radiation-length map per passive layer (load_rad_length), X0 in metres
    rad = jax.random.uniform(k_rad, (N_PASSIVE, NVOX), jnp.float32, 0.01, 0.5)

    # Incoming muon batch, entering at the top of the volume (z = h = 0.8 m)
    xy0 = jax.random.uniform(k_xy, (2, R, 128), jnp.float32, 0.1, 0.7)
    th0 = 0.05 * jax.random.normal(k_th, (2, R, 128), jnp.float32)
    mom0 = jax.random.uniform(k_mom, (1, R, 128), jnp.float32, 3.0, 8.0)
    z0 = jnp.full((1, R, 128), 0.8, jnp.float32)
    state = jnp.concatenate([xy0[:1], xy0[1:], z0, th0[:1], th0[1:], mom0], axis=0)  # (6, R, 128)

    # Multiple-scattering Gaussian noise (one (dtheta_x, dtheta_y) pair per passive layer)
    noise = jax.random.normal(k_noise, (N_PASSIVE, 2, R, 128), jnp.float32)

    out_state, snaps_xy, snaps_z, layer_budgets = volume_forward(
        rad, state, noise, budget_weights, budget)
    jax.block_until_ready((out_state, snaps_xy, snaps_z, layer_budgets))

    assert out_state.shape == (6, R, 128)
    assert snaps_xy.shape == (N_LAYERS, 2, R, 128)
    assert snaps_z.shape == (N_LAYERS, R, 128)
    assert layer_budgets.shape == (N_DET,)
    assert bool(jnp.all(jnp.isfinite(out_state))) and bool(jnp.all(jnp.isfinite(snaps_xy)))
    # z after the last layer must equal 0.8 - N_LAYERS * 0.1 = 0.0
    assert bool(jnp.allclose(snaps_z[-1], 0.0, atol=1e-5))
    assert bool(jnp.allclose(out_state[2], 0.0, atol=1e-5))

    print("KERNEL_OK")
</pallas_src>

<mosaic_0001>
module attributes {stable_mosaic.version = 11 : i64} {
  func.func @volume_kernel(%arg0: i32, %arg1: memref<256xf32, #tpu.memory_space<smem>>, %arg2: memref<6x16x128xf32, #tpu.memory_space<vmem>>, %arg3: memref<4x2x16x128xf32, #tpu.memory_space<vmem>>, %arg4: memref<6x16x128xf32, #tpu.memory_space<vmem>>, %arg5: memref<8x2x16x128xf32, #tpu.memory_space<vmem>>) attributes {dimension_semantics = [#tpu.dimension_semantics<parallel>], iteration_bounds = array<i64: 2>, scalar_prefetch = 0 : i64, scratch_operands = 0 : i64, tpu.core_type = #tpu.core_type<tc>, window_params = [{transform_indices = @transform_0, window_bounds = array<i64: 256>}, {transform_indices = @transform_1, window_bounds = array<i64: 6, 16, 128>}, {transform_indices = @transform_2, window_bounds = array<i64: 4, 2, 16, 128>}, {transform_indices = @transform_3, window_bounds = array<i64: 6, 16, 128>}, {transform_indices = @transform_4, window_bounds = array<i64: 8, 2, 16, 128>}]} {
    %c0_i32 = arith.constant 0 : i32
    %c1_i32 = arith.constant 1 : i32
    %0 = arith.muli %c0_i32, %c1_i32 : i32
    %c0_i32_0 = arith.constant 0 : i32
    %1 = arith.addi %c0_i32_0, %0 : i32
    %c16_i32 = arith.constant 16 : i32
    %2 = arith.muli %1, %c16_i32 : i32
    %3 = tpu.assume_multiple %2, 16 : i32
    %c0 = arith.constant 0 : index
    %4 = arith.index_cast %3 : i32 to index
    %c0_1 = arith.constant 0 : index
    %5 = vector.load %arg2[%c0, %4, %c0_1] : memref<6x16x128xf32, #tpu.memory_space<vmem>>, vector<1x16x128xf32>
    %6 = vector.shape_cast %5 : vector<1x16x128xf32> to vector<16x128xf32>
    %c1 = arith.constant 1 : index
    %7 = arith.index_cast %3 : i32 to index
    %c0_2 = arith.constant 0 : index
    %8 = vector.load %arg2[%c1, %7, %c0_2] : memref<6x16x128xf32, #tpu.memory_space<vmem>>, vector<1x16x128xf32>
    %9 = vector.shape_cast %8 : vector<1x16x128xf32> to vector<16x128xf32>
    %c3 = arith.constant 3 : index
    %10 = arith.index_cast %3 : i32 to index
    %c0_3 = arith.constant 0 : index
    %11 = vector.load %arg2[%c3, %10, %c0_3] : memref<6x16x128xf32, #tpu.memory_space<vmem>>, vector<1x16x128xf32>
    %12 = vector.shape_cast %11 : vector<1x16x128xf32> to vector<16x128xf32>
    %c4 = arith.constant 4 : index
    %13 = arith.index_cast %3 : i32 to index
    %c0_4 = arith.constant 0 : index
    %14 = vector.load %arg2[%c4, %13, %c0_4] : memref<6x16x128xf32, #tpu.memory_space<vmem>>, vector<1x16x128xf32>
    %15 = vector.shape_cast %14 : vector<1x16x128xf32> to vector<16x128xf32>
    %c5 = arith.constant 5 : index
    %16 = arith.index_cast %3 : i32 to index
    %c0_5 = arith.constant 0 : index
    %17 = vector.load %arg2[%c5, %16, %c0_5] : memref<6x16x128xf32, #tpu.memory_space<vmem>>, vector<1x16x128xf32>
    %18 = vector.shape_cast %17 : vector<1x16x128xf32> to vector<16x128xf32>
    %c5_6 = arith.constant 5 : index
    %19 = arith.index_cast %3 : i32 to index
    %c0_7 = arith.constant 0 : index
    %20 = vector.load %arg4[%c5_6, %19, %c0_7] : memref<6x16x128xf32, #tpu.memory_space<vmem>>, vector<1x16x128xf32>
    %21 = vector.shape_cast %20 : vector<1x16x128xf32> to vector<16x128xf32>
    %22 = vector.shape_cast %18 : vector<16x128xf32> to vector<1x16x128xf32>
    tpu.vector_store %arg4[%c5_6, %19, %c0_7], %22 {strides = array<i32>} : memref<6x16x128xf32, #tpu.memory_space<vmem>>, vector<1x16x128xf32>,
    %c2 = arith.constant 2 : index
    %23 = arith.index_cast %3 : i32 to index
    %c0_8 = arith.constant 0 : index
    %24 = vector.load %arg2[%c2, %23, %c0_8] : memref<6x16x128xf32, #tpu.memory_space<vmem>>, vector<1x16x128xf32>
    %25 = vector.shape_cast %24 : vector<1x16x128xf32> to vector<16x128xf32>
    %cst = arith.constant 8.000000e-01 : f32
    %26 = vector.broadcast %cst : f32 to vector<16x128xf32>
    %27 = arith.subf %25, %26 : vector<16x128xf32>
    %c2_9 = arith.constant 2 : index
    %28 = arith.index_cast %3 : i32 to index
    %c0_10 = arith.constant 0 : index
    %29 = vector.load %arg4[%c2_9, %28, %c0_10] : memref<6x16x128xf32, #tpu.memory_space<vmem>>, vector<1x16x128xf32>
    %30 = vector.shape_cast %29 : vector<1x16x128xf32> to vector<16x128xf32>
    %31 = vector.shape_cast %27 : vector<16x128xf32> to vector<1x16x128xf32>
    tpu.vector_store %arg4[%c2_9, %28, %c0_10], %31 {strides = array<i32>} : memref<6x16x128xf32, #tpu.memory_space<vmem>>, vector<1x16x128xf32>,
    %32 = tpu.reciprocal %18 {approx = true} : vector<16x128xf32> -> vector<16x128xf32>
    %cst_11 = arith.constant 1.360000e-02 : f32
    %33 = vector.broadcast %cst_11 : f32 to vector<16x128xf32>
    %34 = arith.mulf %33, %32 : vector<16x128xf32>
    %35 = math.sin %12 : vector<16x128xf32>
    %36 = math.cos %12 : vector<16x128xf32>
    %37 = arith.divf %35, %36 : vector<16x128xf32>
    %38 = math.sin %15 : vector<16x128xf32>
    %39 = math.cos %15 : vector<16x128xf32>
    %40 = arith.divf %38, %39 : vector<16x128xf32>
    %cst_12 = arith.constant 1.000000e-01 : f32
    %41 = vector.broadcast %cst_12 : f32 to vector<16x128xf32>
    %42 = arith.mulf %41, %37 : vector<16x128xf32>
    %43 = arith.addf %6, %42 : vector<16x128xf32>
    %cst_13 = arith.constant 1.000000e-01 : f32
    %44 = vector.broadcast %cst_13 : f32 to vector<16x128xf32>
    %45 = arith.mulf %44, %40 : vector<16x128xf32>
    %46 = arith.addf %9, %45 : vector<16x128xf32>
    %c0_14 = arith.constant 0 : index
    %c0_15 = arith.constant 0 : index
    %47 = arith.index_cast %3 : i32 to index
    %c0_16 = arith.constant 0 : index
    %48 = vector.load %arg5[%c0_14, %c0_15, %47, %c0_16] : memref<8x2x16x128xf32, #tpu.memory_space<vmem>>, vector<1x1x16x128xf32>
    %49 = vector.shape_cast %48 : vector<1x1x16x128xf32> to vector<16x128xf32>
    %50 = vector.shape_cast %43 : vector<16x128xf32> to vector<1x1x16x128xf32>
    tpu.vector_store %arg5[%c0_14, %c0_15, %47, %c0_16], %50 {strides = array<i32>} : memref<8x2x16x128xf32, #tpu.memory_space<vmem>>, vector<1x1x16x128xf32>,
    %c0_17 = arith.constant 0 : index
    %c1_18 = arith.constant 1 : index
    %51 = arith.index_cast %3 : i32 to index
    %c0_19 = arith.constant 0 : index
    %52 = vector.load %arg5[%c0_17, %c1_18, %51, %c0_19] : memref<8x2x16x128xf32, #tpu.memory_space<vmem>>, vector<1x1x16x128xf32>
    %53 = vector.shape_cast %52 : vector<1x1x16x128xf32> to vector<16x128xf32>
    %54 = vector.shape_cast %46 : vector<16x128xf32> to vector<1x1x16x128xf32>
    tpu.vector_store %arg5[%c0_17, %c1_18, %51, %c0_19], %54 {strides = array<i32>} : memref<8x2x16x128xf32, #tpu.memory_space<vmem>>, vector<1x1x16x128xf32>,
    %cst_20 = arith.constant 1.000000e-01 : f32
    %55 = vector.broadcast %cst_20 : f32 to vector<16x128xf32>
    %56 = arith.mulf %55, %37 : vector<16x128xf32>
    %57 = arith.addf %43, %56 : vector<16x128xf32>
    %cst_21 = arith.constant 1.000000e-01 : f32
    %58 = vector.broadcast %cst_21 : f32 to vector<16x128xf32>
    %59 = arith.mulf %58, %40 : vector<16x128xf32>
    %60 = arith.addf %46, %59 : vector<16x128xf32>
    %c1_22 = arith.constant 1 : index
    %c0_23 = arith.constant 0 : index
    %61 = arith.index_cast %3 : i32 to index
    %c0_24 = arith.constant 0 : index
    %62 = vector.load %arg5[%c1_22, %c0_23, %61, %c0_24] : memref<8x2x16x128xf32, #tpu.memory_space<vmem>>, vector<1x1x16x128xf32>
    %63 = vector.shape_cast %62 : vector<1x1x16x128xf32> to vector<16x128xf32>
    %64 = vector.shape_cast %57 : vector<16x128xf32> to vector<1x1x16x128xf32>
    tpu.vector_store %arg5[%c1_22, %c0_23, %61, %c0_24], %64 {strides = array<i32>} : memref<8x2x16x128xf32, #tpu.memory_space<vmem>>, vector<1x1x16x128xf32>,
    %c1_25 = arith.constant 1 : index
    %c1_26 = arith.constant 1 : index
    %65 = arith.index_cast %3 : i32 to index
    %c0_27 = arith.constant 0 : index
    %66 = vector.load %arg5[%c1_25, %c1_26, %65, %c0_27] : memref<8x2x16x128xf32, #tpu.memory_space<vmem>>, vector<1x1x16x128xf32>
    %67 = vector.shape_cast %66 : vector<1x1x16x128xf32> to vector<16x128xf32>
    %68 = vector.shape_cast %60 : vector<16x128xf32> to vector<1x1x16x128xf32>
    tpu.vector_store %arg5[%c1_25, %c1_26, %65, %c0_27], %68 {strides = array<i32>} : memref<8x2x16x128xf32, #tpu.memory_space<vmem>>, vector<1x1x16x128xf32>,
    %c0_28 = arith.constant 0 : index
    %69 = memref.load %arg1[%c0_28] : memref<256xf32, #tpu.memory_space<smem>>
    %c1_29 = arith.constant 1 : index
    %70 = memref.load %arg1[%c1_29] : memref<256xf32, #tpu.memory_space<smem>>
    %c2_30 = arith.constant 2 : index
    %71 = memref.load %arg1[%c2_30] : memref<256xf32, #tpu.memory_space<smem>>
    %c3_31 = arith.constant 3 : index
    %72 = memref.load %arg1[%c3_31] : memref<256xf32, #tpu.memory_space<smem>>
    %c4_32 = arith.constant 4 : index
    %73 = memref.load %arg1[%c4_32] : memref<256xf32, #tpu.memory_space<smem>>
    %c5_33 = arith.constant 5 : index
    %74 = memref.load %arg1[%c5_33] : memref<256xf32, #tpu.memory_space<smem>>
    %c6 = arith.constant 6 : index
    %75 = memref.load %arg1[%c6] : memref<256xf32, #tpu.memory_space<smem>>
    %c7 = arith.constant 7 : index
    %76 = memref.load %arg1[%c7] : memref<256xf32, #tpu.memory_space<smem>>
    %c8 = arith.constant 8 : index
    %77 = memref.load %arg1[%c8] : memref<256xf32, #tpu.memory_space<smem>>
    %c9 = arith.constant 9 : index
    %78 = memref.load %arg1[%c9] : memref<256xf32, #tpu.memory_space<smem>>
    %c10 = arith.constant 10 : index
    %79 = memref.load %arg1[%c10] : memref<256xf32, #tpu.memory_space<smem>>
    %c11 = arith.constant 11 : index
    %80 = memref.load %arg1[%c11] : memref<256xf32, #tpu.memory_space<smem>>
    %c12 = arith.constant 12 : index
    %81 = memref.load %arg1[%c12] : memref<256xf32, #tpu.memory_space<smem>>
    %c13 = arith.constant 13 : index
    %82 = memref.load %arg1[%c13] : memref<256xf32, #tpu.memory_space<smem>>
    %c14 = arith.constant 14 : index
    %83 = memref.load %arg1[%c14] : memref<256xf32, #tpu.memory_space<smem>>
    %c15 = arith.constant 15 : index
    %84 = memref.load %arg1[%c15] : memref<256xf32, #tpu.memory_space<smem>>
    %c16 = arith.constant 16 : index
    %85 = memref.load %arg1[%c16] : memref<256xf32, #tpu.memory_space<smem>>
    %c17 = arith.constant 17 : index
    %86 = memref.load %arg1[%c17] : memref<256xf32, #tpu.memory_space<smem>>
    %c18 = arith.constant 18 : index
    %87 = memref.load %arg1[%c18] : memref<256xf32, #tpu.memory_space<smem>>
    %c19 = arith.constant 19 : index
    %88 = memref.load %arg1[%c19] : memref<256xf32, #tpu.memory_space<smem>>
    %c20 = arith.constant 20 : index
    %89 = memref.load %arg1[%c20] : memref<256xf32, #tpu.memory_space<smem>>
    %c21 = arith.constant 21 : index
    %90 = memref.load %arg1[%c21] : memref<256xf32, #tpu.memory_space<smem>>
    %c22 = arith.constant 22 : index
    %91 = memref.load %arg1[%c22] : memref<256xf32, #tpu.memory_space<smem>>
    %c23 = arith.constant 23 : index
    %92 = memref.load %arg1[%c23] : memref<256xf32, #tpu.memory_space<smem>>
    %c24 = arith.constant 24 : index
    %93 = memref.load %arg1[%c24] : memref<256xf32, #tpu.memory_space<smem>>
    %c25 = arith.constant 25 : index
    %94 = memref.load %arg1[%c25] : memref<256xf32, #tpu.memory_space<smem>>
    %c26 = arith.constant 26 : index
    %95 = memref.load %arg1[%c26] : memref<256xf32, #tpu.memory_space<smem>>
    %c27 = arith.constant 27 : index
    %96 = memref.load %arg1[%c27] : memref<256xf32, #tpu.memory_space<smem>>
    %c28 = arith.constant 28 : index
    %97 = memref.load %arg1[%c28] : memref<256xf32, #tpu.memory_space<smem>>
    %c29 = arith.constant 29 : index
    %98 = memref.load %arg1[%c29] : memref<256xf32, #tpu.memory_space<smem>>
    %c30 = arith.constant 30 : index
    %99 = memref.load %arg1[%c30] : memref<256xf32, #tpu.memory_space<smem>>
    %c31 = arith.constant 31 : index
    %100 = memref.load %arg1[%c31] : memref<256xf32, #tpu.memory_space<smem>>
    %c32 = arith.constant 32 : index
    %101 = memref.load %arg1[%c32] : memref<256xf32, #tpu.memory_space<smem>>
    %c33 = arith.constant 33 : index
    %102 = memref.load %arg1[%c33] : memref<256xf32, #tpu.memory_space<smem>>
    %c34 = arith.constant 34 : index
    %103 = memref.load %arg1[%c34] : memref<256xf32, #tpu.memory_space<smem>>
    %c35 = arith.constant 35 : index
    %104 = memref.load %arg1[%c35] : memref<256xf32, #tpu.memory_space<smem>>
    %c36 = arith.constant 36 : index
    %105 = memref.load %arg1[%c36] : memref<256xf32, #tpu.memory_space<smem>>
    %c37 = arith.constant 37 : index
    %106 = memref.load %arg1[%c37] : memref<256xf32, #tpu.memory_space<smem>>
    %c38 = arith.constant 38 : index
    %107 = memref.load %arg1[%c38] : memref<256xf32, #tpu.memory_space<smem>>
    %c39 = arith.constant 39 : index
    %108 = memref.load %arg1[%c39] : memref<256xf32, #tpu.memory_space<smem>>
    %c40 = arith.constant 40 : index
    %109 = memref.load %arg1[%c40] : memref<256xf32, #tpu.memory_space<smem>>
    %c41 = arith.constant 41 : index
    %110 = memref.load %arg1[%c41] : memref<256xf32, #tpu.memory_space<smem>>
    %c42 = arith.constant 42 : index
    %111 = memref.load %arg1[%c42] : memref<256xf32, #tpu.memory_space<smem>>
    %c43 = arith.constant 43 : index
    %112 = memref.load %arg1[%c43] : memref<256xf32, #tpu.memory_space<smem>>
    %c44 = arith.constant 44 : index
    %113 = memref.load %arg1[%c44] : memref<256xf32, #tpu.memory_space<smem>>
    %c45 = arith.constant 45 : index
    %114 = memref.load %arg1[%c45] : memref<256xf32, #tpu.memory_space<smem>>
    %c46 = arith.constant 46 : index
    %115 = memref.load %arg1[%c46] : memref<256xf32, #tpu.memory_space<smem>>
    %c47 = arith.constant 47 : index
    %116 = memref.load %arg1[%c47] : memref<256xf32, #tpu.memory_space<smem>>
    %c48 = arith.constant 48 : index
    %117 = memref.load %arg1[%c48] : memref<256xf32, #tpu.memory_space<smem>>
    %c49 = arith.constant 49 : index
    %118 = memref.load %arg1[%c49] : memref<256xf32, #tpu.memory_space<smem>>
    %c50 = arith.constant 50 : index
    %119 = memref.load %arg1[%c50] : memref<256xf32, #tpu.memory_space<smem>>
    %c51 = arith.constant 51 : index
    %120 = memref.load %arg1[%c51] : memref<256xf32, #tpu.memory_space<smem>>
    %c52 = arith.constant 52 : index
    %121 = memref.load %arg1[%c52] : memref<256xf32, #tpu.memory_space<smem>>
    %c53 = arith.constant 53 : index
    %122 = memref.load %arg1[%c53] : memref<256xf32, #tpu.memory_space<smem>>
    %c54 = arith.constant 54 : index
    %123 = memref.load %arg1[%c54] : memref<256xf32, #tpu.memory_space<smem>>
    %c55 = arith.constant 55 : index
    %124 = memref.load %arg1[%c55] : memref<256xf32, #tpu.memory_space<smem>>
    %c56 = arith.constant 56 : index
    %125 = memref.load %arg1[%c56] : memref<256xf32, #tpu.memory_space<smem>>
    %c57 = arith.constant 57 : index
    %126 = memref.load %arg1[%c57] : memref<256xf32, #tpu.memory_space<smem>>
    %c58 = arith.constant 58 : index
    %127 = memref.load %arg1[%c58] : memref<256xf32, #tpu.memory_space<smem>>
    %c59 = arith.constant 59 : index
    %128 = memref.load %arg1[%c59] : memref<256xf32, #tpu.memory_space<smem>>
    %c60 = arith.constant 60 : index
    %129 = memref.load %arg1[%c60] : memref<256xf32, #tpu.memory_space<smem>>
    %c61 = arith.constant 61 : index
    %130 = memref.load %arg1[%c61] : memref<256xf32, #tpu.memory_space<smem>>
    %c62 = arith.constant 62 : index
    %131 = memref.load %arg1[%c62] : memref<256xf32, #tpu.memory_space<smem>>
    %c63 = arith.constant 63 : index
    %132 = memref.load %arg1[%c63] : memref<256xf32, #tpu.memory_space<smem>>
    %cst_34 = arith.constant 1.000000e-01 : f32
    %133 = vector.broadcast %cst_34 : f32 to vector<16x128xf32>
    %134 = arith.mulf %133, %37 : vector<16x128xf32>
    %135 = arith.addf %57, %134 : vector<16x128xf32>
    %cst_35 = arith.constant 1.000000e-01 : f32
    %136 = vector.broadcast %cst_35 : f32 to vector<16x128xf32>
    %137 = arith.mulf %136, %40 : vector<16x128xf32>
    %138 = arith.addf %60, %137 : vector<16x128xf32>
    %cst_36 = arith.constant 1.000000e+01 : f32
    %139 = vector.broadcast %cst_36 : f32 to vector<16x128xf32>
    %140 = arith.mulf %135, %139 : vector<16x128xf32>
    %141 = math.floor %140 : vector<16x128xf32>
    %cst_37 = arith.constant 0.000000e+00 : f32
    %cst_38 = arith.constant 7.000000e+00 : f32
    %142 = vector.broadcast %cst_37 : f32 to vector<16x128xf32>
    %143 = arith.maximumf %142, %141 : vector<16x128xf32>
    %144 = vector.broadcast %cst_38 : f32 to vector<16x128xf32>
    %145 = arith.minimumf %144, %143 : vector<16x128xf32>
    %146 = arith.fptosi %145 : vector<16x128xf32> to vector<16x128xi32>
    %cst_39 = arith.constant 1.000000e+01 : f32
    %147 = vector.broadcast %cst_39 : f32 to vector<16x128xf32>
    %148 = arith.mulf %138, %147 : vector<16x128xf32>
    %149 = math.floor %148 : vector<16x128xf32>
    %cst_40 = arith.constant 0.000000e+00 : f32
    %cst_41 = arith.constant 7.000000e+00 : f32
    %150 = vector.broadcast %cst_40 : f32 to vector<16x128xf32>
    %151 = arith.maximumf %150, %149 : vector<16x128xf32>
    %152 = vector.broadcast %cst_41 : f32 to vector<16x128xf32>
    %153 = arith.minimumf %152, %151 : vector<16x128xf32>
    %154 = arith.fptosi %153 : vector<16x128xf32> to vector<16x128xi32>
    %cst_42 = arith.constant 0.000000e+00 : f32
    %155 = vector.broadcast %cst_42 : f32 to vector<16x128xf32>
    %156 = arith.cmpf oge, %135, %155 : vector<16x128xf32>
    %cst_43 = arith.constant 8.000000e-01 : f32
    %157 = vector.broadcast %cst_43 : f32 to vector<16x128xf32>
    %158 = arith.cmpf olt, %135, %157 : vector<16x128xf32>
    %159 = arith.andi %156, %158 : vector<16x128xi1>
    %cst_44 = arith.constant 0.000000e+00 : f32
    %160 = vector.broadcast %cst_44 : f32 to vector<16x128xf32>
    %161 = arith.cmpf oge, %138, %160 : vector<16x128xf32>
    %162 = arith.andi %159, %161 : vector<16x128xi1>
    %cst_45 = arith.constant 8.000000e-01 : f32
    %163 = vector.broadcast %cst_45 : f32 to vector<16x128xf32>
    %164 = arith.cmpf olt, %138, %163 : vector<16x128xf32>
    %165 = arith.andi %162, %164 : vector<16x128xi1>
    %c1_i32_46 = arith.constant 1 : i32
    %166 = vector.broadcast %c1_i32_46 : i32 to vector<16x128xi32>
    %167 = arith.andi %154, %166 : vector<16x128xi32>
    %c0_i32_47 = arith.constant 0 : i32
    %168 = vector.broadcast %c0_i32_47 : i32 to vector<16x128xi32>
    %169 = arith.cmpi ne, %167, %168 : vector<16x128xi32>
    %c2_i32 = arith.constant 2 : i32
    %170 = vector.broadcast %c2_i32 : i32 to vector<16x128xi32>
    %171 = arith.andi %154, %170 : vector<16x128xi32>
    %c0_i32_48 = arith.constant 0 : i32
    %172 = vector.broadcast %c0_i32_48 : i32 to vector<16x128xi32>
    %173 = arith.cmpi ne, %171, %172 : vector<16x128xi32>
    %c4_i32 = arith.constant 4 : i32
    %174 = vector.broadcast %c4_i32 : i32 to vector<16x128xi32>
    %175 = arith.andi %154, %174 : vector<16x128xi32>
    %c0_i32_49 = arith.constant 0 : i32
    %176 = vector.broadcast %c0_i32_49 : i32 to vector<16x128xi32>
    %177 = arith.cmpi ne, %175, %176 : vector<16x128xi32>
    %c1_i32_50 = arith.constant 1 : i32
    %178 = vector.broadcast %c1_i32_50 : i32 to vector<16x128xi32>
    %179 = arith.andi %146, %178 : vector<16x128xi32>
    %c0_i32_51 = arith.constant 0 : i32
    %180 = vector.broadcast %c0_i32_51 : i32 to vector<16x128xi32>
    %181 = arith.cmpi ne, %179, %180 : vector<16x128xi32>
    %c2_i32_52 = arith.constant 2 : i32
    %182 = vector.broadcast %c2_i32_52 : i32 to vector<16x128xi32>
    %183 = arith.andi %146, %182 : vector<16x128xi32>
    %c0_i32_53 = arith.constant 0 : i32
    %184 = vector.broadcast %c0_i32_53 : i32 to vector<16x128xi32>
    %185 = arith.cmpi ne, %183, %184 : vector<16x128xi32>
    %c4_i32_54 = arith.constant 4 : i32
    %186 = vector.broadcast %c4_i32_54 : i32 to vector<16x128xi32>
    %187 = arith.andi %146, %186 : vector<16x128xi32>
    %c0_i32_55 = arith.constant 0 : i32
    %188 = vector.broadcast %c0_i32_55 : i32 to vector<16x128xi32>
    %189 = arith.cmpi ne, %187, %188 : vector<16x128xi32>
    %190 = vector.broadcast %70 : f32 to vector<16x128xf32>
    %191 = vector.broadcast %69 : f32 to vector<16x128xf32>
    %192 = arith.select %169, %190, %191 : vector<16x128xi1>, vector<16x128xf32>
    %193 = vector.broadcast %72 : f32 to vector<16x128xf32>
    %194 = vector.broadcast %71 : f32 to vector<16x128xf32>
    %195 = arith.select %169, %193, %194 : vector<16x128xi1>, vector<16x128xf32>
    %196 = arith.select %173, %195, %192 : vector<16x128xi1>, vector<16x128xf32>
    %197 = vector.broadcast %74 : f32 to vector<16x128xf32>
    %198 = vector.broadcast %73 : f32 to vector<16x128xf32>
    %199 = arith.select %169, %197, %198 : vector<16x128xi1>, vector<16x128xf32>
    %200 = vector.broadcast %76 : f32 to vector<16x128xf32>
    %201 = vector.broadcast %75 : f32 to vector<16x128xf32>
    %202 = arith.select %169, %200, %201 : vector<16x128xi1>, vector<16x128xf32>
    %203 = arith.select %173, %202, %199 : vector<16x128xi1>, vector<16x128xf32>
    %204 = arith.select %177, %203, %196 : vector<16x128xi1>, vector<16x128xf32>
    %205 = vector.broadcast %78 : f32 to vector<16x128xf32>
    %206 = vector.broadcast %77 : f32 to vector<16x128xf32>
    %207 = arith.select %169, %205, %206 : vector<16x128xi1>, vector<16x128xf32>
    %208 = vector.broadcast %80 : f32 to vector<16x128xf32>
    %209 = vector.broadcast %79 : f32 to vector<16x128xf32>
    %210 = arith.select %169, %208, %209 : vector<16x128xi1>, vector<16x128xf32>
    %211 = arith.select %173, %210, %207 : vector<16x128xi1>, vector<16x128xf32>
    %212 = vector.broadcast %82 : f32 to vector<16x128xf32>
    %213 = vector.broadcast %81 : f32 to vector<16x128xf32>
    %214 = arith.select %169, %212, %213 : vector<16x128xi1>, vector<16x128xf32>
    %215 = vector.broadcast %84 : f32 to vector<16x128xf32>
    %216 = vector.broadcast %83 : f32 to vector<16x128xf32>
    %217 = arith.select %169, %215, %216 : vector<16x128xi1>, vector<16x128xf32>
    %218 = arith.select %173, %217, %214 : vector<16x128xi1>, vector<16x128xf32>
    %219 = arith.select %177, %218, %211 : vector<16x128xi1>, vector<16x128xf32>
    %220 = arith.select %181, %219, %204 : vector<16x128xi1>, vector<16x128xf32>
    %221 = vector.broadcast %86 : f32 to vector<16x128xf32>
    %222 = vector.broadcast %85 : f32 to vector<16x128xf32>
    %223 = arith.select %169, %221, %222 : vector<16x128xi1>, vector<16x128xf32>
    %224 = vector.broadcast %88 : f32 to vector<16x128xf32>
    %225 = vector.broadcast %87 : f32 to vector<16x128xf32>
    %226 = arith.select %169, %224, %225 : vector<16x128xi1>, vector<16x128xf32>
    %227 = arith.select %173, %226, %223 : vector<16x128xi1>, vector<16x128xf32>
    %228 = vector.broadcast %90 : f32 to vector<16x128xf32>
    %229 = vector.broadcast %89 : f32 to vector<16x128xf32>
    %230 = arith.select %169, %228, %229 : vector<16x128xi1>, vector<16x128xf32>
    %231 = vector.broadcast %92 : f32 to vector<16x128xf32>
    %232 = vector.broadcast %91 : f32 to vector<16x128xf32>
    %233 = arith.select %169, %231, %232 : vector<16x128xi1>, vector<16x128xf32>
    %234 = arith.select %173, %233, %230 : vector<16x128xi1>, vector<16x128xf32>
    %235 = arith.select %177, %234, %227 : vector<16x128xi1>, vector<16x128xf32>
    %236 = vector.broadcast %94 : f32 to vector<16x128xf32>
    %237 = vector.broadcast %93 : f32 to vector<16x128xf32>
    %238 = arith.select %169, %236, %237 : vector<16x128xi1>, vector<16x128xf32>
    %239 = vector.broadcast %96 : f32 to vector<16x128xf32>
    %240 = vector.broadcast %95 : f32 to vector<16x128xf32>
    %241 = arith.select %169, %239, %240 : vector<16x128xi1>, vector<16x128xf32>
    %242 = arith.select %173, %241, %238 : vector<16x128xi1>, vector<16x128xf32>
    %243 = vector.broadcast %98 : f32 to vector<16x128xf32>
    %244 = vector.broadcast %97 : f32 to vector<16x128xf32>
    %245 = arith.select %169, %243, %244 : vector<16x128xi1>, vector<16x128xf32>
    %246 = vector.broadcast %100 : f32 to vector<16x128xf32>
    %247 = vector.broadcast %99 : f32 to vector<16x128xf32>
    %248 = arith.select %169, %246, %247 : vector<16x128xi1>, vector<16x128xf32>
    %249 = arith.select %173, %248, %245 : vector<16x128xi1>, vector<16x128xf32>
    %250 = arith.select %177, %249, %242 : vector<16x128xi1>, vector<16x128xf32>
    %251 = arith.select %181, %250, %235 : vector<16x128xi1>, vector<16x128xf32>
    %252 = arith.select %185, %251, %220 : vector<16x128xi1>, vector<16x128xf32>
    %253 = vector.broadcast %102 : f32 to vector<16x128xf32>
    %254 = vector.broadcast %101 : f32 to vector<16x128xf32>
    %255 = arith.select %169, %253, %254 : vector<16x128xi1>, vector<16x128xf32>
    %256 = vector.broadcast %104 : f32 to vector<16x128xf32>
    %257 = vector.broadcast %103 : f32 to vector<16x128xf32>
    %258 = arith.select %169, %256, %257 : vector<16x128xi1>, vector<16x128xf32>
    %259 = arith.select %173, %258, %255 : vector<16x128xi1>, vector<16x128xf32>
    %260 = vector.broadcast %106 : f32 to vector<16x128xf32>
    %261 = vector.broadcast %105 : f32 to vector<16x128xf32>
    %262 = arith.select %169, %260, %261 : vector<16x128xi1>, vector<16x128xf32>
    %263 = vector.broadcast %108 : f32 to vector<16x128xf32>
    %264 = vector.broadcast %107 : f32 to vector<16x128xf32>
    %265 = arith.select %169, %263, %264 : vector<16x128xi1>, vector<16x128xf32>
    %266 = arith.select %173, %265, %262 : vector<16x128xi1>, vector<16x128xf32>
    %267 = arith.select %177, %266, %259 : vector<16x128xi1>, vector<16x128xf32>
    %268 = vector.broadcast %110 : f32 to vector<16x128xf32>
    %269 = vector.broadcast %109 : f32 to vector<16x128xf32>
    %270 = arith.select %169, %268, %269 : vector<16x128xi1>, vector<16x128xf32>
    %271 = vector.broadcast %112 : f32 to vector<16x128xf32>
    %272 = vector.broadcast %111 : f32 to vector<16x128xf32>
    %273 = arith.select %169, %271, %272 : vector<16x128xi1>, vector<16x128xf32>
    %274 = arith.select %173, %273, %270 : vector<16x128xi1>, vector<16x128xf32>
    %275 = vector.broadcast %114 : f32 to vector<16x128xf32>
    %276 = vector.broadcast %113 : f32 to vector<16x128xf32>
    %277 = arith.select %169, %275, %276 : vector<16x128xi1>, vector<16x128xf32>
    %278 = vector.broadcast %116 : f32 to vector<16x128xf32>
    %279 = vector.broadcast %115 : f32 to vector<16x128xf32>
    %280 = arith.select %169, %278, %279 : vector<16x128xi1>, vector<16x128xf32>
    %281 = arith.select %173, %280, %277 : vector<16x128xi1>, vector<16x128xf32>
    %282 = arith.select %177, %281, %274 : vector<16x128xi1>, vector<16x128xf32>
    %283 = arith.select %181, %282, %267 : vector<16x128xi1>, vector<16x128xf32>
    %284 = vector.broadcast %118 : f32 to vector<16x128xf32>
    %285 = vector.broadcast %117 : f32 to vector<16x128xf32>
    %286 = arith.select %169, %284, %285 : vector<16x128xi1>, vector<16x128xf32>
    %287 = vector.broadcast %120 : f32 to vector<16x128xf32>
    %288 = vector.broadcast %119 : f32 to vector<16x128xf32>
    %289 = arith.select %169, %287, %288 : vector<16x128xi1>, vector<16x128xf32>
    %290 = arith.select %173, %289, %286 : vector<16x128xi1>, vector<16x128xf32>
    %291 = vector.broadcast %122 : f32 to vector<16x128xf32>
    %292 = vector.broadcast %121 : f32 to vector<16x128xf32>
    %293 = arith.select %169, %291, %292 : vector<16x128xi1>, vector<16x128xf32>
    %294 = vector.broadcast %124 : f32 to vector<16x128xf32>
    %295 = vector.broadcast %123 : f32 to vector<16x128xf32>
    %296 = arith.select %169, %294, %295 : vector<16x128xi1>, vector<16x128xf32>
    %297 = arith.select %173, %296, %293 : vector<16x128xi1>, vector<16x128xf32>
    %298 = arith.select %177, %297, %290 : vector<16x128xi1>, vector<16x128xf32>
    %299 = vector.broadcast %126 : f32 to vector<16x128xf32>
    %300 = vector.broadcast %125 : f32 to vector<16x128xf32>
    %301 = arith.select %169, %299, %300 : vector<16x128xi1>, vector<16x128xf32>
    %302 = vector.broadcast %128 : f32 to vector<16x128xf32>
    %303 = vector.broadcast %127 : f32 to vector<16x128xf32>
    %304 = arith.select %169, %302, %303 : vector<16x128xi1>, vector<16x128xf32>
    %305 = arith.select %173, %304, %301 : vector<16x128xi1>, vector<16x128xf32>
    %306 = vector.broadcast %130 : f32 to vector<16x128xf32>
    %307 = vector.broadcast %129 : f32 to vector<16x128xf32>
    %308 = arith.select %169, %306, %307 : vector<16x128xi1>, vector<16x128xf32>
    %309 = vector.broadcast %132 : f32 to vector<16x128xf32>
    %310 = vector.broadcast %131 : f32 to vector<16x128xf32>
    %311 = arith.select %169, %309, %310 : vector<16x128xi1>, vector<16x128xf32>
    %312 = arith.select %173, %311, %308 : vector<16x128xi1>, vector<16x128xf32>
    %313 = arith.select %177, %312, %305 : vector<16x128xi1>, vector<16x128xf32>
    %314 = arith.select %181, %313, %298 : vector<16x128xi1>, vector<16x128xf32>
    %315 = arith.select %185, %314, %283 : vector<16x128xi1>, vector<16x128xf32>
    %316 = arith.select %189, %315, %252 : vector<16x128xi1>, vector<16x128xf32>
    %317 = arith.mulf %316, %34 : vector<16x128xf32>
    %cst_56 = arith.constant 0.000000e+00 : f32
    %318 = vector.broadcast %cst_56 : f32 to vector<16x128xf32>
    %319 = arith.select %165, %317, %318 : vector<16x128xi1>, vector<16x128xf32>
    %c0_57 = arith.constant 0 : index
    %c0_58 = arith.constant 0 : index
    %320 = arith.index_cast %3 : i32 to index
    %c0_59 = arith.constant 0 : index
    %321 = vector.load %arg3[%c0_57, %c0_58, %320, %c0_59] : memref<4x2x16x128xf32, #tpu.memory_space<vmem>>, vector<1x1x16x128xf32>
    %322 = vector.shape_cast %321 : vector<1x1x16x128xf32> to vector<16x128xf32>
    %323 = arith.mulf %319, %322 : vector<16x128xf32>
    %c0_60 = arith.constant 0 : index
    %c1_61 = arith.constant 1 : index
    %324 = arith.index_cast %3 : i32 to index
    %c0_62 = arith.constant 0 : index
    %325 = vector.load %arg3[%c0_60, %c1_61, %324, %c0_62] : memref<4x2x16x128xf32, #tpu.memory_space<vmem>>, vector<1x1x16x128xf32>
    %326 = vector.shape_cast %325 : vector<1x1x16x128xf32> to vector<16x128xf32>
    %327 = arith.mulf %319, %326 : vector<16x128xf32>
    %328 = arith.addf %12, %323 : vector<16x128xf32>
    %329 = arith.addf %15, %327 : vector<16x128xf32>
    %330 = arith.addf %37, %323 : vector<16x128xf32>
    %331 = arith.mulf %37, %323 : vector<16x128xf32>
    %cst_63 = arith.constant 1.000000e+00 : f32
    %332 = vector.broadcast %cst_63 : f32 to vector<16x128xf32>
    %333 = arith.subf %332, %331 : vector<16x128xf32>
    %334 = tpu.reciprocal %333 {approx = true} : vector<16x128xf32> -> vector<16x128xf32>
    %335 = arith.mulf %330, %334 : vector<16x128xf32>
    %336 = arith.addf %40, %327 : vector<16x128xf32>
    %337 = arith.mulf %40, %327 : vector<16x128xf32>
    %cst_64 = arith.constant 1.000000e+00 : f32
    %338 = vector.broadcast %cst_64 : f32 to vector<16x128xf32>
    %339 = arith.subf %338, %337 : vector<16x128xf32>
    %340 = tpu.reciprocal %339 {approx = true} : vector<16x128xf32> -> vector<16x128xf32>
    %341 = arith.mulf %336, %340 : vector<16x128xf32>
    %c2_65 = arith.constant 2 : index
    %c0_66 = arith.constant 0 : index
    %342 = arith.index_cast %3 : i32 to index
    %c0_67 = arith.constant 0 : index
    %343 = vector.load %arg5[%c2_65, %c0_66, %342, %c0_67] : memref<8x2x16x128xf32, #tpu.memory_space<vmem>>, vector<1x1x16x128xf32>
    %344 = vector.shape_cast %343 : vector<1x1x16x128xf32> to vector<16x128xf32>
    %345 = vector.shape_cast %135 : vector<16x128xf32> to vector<1x1x16x128xf32>
    tpu.vector_store %arg5[%c2_65, %c0_66, %342, %c0_67], %345 {strides = array<i32>} : memref<8x2x16x128xf32, #tpu.memory_space<vmem>>, vector<1x1x16x128xf32>,
    %c2_68 = arith.constant 2 : index
    %c1_69 = arith.constant 1 : index
    %346 = arith.index_cast %3 : i32 to index
    %c0_70 = arith.constant 0 : index
    %347 = vector.load %arg5[%c2_68, %c1_69, %346, %c0_70] : memref<8x2x16x128xf32, #tpu.memory_space<vmem>>, vector<1x1x16x128xf32>
    %348 = vector.shape_cast %347 : vector<1x1x16x128xf32> to vector<16x128xf32>
    %349 = vector.shape_cast %138 : vector<16x128xf32> to vector<1x1x16x128xf32>
    tpu.vector_store %arg5[%c2_68, %c1_69, %346, %c0_70], %349 {strides = array<i32>} : memref<8x2x16x128xf32, #tpu.memory_space<vmem>>, vector<1x1x16x128xf32>,
    %c64 = arith.constant 64 : index
    %350 = memref.load %arg1[%c64] : memref<256xf32, #tpu.memory_space<smem>>
    %c65 = arith.constant 65 : index
    %351 = memref.load %arg1[%c65] : memref<256xf32, #tpu.memory_space<smem>>
    %c66 = arith.constant 66 : index
    %352 = memref.load %arg1[%c66] : memref<256xf32, #tpu.memory_space<smem>>
    %c67 = arith.constant 67 : index
    %353 = memref.load %arg1[%c67] : memref<256xf32, #tpu.memory_space<smem>>
    %c68 = arith.constant 68 : index
    %354 = memref.load %arg1[%c68] : memref<256xf32, #tpu.memory_space<smem>>
    %c69 = arith.constant 69 : index
    %355 = memref.load %arg1[%c69] : memref<256xf32, #tpu.memory_space<smem>>
    %c70 = arith.constant 70 : index
    %356 = memref.load %arg1[%c70] : memref<256xf32, #tpu.memory_space<smem>>
    %c71 = arith.constant 71 : index
    %357 = memref.load %arg1[%c71] : memref<256xf32, #tpu.memory_space<smem>>
    %c72 = arith.constant 72 : index
    %358 = memref.load %arg1[%c72] : memref<256xf32, #tpu.memory_space<smem>>
    %c73 = arith.constant 73 : index
    %359 = memref.load %arg1[%c73] : memref<256xf32, #tpu.memory_space<smem>>
    %c74 = arith.constant 74 : index
    %360 = memref.load %arg1[%c74] : memref<256xf32, #tpu.memory_space<smem>>
    %c75 = arith.constant 75 : index
    %361 = memref.load %arg1[%c75] : memref<256xf32, #tpu.memory_space<smem>>
    %c76 = arith.constant 76 : index
    %362 = memref.load %arg1[%c76] : memref<256xf32, #tpu.memory_space<smem>>
    %c77 = arith.constant 77 : index
    %363 = memref.load %arg1[%c77] : memref<256xf32, #tpu.memory_space<smem>>
    %c78 = arith.constant 78 : index
    %364 = memref.load %arg1[%c78] : memref<256xf32, #tpu.memory_space<smem>>
    %c79 = arith.constant 79 : index
    %365 = memref.load %arg1[%c79] : memref<256xf32, #tpu.memory_space<smem>>
    %c80 = arith.constant 80 : index
    %366 = memref.load %arg1[%c80] : memref<256xf32, #tpu.memory_space<smem>>
    %c81 = arith.constant 81 : index
    %367 = memref.load %arg1[%c81] : memref<256xf32, #tpu.memory_space<smem>>
    %c82 = arith.constant 82 : index
    %368 = memref.load %arg1[%c82] : memref<256xf32, #tpu.memory_space<smem>>
    %c83 = arith.constant 83 : index
    %369 = memref.load %arg1[%c83] : memref<256xf32, #tpu.memory_space<smem>>
    %c84 = arith.constant 84 : index
    %370 = memref.load %arg1[%c84] : memref<256xf32, #tpu.memory_space<smem>>
    %c85 = arith.constant 85 : index
    %371 = memref.load %arg1[%c85] : memref<256xf32, #tpu.memory_space<smem>>
    %c86 = arith.constant 86 : index
    %372 = memref.load %arg1[%c86] : memref<256xf32, #tpu.memory_space<smem>>
    %c87 = arith.constant 87 : index
    %373 = memref.load %arg1[%c87] : memref<256xf32, #tpu.memory_space<smem>>
    %c88 = arith.constant 88 : index
    %374 = memref.load %arg1[%c88] : memref<256xf32, #tpu.memory_space<smem>>
    %c89 = arith.constant 89 : index
    %375 = memref.load %arg1[%c89] : memref<256xf32, #tpu.memory_space<smem>>
    %c90 = arith.constant 90 : index
    %376 = memref.load %arg1[%c90] : memref<256xf32, #tpu.memory_space<smem>>
    %c91 = arith.constant 91 : index
    %377 = memref.load %arg1[%c91] : memref<256xf32, #tpu.memory_space<smem>>
    %c92 = arith.constant 92 : index
    %378 = memref.load %arg1[%c92] : memref<256xf32, #tpu.memory_space<smem>>
    %c93 = arith.constant 93 : index
    %379 = memref.load %arg1[%c93] : memref<256xf32, #tpu.memory_space<smem>>
    %c94 = arith.constant 94 : index
    %380 = memref.load %arg1[%c94] : memref<256xf32, #tpu.memory_space<smem>>
    %c95 = arith.constant 95 : index
    %381 = memref.load %arg1[%c95] : memref<256xf32, #tpu.memory_space<smem>>
    %c96 = arith.constant 96 : index
    %382 = memref.load %arg1[%c96] : memref<256xf32, #tpu.memory_space<smem>>
    %c97 = arith.constant 97 : index
    %383 = memref.load %arg1[%c97] : memref<256xf32, #tpu.memory_space<smem>>
    %c98 = arith.constant 98 : index
    %384 = memref.load %arg1[%c98] : memref<256xf32, #tpu.memory_space<smem>>
    %c99 = arith.constant 99 : index
    %385 = memref.load %arg1[%c99] : memref<256xf32, #tpu.memory_space<smem>>
    %c100 = arith.constant 100 : index
    %386 = memref.load %arg1[%c100] : memref<256xf32, #tpu.memory_space<smem>>
    %c101 = arith.constant 101 : index
    %387 = memref.load %arg1[%c101] : memref<256xf32, #tpu.memory_space<smem>>
    %c102 = arith.constant 102 : index
    %388 = memref.load %arg1[%c102] : memref<256xf32, #tpu.memory_space<smem>>
    %c103 = arith.constant 103 : index
    %389 = memref.load %arg1[%c103] : memref<256xf32, #tpu.memory_space<smem>>
    %c104 = arith.constant 104 : index
    %390 = memref.load %arg1[%c104] : memref<256xf32, #tpu.memory_space<smem>>
    %c105 = arith.constant 105 : index
    %391 = memref.load %arg1[%c105] : memref<256xf32, #tpu.memory_space<smem>>
    %c106 = arith.constant 106 : index
    %392 = memref.load %arg1[%c106] : memref<256xf32, #tpu.memory_space<smem>>
    %c107 = arith.constant 107 : index
    %393 = memref.load %arg1[%c107] : memref<256xf32, #tpu.memory_space<smem>>
    %c108 = arith.constant 108 : index
    %394 = memref.load %arg1[%c108] : memref<256xf32, #tpu.memory_space<smem>>
    %c109 = arith.constant 109 : index
    %395 = memref.load %arg1[%c109] : memref<256xf32, #tpu.memory_space<smem>>
    %c110 = arith.constant 110 : index
    %396 = memref.load %arg1[%c110] : memref<256xf32, #tpu.memory_space<smem>>
    %c111 = arith.constant 111 : index
    %397 = memref.load %arg1[%c111] : memref<256xf32, #tpu.memory_space<smem>>
    %c112 = arith.constant 112 : index
    %398 = memref.load %arg1[%c112] : memref<256xf32, #tpu.memory_space<smem>>
    %c113 = arith.constant 113 : index
    %399 = memref.load %arg1[%c113] : memref<256xf32, #tpu.memory_space<smem>>
    %c114 = arith.constant 114 : index
    %400 = memref.load %arg1[%c114] : memref<256xf32, #tpu.memory_space<smem>>
    %c115 = arith.constant 115 : index
    %401 = memref.load %arg1[%c115] : memref<256xf32, #tpu.memory_space<smem>>
    %c116 = arith.constant 116 : index
    %402 = memref.load %arg1[%c116] : memref<256xf32, #tpu.memory_space<smem>>
    %c117 = arith.constant 117 : index
    %403 = memref.load %arg1[%c117] : memref<256xf32, #tpu.memory_space<smem>>
    %c118 = arith.constant 118 : index
    %404 = memref.load %arg1[%c118] : memref<256xf32, #tpu.memory_space<smem>>
    %c119 = arith.constant 119 : index
    %405 = memref.load %arg1[%c119] : memref<256xf32, #tpu.memory_space<smem>>
    %c120 = arith.constant 120 : index
    %406 = memref.load %arg1[%c120] : memref<256xf32, #tpu.memory_space<smem>>
    %c121 = arith.constant 121 : index
    %407 = memref.load %arg1[%c121] : memref<256xf32, #tpu.memory_space<smem>>
    %c122 = arith.constant 122 : index
    %408 = memref.load %arg1[%c122] : memref<256xf32, #tpu.memory_space<smem>>
    %c123 = arith.constant 123 : index
    %409 = memref.load %arg1[%c123] : memref<256xf32, #tpu.memory_space<smem>>
    %c124 = arith.constant 124 : index
    %410 = memref.load %arg1[%c124] : memref<256xf32, #tpu.memory_space<smem>>
    %c125 = arith.constant 125 : index
    %411 = memref.load %arg1[%c125] : memref<256xf32, #tpu.memory_space<smem>>
    %c126 = arith.constant 126 : index
    %412 = memref.load %arg1[%c126] : memref<256xf32, #tpu.memory_space<smem>>
    %c127 = arith.constant 127 : index
    %413 = memref.load %arg1[%c127] : memref<256xf32, #tpu.memory_space<smem>>
    %cst_71 = arith.constant 1.000000e-01 : f32
    %414 = vector.broadcast %cst_71 : f32 to vector<16x128xf32>
    %415 = arith.mulf %414, %335 : vector<16x128xf32>
    %416 = arith.addf %135, %415 : vector<16x128xf32>
    %cst_72 = arith.constant 1.000000e-01 : f32
    %417 = vector.broadcast %cst_72 : f32 to vector<16x128xf32>
    %418 = arith.mulf %417, %341 : vector<16x128xf32>
    %419 = arith.addf %138, %418 : vector<16x128xf32>
    %cst_73 = arith.constant 1.000000e+01 : f32
    %420 = vector.broadcast %cst_73 : f32 to vector<16x128xf32>
    %421 = arith.mulf %416, %420 : vector<16x128xf32>
    %422 = math.floor %421 : vector<16x128xf32>
    %cst_74 = arith.constant 0.000000e+00 : f32
    %cst_75 = arith.constant 7.000000e+00 : f32
    %423 = vector.broadcast %cst_74 : f32 to vector<16x128xf32>
    %424 = arith.maximumf %423, %422 : vector<16x128xf32>
    %425 = vector.broadcast %cst_75 : f32 to vector<16x128xf32>
    %426 = arith.minimumf %425, %424 : vector<16x128xf32>
    %427 = arith.fptosi %426 : vector<16x128xf32> to vector<16x128xi32>
    %cst_76 = arith.constant 1.000000e+01 : f32
    %428 = vector.broadcast %cst_76 : f32 to vector<16x128xf32>
    %429 = arith.mulf %419, %428 : vector<16x128xf32>
    %430 = math.floor %429 : vector<16x128xf32>
    %cst_77 = arith.constant 0.000000e+00 : f32
    %cst_78 = arith.constant 7.000000e+00 : f32
    %431 = vector.broadcast %cst_77 : f32 to vector<16x128xf32>
    %432 = arith.maximumf %431, %430 : vector<16x128xf32>
    %433 = vector.broadcast %cst_78 : f32 to vector<16x128xf32>
    %434 = arith.minimumf %433, %432 : vector<16x128xf32>
    %435 = arith.fptosi %434 : vector<16x128xf32> to vector<16x128xi32>
    %cst_79 = arith.constant 0.000000e+00 : f32
    %436 = vector.broadcast %cst_79 : f32 to vector<16x128xf32>
    %437 = arith.cmpf oge, %416, %436 : vector<16x128xf32>
    %cst_80 = arith.constant 8.000000e-01 : f32
    %438 = vector.broadcast %cst_80 : f32 to vector<16x128xf32>
    %439 = arith.cmpf olt, %416, %438 : vector<16x128xf32>
    %440 = arith.andi %437, %439 : vector<16x128xi1>
    %cst_81 = arith.constant 0.000000e+00 : f32
    %441 = vector.broadcast %cst_81 : f32 to vector<16x128xf32>
    %442 = arith.cmpf oge, %419, %441 : vector<16x128xf32>
    %443 = arith.andi %440, %442 : vector<16x128xi1>
    %cst_82 = arith.constant 8.000000e-01 : f32
    %444 = vector.broadcast %cst_82 : f32 to vector<16x128xf32>
    %445 = arith.cmpf olt, %419, %444 : vector<16x128xf32>
    %446 = arith.andi %443, %445 : vector<16x128xi1>
    %c1_i32_83 = arith.constant 1 : i32
    %447 = vector.broadcast %c1_i32_83 : i32 to vector<16x128xi32>
    %448 = arith.andi %435, %447 : vector<16x128xi32>
    %c0_i32_84 = arith.constant 0 : i32
    %449 = vector.broadcast %c0_i32_84 : i32 to vector<16x128xi32>
    %450 = arith.cmpi ne, %448, %449 : vector<16x128xi32>
    %c2_i32_85 = arith.constant 2 : i32
    %451 = vector.broadcast %c2_i32_85 : i32 to vector<16x128xi32>
    %452 = arith.andi %435, %451 : vector<16x128xi32>
    %c0_i32_86 = arith.constant 0 : i32
    %453 = vector.broadcast %c0_i32_86 : i32 to vector<16x128xi32>
    %454 = arith.cmpi ne, %452, %453 : vector<16x128xi32>
    %c4_i32_87 = arith.constant 4 : i32
    %455 = vector.broadcast %c4_i32_87 : i32 to vector<16x128xi32>
    %456 = arith.andi %435, %455 : vector<16x128xi32>
    %c0_i32_88 = arith.constant 0 : i32
    %457 = vector.broadcast %c0_i32_88 : i32 to vector<16x128xi32>
    %458 = arith.cmpi ne, %456, %457 : vector<16x128xi32>
    %c1_i32_89 = arith.constant 1 : i32
    %459 = vector.broadcast %c1_i32_89 : i32 to vector<16x128xi32>
    %460 = arith.andi %427, %459 : vector<16x128xi32>
    %c0_i32_90 = arith.constant 0 : i32
    %461 = vector.broadcast %c0_i32_90 : i32 to vector<16x128xi32>
    %462 = arith.cmpi ne, %460, %461 : vector<16x128xi32>
    %c2_i32_91 = arith.constant 2 : i32
    %463 = vector.broadcast %c2_i32_91 : i32 to vector<16x128xi32>
    %464 = arith.andi %427, %463 : vector<16x128xi32>
    %c0_i32_92 = arith.constant 0 : i32
    %465 = vector.broadcast %c0_i32_92 : i32 to vector<16x128xi32>
    %466 = arith.cmpi ne, %464, %465 : vector<16x128xi32>
    %c4_i32_93 = arith.constant 4 : i32
    %467 = vector.broadcast %c4_i32_93 : i32 to vector<16x128xi32>
    %468 = arith.andi %427, %467 : vector<16x128xi32>
    %c0_i32_94 = arith.constant 0 : i32
    %469 = vector.broadcast %c0_i32_94 : i32 to vector<16x128xi32>
    %470 = arith.cmpi ne, %468, %469 : vector<16x128xi32>
    %471 = vector.broadcast %351 : f32 to vector<16x128xf32>
    %472 = vector.broadcast %350 : f32 to vector<16x128xf32>
    %473 = arith.select %450, %471, %472 : vector<16x128xi1>, vector<16x128xf32>
    %474 = vector.broadcast %353 : f32 to vector<16x128xf32>
    %475 = vector.broadcast %352 : f32 to vector<16x128xf32>
    %476 = arith.select %450, %474, %475 : vector<16x128xi1>, vector<16x128xf32>
    %477 = arith.select %454, %476, %473 : vector<16x128xi1>, vector<16x128xf32>
    %478 = vector.broadcast %355 : f32 to vector<16x128xf32>
    %479 = vector.broadcast %354 : f32 to vector<16x128xf32>
    %480 = arith.select %450, %478, %479 : vector<16x128xi1>, vector<16x128xf32>
    %481 = vector.broadcast %357 : f32 to vector<16x128xf32>
    %482 = vector.broadcast %356 : f32 to vector<16x128xf32>
    %483 = arith.select %450, %481, %482 : vector<16x128xi1>, vector<16x128xf32>
    %484 = arith.select %454, %483, %480 : vector<16x128xi1>, vector<16x128xf32>
    %485 = arith.select %458, %484, %477 : vector<16x128xi1>, vector<16x128xf32>
    %486 = vector.broadcast %359 : f32 to vector<16x128xf32>
    %487 = vector.broadcast %358 : f32 to vector<16x128xf32>
    %488 = arith.select %450, %486, %487 : vector<16x128xi1>, vector<16x128xf32>
    %489 = vector.broadcast %361 : f32 to vector<16x128xf32>
    %490 = vector.broadcast %360 : f32 to vector<16x128xf32>
    %491 = arith.select %450, %489, %490 : vector<16x128xi1>, vector<16x128xf32>
    %492 = arith.select %454, %491, %488 : vector<16x128xi1>, vector<16x128xf32>
    %493 = vector.broadcast %363 : f32 to vector<16x128xf32>
    %494 = vector.broadcast %362 : f32 to vector<16x128xf32>
    %495 = arith.select %450, %493, %494 : vector<16x128xi1>, vector<16x128xf32>
    %496 = vector.broadcast %365 : f32 to vector<16x128xf32>
    %497 = vector.broadcast %364 : f32 to vector<16x128xf32>
    %498 = arith.select %450, %496, %497 : vector<16x128xi1>, vector<16x128xf32>
    %499 = arith.select %454, %498, %495 : vector<16x128xi1>, vector<16x128xf32>
    %500 = arith.select %458, %499, %492 : vector<16x128xi1>, vector<16x128xf32>
    %501 = arith.select %462, %500, %485 : vector<16x128xi1>, vector<16x128xf32>
    %502 = vector.broadcast %367 : f32 to vector<16x128xf32>
    %503 = vector.broadcast %366 : f32 to vector<16x128xf32>
    %504 = arith.select %450, %502, %503 : vector<16x128xi1>, vector<16x128xf32>
    %505 = vector.broadcast %369 : f32 to vector<16x128xf32>
    %506 = vector.broadcast %368 : f32 to vector<16x128xf32>
    %507 = arith.select %450, %505, %506 : vector<16x128xi1>, vector<16x128xf32>
    %508 = arith.select %454, %507, %504 : vector<16x128xi1>, vector<16x128xf32>
    %509 = vector.broadcast %371 : f32 to vector<16x128xf32>
    %510 = vector.broadcast %370 : f32 to vector<16x128xf32>
    %511 = arith.select %450, %509, %510 : vector<16x128xi1>, vector<16x128xf32>
    %512 = vector.broadcast %373 : f32 to vector<16x128xf32>
    %513 = vector.broadcast %372 : f32 to vector<16x128xf32>
    %514 = arith.select %450, %512, %513 : vector<16x128xi1>, vector<16x128xf32>
    %515 = arith.select %454, %514, %511 : vector<16x128xi1>, vector<16x128xf32>
    %516 = arith.select %458, %515, %508 : vector<16x128xi1>, vector<16x128xf32>
    %517 = vector.broadcast %375 : f32 to vector<16x128xf32>
    %518 = vector.broadcast %374 : f32 to vector<16x128xf32>
    %519 = arith.select %450, %517, %518 : vector<16x128xi1>, vector<16x128xf32>
    %520 = vector.broadcast %377 : f32 to vector<16x128xf32>
    %521 = vector.broadcast %376 : f32 to vector<16x128xf32>
    %522 = arith.select %450, %520, %521 : vector<16x128xi1>, vector<16x128xf32>
    %523 = arith.select %454, %522, %519 : vector<16x128xi1>, vector<16x128xf32>
    %524 = vector.broadcast %379 : f32 to vector<16x128xf32>
    %525 = vector.broadcast %378 : f32 to vector<16x128xf32>
    %526 = arith.select %450, %524, %525 : vector<16x128xi1>, vector<16x128xf32>
    %527 = vector.broadcast %381 : f32 to vector<16x128xf32>
    %528 = vector.broadcast %380 : f32 to vector<16x128xf32>
    %529 = arith.select %450, %527, %528 : vector<16x128xi1>, vector<16x128xf32>
    %530 = arith.select %454, %529, %526 : vector<16x128xi1>, vector<16x128xf32>
    %531 = arith.select %458, %530, %523 : vector<16x128xi1>, vector<16x128xf32>
    %532 = arith.select %462, %531, %516 : vector<16x128xi1>, vector<16x128xf32>
    %533 = arith.select %466, %532, %501 : vector<16x128xi1>, vector<16x128xf32>
    %534 = vector.broadcast %383 : f32 to vector<16x128xf32>
    %535 = vector.broadcast %382 : f32 to vector<16x128xf32>
    %536 = arith.select %450, %534, %535 : vector<16x128xi1>, vector<16x128xf32>
    %537 = vector.broadcast %385 : f32 to vector<16x128xf32>
    %538 = vector.broadcast %384 : f32 to vector<16x128xf32>
    %539 = arith.select %450, %537, %538 : vector<16x128xi1>, vector<16x128xf32>
    %540 = arith.select %454, %539, %536 : vector<16x128xi1>, vector<16x128xf32>
    %541 = vector.broadcast %387 : f32 to vector<16x128xf32>
    %542 = vector.broadcast %386 : f32 to vector<16x128xf32>
    %543 = arith.select %450, %541, %542 : vector<16x128xi1>, vector<16x128xf32>
    %544 = vector.broadcast %389 : f32 to vector<16x128xf32>
    %545 = vector.broadcast %388 : f32 to vector<16x128xf32>
    %546 = arith.select %450, %544, %545 : vector<16x128xi1>, vector<16x128xf32>
    %547 = arith.select %454, %546, %543 : vector<16x128xi1>, vector<16x128xf32>
    %548 = arith.select %458, %547, %540 : vector<16x128xi1>, vector<16x128xf32>
    %549 = vector.broadcast %391 : f32 to vector<16x128xf32>
    %550 = vector.broadcast %390 : f32 to vector<16x128xf32>
    %551 = arith.select %450, %549, %550 : vector<16x128xi1>, vector<16x128xf32>
    %552 = vector.broadcast %393 : f32 to vector<16x128xf32>
    %553 = vector.broadcast %392 : f32 to vector<16x128xf32>
    %554 = arith.select %450, %552, %553 : vector<16x128xi1>, vector<16x128xf32>
    %555 = arith.select %454, %554, %551 : vector<16x128xi1>, vector<16x128xf32>
    %556 = vector.broadcast %395 : f32 to vector<16x128xf32>
    %557 = vector.broadcast %394 : f32 to vector<16x128xf32>
    %558 = arith.select %450, %556, %557 : vector<16x128xi1>, vector<16x128xf32>
    %559 = vector.broadcast %397 : f32 to vector<16x128xf32>
    %560 = vector.broadcast %396 : f32 to vector<16x128xf32>
    %561 = arith.select %450, %559, %560 : vector<16x128xi1>, vector<16x128xf32>
    %562 = arith.select %454, %561, %558 : vector<16x128xi1>, vector<16x128xf32>
    %563 = arith.select %458, %562, %555 : vector<16x128xi1>, vector<16x128xf32>
    %564 = arith.select %462, %563, %548 : vector<16x128xi1>, vector<16x128xf32>
    %565 = vector.broadcast %399 : f32 to vector<16x128xf32>
    %566 = vector.broadcast %398 : f32 to vector<16x128xf32>
    %567 = arith.select %450, %565, %566 : vector<16x128xi1>, vector<16x128xf32>
    %568 = vector.broadcast %401 : f32 to vector<16x128xf32>
    %569 = vector.broadcast %400 : f32 to vector<16x128xf32>
    %570 = arith.select %450, %568, %569 : vector<16x128xi1>, vector<16x128xf32>
    %571 = arith.select %454, %570, %567 : vector<16x128xi1>, vector<16x128xf32>
    %572 = vector.broadcast %403 : f32 to vector<16x128xf32>
    %573 = vector.broadcast %402 : f32 to vector<16x128xf32>
    %574 = arith.select %450, %572, %573 : vector<16x128xi1>, vector<16x128xf32>
    %575 = vector.broadcast %405 : f32 to vector<16x128xf32>
    %576 = vector.broadcast %404 : f32 to vector<16x128xf32>
    %577 = arith.select %450, %575, %576 : vector<16x128xi1>, vector<16x128xf32>
    %578 = arith.select %454, %577, %574 : vector<16x128xi1>, vector<16x128xf32>
    %579 = arith.select %458, %578, %571 : vector<16x128xi1>, vector<16x128xf32>
    %580 = vector.broadcast %407 : f32 to vector<16x128xf32>
    %581 = vector.broadcast %406 : f32 to vector<16x128xf32>
    %582 = arith.select %450, %580, %581 : vector<16x128xi1>, vector<16x128xf32>
    %583 = vector.broadcast %409 : f32 to vector<16x128xf32>
    %584 = vector.broadcast %408 : f32 to vector<16x128xf32>
    %585 = arith.select %450, %583, %584 : vector<16x128xi1>, vector<16x128xf32>
    %586 = arith.select %454, %585, %582 : vector<16x128xi1>, vector<16x128xf32>
    %587 = vector.broadcast %411 : f32 to vector<16x128xf32>
    %588 = vector.broadcast %410 : f32 to vector<16x128xf32>
    %589 = arith.select %450, %587, %588 : vector<16x128xi1>, vector<16x128xf32>
    %590 = vector.broadcast %413 : f32 to vector<16x128xf32>
    %591 = vector.broadcast %412 : f32 to vector<16x128xf32>
    %592 = arith.select %450, %590, %591 : vector<16x128xi1>, vector<16x128xf32>
    %593 = arith.select %454, %592, %589 : vector<16x128xi1>, vector<16x128xf32>
    %594 = arith.select %458, %593, %586 : vector<16x128xi1>, vector<16x128xf32>
    %595 = arith.select %462, %594, %579 : vector<16x128xi1>, vector<16x128xf32>
    %596 = arith.select %466, %595, %564 : vector<16x128xi1>, vector<16x128xf32>
    %597 = arith.select %470, %596, %533 : vector<16x128xi1>, vector<16x128xf32>
    %598 = arith.mulf %597, %34 : vector<16x128xf32>
    %cst_95 = arith.constant 0.000000e+00 : f32
    %599 = vector.broadcast %cst_95 : f32 to vector<16x128xf32>
    %600 = arith.select %446, %598, %599 : vector<16x128xi1>, vector<16x128xf32>
    %c1_96 = arith.constant 1 : index
    %c0_97 = arith.constant 0 : index
    %601 = arith.index_cast %3 : i32 to index
    %c0_98 = arith.constant 0 : index
    %602 = vector.load %arg3[%c1_96, %c0_97, %601, %c0_98] : memref<4x2x16x128xf32, #tpu.memory_space<vmem>>, vector<1x1x16x128xf32>
    %603 = vector.shape_cast %602 : vector<1x1x16x128xf32> to vector<16x128xf32>
    %604 = arith.mulf %600, %603 : vector<16x128xf32>
    %c1_99 = arith.constant 1 : index
    %c1_100 = arith.constant 1 : index
    %605 = arith.index_cast %3 : i32 to index
    %c0_101 = arith.constant 0 : index
    %606 = vector.load %arg3[%c1_99, %c1_100, %605, %c0_101] : memref<4x2x16x128xf32, #tpu.memory_space<vmem>>, vector<1x1x16x128xf32>
    %607 = vector.shape_cast %606 : vector<1x1x16x128xf32> to vector<16x128xf32>
    %608 = arith.mulf %600, %607 : vector<16x128xf32>
    %609 = arith.addf %328, %604 : vector<16x128xf32>
    %610 = arith.addf %329, %608 : vector<16x128xf32>
    %611 = arith.addf %335, %604 : vector<16x128xf32>
    %612 = arith.mulf %335, %604 : vector<16x128xf32>
    %cst_102 = arith.constant 1.000000e+00 : f32
    %613 = vector.broadcast %cst_102 : f32 to vector<16x128xf32>
    %614 = arith.subf %613, %612 : vector<16x128xf32>
    %615 = tpu.reciprocal %614 {approx = true} : vector<16x128xf32> -> vector<16x128xf32>
    %616 = arith.mulf %611, %615 : vector<16x128xf32>
    %617 = arith.addf %341, %608 : vector<16x128xf32>
    %618 = arith.mulf %341, %608 : vector<16x128xf32>
    %cst_103 = arith.constant 1.000000e+00 : f32
    %619 = vector.broadcast %cst_103 : f32 to vector<16x128xf32>
    %620 = arith.subf %619, %618 : vector<16x128xf32>
    %621 = tpu.reciprocal %620 {approx = true} : vector<16x128xf32> -> vector<16x128xf32>
    %622 = arith.mulf %617, %621 : vector<16x128xf32>
    %c3_104 = arith.constant 3 : index
    %c0_105 = arith.constant 0 : index
    %623 = arith.index_cast %3 : i32 to index
    %c0_106 = arith.constant 0 : index
    %624 = vector.load %arg5[%c3_104, %c0_105, %623, %c0_106] : memref<8x2x16x128xf32, #tpu.memory_space<vmem>>, vector<1x1x16x128xf32>
    %625 = vector.shape_cast %624 : vector<1x1x16x128xf32> to vector<16x128xf32>
    %626 = vector.shape_cast %416 : vector<16x128xf32> to vector<1x1x16x128xf32>
    tpu.vector_store %arg5[%c3_104, %c0_105, %623, %c0_106], %626 {strides = array<i32>} : memref<8x2x16x128xf32, #tpu.memory_space<vmem>>, vector<1x1x16x128xf32>,
    %c3_107 = arith.constant 3 : index
    %c1_108 = arith.constant 1 : index
    %627 = arith.index_cast %3 : i32 to index
    %c0_109 = arith.constant 0 : index
    %628 = vector.load %arg5[%c3_107, %c1_108, %627, %c0_109] : memref<8x2x16x128xf32, #tpu.memory_space<vmem>>, vector<1x1x16x128xf32>
    %629 = vector.shape_cast %628 : vector<1x1x16x128xf32> to vector<16x128xf32>
    %630 = vector.shape_cast %419 : vector<16x128xf32> to vector<1x1x16x128xf32>
    tpu.vector_store %arg5[%c3_107, %c1_108, %627, %c0_109], %630 {strides = array<i32>} : memref<8x2x16x128xf32, #tpu.memory_space<vmem>>, vector<1x1x16x128xf32>,
    %c128 = arith.constant 128 : index
    %631 = memref.load %arg1[%c128] : memref<256xf32, #tpu.memory_space<smem>>
    %c129 = arith.constant 129 : index
    %632 = memref.load %arg1[%c129] : memref<256xf32, #tpu.memory_space<smem>>
    %c130 = arith.constant 130 : index
    %633 = memref.load %arg1[%c130] : memref<256xf32, #tpu.memory_space<smem>>
    %c131 = arith.constant 131 : index
    %634 = memref.load %arg1[%c131] : memref<256xf32, #tpu.memory_space<smem>>
    %c132 = arith.constant 132 : index
    %635 = memref.load %arg1[%c132] : memref<256xf32, #tpu.memory_space<smem>>
    %c133 = arith.constant 133 : index
    %636 = memref.load %arg1[%c133] : memref<256xf32, #tpu.memory_space<smem>>
    %c134 = arith.constant 134 : index
    %637 = memref.load %arg1[%c134] : memref<256xf32, #tpu.memory_space<smem>>
    %c135 = arith.constant 135 : index
    %638 = memref.load %arg1[%c135] : memref<256xf32, #tpu.memory_space<smem>>
    %c136 = arith.constant 136 : index
    %639 = memref.load %arg1[%c136] : memref<256xf32, #tpu.memory_space<smem>>
    %c137 = arith.constant 137 : index
    %640 = memref.load %arg1[%c137] : memref<256xf32, #tpu.memory_space<smem>>
    %c138 = arith.constant 138 : index
    %641 = memref.load %arg1[%c138] : memref<256xf32, #tpu.memory_space<smem>>
    %c139 = arith.constant 139 : index
    %642 = memref.load %arg1[%c139] : memref<256xf32, #tpu.memory_space<smem>>
    %c140 = arith.constant 140 : index
    %643 = memref.load %arg1[%c140] : memref<256xf32, #tpu.memory_space<smem>>
    %c141 = arith.constant 141 : index
    %644 = memref.load %arg1[%c141] : memref<256xf32, #tpu.memory_space<smem>>
    %c142 = arith.constant 142 : index
    %645 = memref.load %arg1[%c142] : memref<256xf32, #tpu.memory_space<smem>>
    %c143 = arith.constant 143 : index
    %646 = memref.load %arg1[%c143] : memref<256xf32, #tpu.memory_space<smem>>
    %c144 = arith.constant 144 : index
    %647 = memref.load %arg1[%c144] : memref<256xf32, #tpu.memory_space<smem>>
    %c145 = arith.constant 145 : index
    %648 = memref.load %arg1[%c145] : memref<256xf32, #tpu.memory_space<smem>>
    %c146 = arith.constant 146 : index
    %649 = memref.load %arg1[%c146] : memref<256xf32, #tpu.memory_space<smem>>
    %c147 = arith.constant 147 : index
    %650 = memref.load %arg1[%c147] : memref<256xf32, #tpu.memory_space<smem>>
    %c148 = arith.constant 148 : index
    %651 = memref.load %arg1[%c148] : memref<256xf32, #tpu.memory_space<smem>>
    %c149 = arith.constant 149 : index
    %652 = memref.load %arg1[%c149] : memref<256xf32, #tpu.memory_space<smem>>
    %c150 = arith.constant 150 : index
    %653 = memref.load %arg1[%c150] : memref<256xf32, #tpu.memory_space<smem>>
    %c151 = arith.constant 151 : index
    %654 = memref.load %arg1[%c151] : memref<256xf32, #tpu.memory_space<smem>>
    %c152 = arith.constant 152 : index
    %655 = memref.load %arg1[%c152] : memref<256xf32, #tpu.memory_space<smem>>
    %c153 = arith.constant 153 : index
    %656 = memref.load %arg1[%c153] : memref<256xf32, #tpu.memory_space<smem>>
    %c154 = arith.constant 154 : index
    %657 = memref.load %arg1[%c154] : memref<256xf32, #tpu.memory_space<smem>>
    %c155 = arith.constant 155 : index
    %658 = memref.load %arg1[%c155] : memref<256xf32, #tpu.memory_space<smem>>
    %c156 = arith.constant 156 : index
    %659 = memref.load %arg1[%c156] : memref<256xf32, #tpu.memory_space<smem>>
    %c157 = arith.constant 157 : index
    %660 = memref.load %arg1[%c157] : memref<256xf32, #tpu.memory_space<smem>>
    %c158 = arith.constant 158 : index
    %661 = memref.load %arg1[%c158] : memref<256xf32, #tpu.memory_space<smem>>
    %c159 = arith.constant 159 : index
    %662 = memref.load %arg1[%c159] : memref<256xf32, #tpu.memory_space<smem>>
    %c160 = arith.constant 160 : index
    %663 = memref.load %arg1[%c160] : memref<256xf32, #tpu.memory_space<smem>>
    %c161 = arith.constant 161 : index
    %664 = memref.load %arg1[%c161] : memref<256xf32, #tpu.memory_space<smem>>
    %c162 = arith.constant 162 : index
    %665 = memref.load %arg1[%c162] : memref<256xf32, #tpu.memory_space<smem>>
    %c163 = arith.constant 163 : index
    %666 = memref.load %arg1[%c163] : memref<256xf32, #tpu.memory_space<smem>>
    %c164 = arith.constant 164 : index
    %667 = memref.load %arg1[%c164] : memref<256xf32, #tpu.memory_space<smem>>
    %c165 = arith.constant 165 : index
    %668 = memref.load %arg1[%c165] : memref<256xf32, #tpu.memory_space<smem>>
    %c166 = arith.constant 166 : index
    %669 = memref.load %arg1[%c166] : memref<256xf32, #tpu.memory_space<smem>>
    %c167 = arith.constant 167 : index
    %670 = memref.load %arg1[%c167] : memref<256xf32, #tpu.memory_space<smem>>
    %c168 = arith.constant 168 : index
    %671 = memref.load %arg1[%c168] : memref<256xf32, #tpu.memory_space<smem>>
    %c169 = arith.constant 169 : index
    %672 = memref.load %arg1[%c169] : memref<256xf32, #tpu.memory_space<smem>>
    %c170 = arith.constant 170 : index
    %673 = memref.load %arg1[%c170] : memref<256xf32, #tpu.memory_space<smem>>
    %c171 = arith.constant 171 : index
    %674 = memref.load %arg1[%c171] : memref<256xf32, #tpu.memory_space<smem>>
    %c172 = arith.constant 172 : index
    %675 = memref.load %arg1[%c172] : memref<256xf32, #tpu.memory_space<smem>>
    %c173 = arith.constant 173 : index
    %676 = memref.load %arg1[%c173] : memref<256xf32, #tpu.memory_space<smem>>
    %c174 = arith.constant 174 : index
    %677 = memref.load %arg1[%c174] : memref<256xf32, #tpu.memory_space<smem>>
    %c175 = arith.constant 175 : index
    %678 = memref.load %arg1[%c175] : memref<256xf32, #tpu.memory_space<smem>>
    %c176 = arith.constant 176 : index
    %679 = memref.load %arg1[%c176] : memref<256xf32, #tpu.memory_space<smem>>
    %c177 = arith.constant 177 : index
    %680 = memref.load %arg1[%c177] : memref<256xf32, #tpu.memory_space<smem>>
    %c178 = arith.constant 178 : index
    %681 = memref.load %arg1[%c178] : memref<256xf32, #tpu.memory_space<smem>>
    %c179 = arith.constant 179 : index
    %682 = memref.load %arg1[%c179] : memref<256xf32, #tpu.memory_space<smem>>
    %c180 = arith.constant 180 : index
    %683 = memref.load %arg1[%c180] : memref<256xf32, #tpu.memory_space<smem>>
    %c181 = arith.constant 181 : index
    %684 = memref.load %arg1[%c181] : memref<256xf32, #tpu.memory_space<smem>>
    %c182 = arith.constant 182 : index
    %685 = memref.load %arg1[%c182] : memref<256xf32, #tpu.memory_space<smem>>
    %c183 = arith.constant 183 : index
    %686 = memref.load %arg1[%c183] : memref<256xf32, #tpu.memory_space<smem>>
    %c184 = arith.constant 184 : index
    %687 = memref.load %arg1[%c184] : memref<256xf32, #tpu.memory_space<smem>>
    %c185 = arith.constant 185 : index
    %688 = memref.load %arg1[%c185] : memref<256xf32, #tpu.memory_space<smem>>
    %c186 = arith.constant 186 : index
    %689 = memref.load %arg1[%c186] : memref<256xf32, #tpu.memory_space<smem>>
    %c187 = arith.constant 187 : index
    %690 = memref.load %arg1[%c187] : memref<256xf32, #tpu.memory_space<smem>>
    %c188 = arith.constant 188 : index
    %691 = memref.load %arg1[%c188] : memref<256xf32, #tpu.memory_space<smem>>
    %c189 = arith.constant 189 : index
    %692 = memref.load %arg1[%c189] : memref<256xf32, #tpu.memory_space<smem>>
    %c190 = arith.constant 190 : index
    %693 = memref.load %arg1[%c190] : memref<256xf32, #tpu.memory_space<smem>>
    %c191 = arith.constant 191 : index
    %694 = memref.load %arg1[%c191] : memref<256xf32, #tpu.memory_space<smem>>
    %cst_110 = arith.constant 1.000000e-01 : f32
    %695 = vector.broadcast %cst_110 : f32 to vector<16x128xf32>
    %696 = arith.mulf %695, %616 : vector<16x128xf32>
    %697 = arith.addf %416, %696 : vector<16x128xf32>
    %cst_111 = arith.constant 1.000000e-01 : f32
    %698 = vector.broadcast %cst_111 : f32 to vector<16x128xf32>
    %699 = arith.mulf %698, %622 : vector<16x128xf32>
    %700 = arith.addf %419, %699 : vector<16x128xf32>
    %cst_112 = arith.constant 1.000000e+01 : f32
    %701 = vector.broadcast %cst_112 : f32 to vector<16x128xf32>
    %702 = arith.mulf %697, %701 : vector<16x128xf32>
    %703 = math.floor %702 : vector<16x128xf32>
    %cst_113 = arith.constant 0.000000e+00 : f32
    %cst_114 = arith.constant 7.000000e+00 : f32
    %704 = vector.broadcast %cst_113 : f32 to vector<16x128xf32>
    %705 = arith.maximumf %704, %703 : vector<16x128xf32>
    %706 = vector.broadcast %cst_114 : f32 to vector<16x128xf32>
    %707 = arith.minimumf %706, %705 : vector<16x128xf32>
    %708 = arith.fptosi %707 : vector<16x128xf32> to vector<16x128xi32>
    %cst_115 = arith.constant 1.000000e+01 : f32
    %709 = vector.broadcast %cst_115 : f32 to vector<16x128xf32>
    %710 = arith.mulf %700, %709 : vector<16x128xf32>
    %711 = math.floor %710 : vector<16x128xf32>
    %cst_116 = arith.constant 0.000000e+00 : f32
    %cst_117 = arith.constant 7.000000e+00 : f32
    %712 = vector.broadcast %cst_116 : f32 to vector<16x128xf32>
    %713 = arith.maximumf %712, %711 : vector<16x128xf32>
    %714 = vector.broadcast %cst_117 : f32 to vector<16x128xf32>
    %715 = arith.minimumf %714, %713 : vector<16x128xf32>
    %716 = arith.fptosi %715 : vector<16x128xf32> to vector<16x128xi32>
    %cst_118 = arith.constant 0.000000e+00 : f32
    %717 = vector.broadcast %cst_118 : f32 to vector<16x128xf32>
    %718 = arith.cmpf oge, %697, %717 : vector<16x128xf32>
    %cst_119 = arith.constant 8.000000e-01 : f32
    %719 = vector.broadcast %cst_119 : f32 to vector<16x128xf32>
    %720 = arith.cmpf olt, %697, %719 : vector<16x128xf32>
    %721 = arith.andi %718, %720 : vector<16x128xi1>
    %cst_120 = arith.constant 0.000000e+00 : f32
    %722 = vector.broadcast %cst_120 : f32 to vector<16x128xf32>
    %723 = arith.cmpf oge, %700, %722 : vector<16x128xf32>
    %724 = arith.andi %721, %723 : vector<16x128xi1>
    %cst_121 = arith.constant 8.000000e-01 : f32
    %725 = vector.broadcast %cst_121 : f32 to vector<16x128xf32>
    %726 = arith.cmpf olt, %700, %725 : vector<16x128xf32>
    %727 = arith.andi %724, %726 : vector<16x128xi1>
    %c1_i32_122 = arith.constant 1 : i32
    %728 = vector.broadcast %c1_i32_122 : i32 to vector<16x128xi32>
    %729 = arith.andi %716, %728 : vector<16x128xi32>
    %c0_i32_123 = arith.constant 0 : i32
    %730 = vector.broadcast %c0_i32_123 : i32 to vector<16x128xi32>
    %731 = arith.cmpi ne, %729, %730 : vector<16x128xi32>
    %c2_i32_124 = arith.constant 2 : i32
    %732 = vector.broadcast %c2_i32_124 : i32 to vector<16x128xi32>
    %733 = arith.andi %716, %732 : vector<16x128xi32>
    %c0_i32_125 = arith.constant 0 : i32
    %734 = vector.broadcast %c0_i32_125 : i32 to vector<16x128xi32>
    %735 = arith.cmpi ne, %733, %734 : vector<16x128xi32>
    %c4_i32_126 = arith.constant 4 : i32
    %736 = vector.broadcast %c4_i32_126 : i32 to vector<16x128xi32>
    %737 = arith.andi %716, %736 : vector<16x128xi32>
    %c0_i32_127 = arith.constant 0 : i32
    %738 = vector.broadcast %c0_i32_127 : i32 to vector<16x128xi32>
    %739 = arith.cmpi ne, %737, %738 : vector<16x128xi32>
    %c1_i32_128 = arith.constant 1 : i32
    %740 = vector.broadcast %c1_i32_128 : i32 to vector<16x128xi32>
    %741 = arith.andi %708, %740 : vector<16x128xi32>
    %c0_i32_129 = arith.constant 0 : i32
    %742 = vector.broadcast %c0_i32_129 : i32 to vector<16x128xi32>
    %743 = arith.cmpi ne, %741, %742 : vector<16x128xi32>
    %c2_i32_130 = arith.constant 2 : i32
    %744 = vector.broadcast %c2_i32_130 : i32 to vector<16x128xi32>
    %745 = arith.andi %708, %744 : vector<16x128xi32>
    %c0_i32_131 = arith.constant 0 : i32
    %746 = vector.broadcast %c0_i32_131 : i32 to vector<16x128xi32>
    %747 = arith.cmpi ne, %745, %746 : vector<16x128xi32>
    %c4_i32_132 = arith.constant 4 : i32
    %748 = vector.broadcast %c4_i32_132 : i32 to vector<16x128xi32>
    %749 = arith.andi %708, %748 : vector<16x128xi32>
    %c0_i32_133 = arith.constant 0 : i32
    %750 = vector.broadcast %c0_i32_133 : i32 to vector<16x128xi32>
    %751 = arith.cmpi ne, %749, %750 : vector<16x128xi32>
    %752 = vector.broadcast %632 : f32 to vector<16x128xf32>
    %753 = vector.broadcast %631 : f32 to vector<16x128xf32>
    %754 = arith.select %731, %752, %753 : vector<16x128xi1>, vector<16x128xf32>
    %755 = vector.broadcast %634 : f32 to vector<16x128xf32>
    %756 = vector.broadcast %633 : f32 to vector<16x128xf32>
    %757 = arith.select %731, %755, %756 : vector<16x128xi1>, vector<16x128xf32>
    %758 = arith.select %735, %757, %754 : vector<16x128xi1>, vector<16x128xf32>
    %759 = vector.broadcast %636 : f32 to vector<16x128xf32>
    %760 = vector.broadcast %635 : f32 to vector<16x128xf32>
    %761 = arith.select %731, %759, %760 : vector<16x128xi1>, vector<16x128xf32>
    %762 = vector.broadcast %638 : f32 to vector<16x128xf32>
    %763 = vector.broadcast %637 : f32 to vector<16x128xf32>
    %764 = arith.select %731, %762, %763 : vector<16x128xi1>, vector<16x128xf32>
    %765 = arith.select %735, %764, %761 : vector<16x128xi1>, vector<16x128xf32>
    %766 = arith.select %739, %765, %758 : vector<16x128xi1>, vector<16x128xf32>
    %767 = vector.broadcast %640 : f32 to vector<16x128xf32>
    %768 = vector.broadcast %639 : f32 to vector<16x128xf32>
    %769 = arith.select %731, %767, %768 : vector<16x128xi1>, vector<16x128xf32>
    %770 = vector.broadcast %642 : f32 to vector<16x128xf32>
    %771 = vector.broadcast %641 : f32 to vector<16x128xf32>
    %772 = arith.select %731, %770, %771 : vector<16x128xi1>, vector<16x128xf32>
    %773 = arith.select %735, %772, %769 : vector<16x128xi1>, vector<16x128xf32>
    %774 = vector.broadcast %644 : f32 to vector<16x128xf32>
    %775 = vector.broadcast %643 : f32 to vector<16x128xf32>
    %776 = arith.select %731, %774, %775 : vector<16x128xi1>, vector<16x128xf32>
    %777 = vector.broadcast %646 : f32 to vector<16x128xf32>
    %778 = vector.broadcast %645 : f32 to vector<16x128xf32>
    %779 = arith.select %731, %777, %778 : vector<16x128xi1>, vector<16x128xf32>
    %780 = arith.select %735, %779, %776 : vector<16x128xi1>, vector<16x128xf32>
    %781 = arith.select %739, %780, %773 : vector<16x128xi1>, vector<16x128xf32>
    %782 = arith.select %743, %781, %766 : vector<16x128xi1>, vector<16x128xf32>
    %783 = vector.broadcast %648 : f32 to vector<16x128xf32>
    %784 = vector.broadcast %647 : f32 to vector<16x128xf32>
    %785 = arith.select %731, %783, %784 : vector<16x128xi1>, vector<16x128xf32>
    %786 = vector.broadcast %650 : f32 to vector<16x128xf32>
    %787 = vector.broadcast %649 : f32 to vector<16x128xf32>
    %788 = arith.select %731, %786, %787 : vector<16x128xi1>, vector<16x128xf32>
    %789 = arith.select %735, %788, %785 : vector<16x128xi1>, vector<16x128xf32>
    %790 = vector.broadcast %652 : f32 to vector<16x128xf32>
    %791 = vector.broadcast %651 : f32 to vector<16x128xf32>
    %792 = arith.select %731, %790, %791 : vector<16x128xi1>, vector<16x128xf32>
    %793 = vector.broadcast %654 : f32 to vector<16x128xf32>
    %794 = vector.broadcast %653 : f32 to vector<16x128xf32>
    %795 = arith.select %731, %793, %794 : vector<16x128xi1>, vector<16x128xf32>
    %796 = arith.select %735, %795, %792 : vector<16x128xi1>, vector<16x128xf32>
    %797 = arith.select %739, %796, %789 : vector<16x128xi1>, vector<16x128xf32>
    %798 = vector.broadcast %656 : f32 to vector<16x128xf32>
    %799 = vector.broadcast %655 : f32 to vector<16x128xf32>
    %800 = arith.select %731, %798, %799 : vector<16x128xi1>, vector<16x128xf32>
    %801 = vector.broadcast %658 : f32 to vector<16x128xf32>
    %802 = vector.broadcast %657 : f32 to vector<16x128xf32>
    %803 = arith.select %731, %801, %802 : vector<16x128xi1>, vector<16x128xf32>
    %804 = arith.select %735, %803, %800 : vector<16x128xi1>, vector<16x128xf32>
    %805 = vector.broadcast %660 : f32 to vector<16x128xf32>
    %806 = vector.broadcast %659 : f32 to vector<16x128xf32>
    %807 = arith.select %731, %805, %806 : vector<16x128xi1>, vector<16x128xf32>
    %808 = vector.broadcast %662 : f32 to vector<16x128xf32>
    %809 = vector.broadcast %661 : f32 to vector<16x128xf32>
    %810 = arith.select %731, %808, %809 : vector<16x128xi1>, vector<16x128xf32>
    %811 = arith.select %735, %810, %807 : vector<16x128xi1>, vector<16x128xf32>
    %812 = arith.select %739, %811, %804 : vector<16x128xi1>, vector<16x128xf32>
    %813 = arith.select %743, %812, %797 : vector<16x128xi1>, vector<16x128xf32>
    %814 = arith.select %747, %813, %782 : vector<16x128xi1>, vector<16x128xf32>
    %815 = vector.broadcast %664 : f32 to vector<16x128xf32>
    %816 = vector.broadcast %663 : f32 to vector<16x128xf32>
    %817 = arith.select %731, %815, %816 : vector<16x128xi1>, vector<16x128xf32>
    %818 = vector.broadcast %666 : f32 to vector<16x128xf32>
    %819 = vector.broadcast %665 : f32 to vector<16x128xf32>
    %820 = arith.select %731, %818, %819 : vector<16x128xi1>, vector<16x128xf32>
    %821 = arith.select %735, %820, %817 : vector<16x128xi1>, vector<16x128xf32>
    %822 = vector.broadcast %668 : f32 to vector<16x128xf32>
    %823 = vector.broadcast %667 : f32 to vector<16x128xf32>
    %824 = arith.select %731, %822, %823 : vector<16x128xi1>, vector<16x128xf32>
    %825 = vector.broadcast %670 : f32 to vector<16x128xf32>
    %826 = vector.broadcast %669 : f32 to vector<16x128xf32>
    %827 = arith.select %731, %825, %826 : vector<16x128xi1>, vector<16x128xf32>
    %828 = arith.select %735, %827, %824 : vector<16x128xi1>, vector<16x128xf32>
    %829 = arith.select %739, %828, %821 : vector<16x128xi1>, vector<16x128xf32>
    %830 = vector.broadcast %672 : f32 to vector<16x128xf32>
    %831 = vector.broadcast %671 : f32 to vector<16x128xf32>
    %832 = arith.select %731, %830, %831 : vector<16x128xi1>, vector<16x128xf32>
    %833 = vector.broadcast %674 : f32 to vector<16x128xf32>
    %834 = vector.broadcast %673 : f32 to vector<16x128xf32>
    %835 = arith.select %731, %833, %834 : vector<16x128xi1>, vector<16x128xf32>
    %836 = arith.select %735, %835, %832 : vector<16x128xi1>, vector<16x128xf32>
    %837 = vector.broadcast %676 : f32 to vector<16x128xf32>
    %838 = vector.broadcast %675 : f32 to vector<16x128xf32>
    %839 = arith.select %731, %837, %838 : vector<16x128xi1>, vector<16x128xf32>
    %840 = vector.broadcast %678 : f32 to vector<16x128xf32>
    %841 = vector.broadcast %677 : f32 to vector<16x128xf32>
    %842 = arith.select %731, %840, %841 : vector<16x128xi1>, vector<16x128xf32>
    %843 = arith.select %735, %842, %839 : vector<16x128xi1>, vector<16x128xf32>
    %844 = arith.select %739, %843, %836 : vector<16x128xi1>, vector<16x128xf32>
    %845 = arith.select %743, %844, %829 : vector<16x128xi1>, vector<16x128xf32>
    %846 = vector.broadcast %680 : f32 to vector<16x128xf32>
    %847 = vector.broadcast %679 : f32 to vector<16x128xf32>
    %848 = arith.select %731, %846, %847 : vector<16x128xi1>, vector<16x128xf32>
    %849 = vector.broadcast %682 : f32 to vector<16x128xf32>
    %850 = vector.broadcast %681 : f32 to vector<16x128xf32>
    %851 = arith.select %731, %849, %850 : vector<16x128xi1>, vector<16x128xf32>
    %852 = arith.select %735, %851, %848 : vector<16x128xi1>, vector<16x128xf32>
    %853 = vector.broadcast %684 : f32 to vector<16x128xf32>
    %854 = vector.broadcast %683 : f32 to vector<16x128xf32>
    %855 = arith.select %731, %853, %854 : vector<16x128xi1>, vector<16x128xf32>
    %856 = vector.broadcast %686 : f32 to vector<16x128xf32>
    %857 = vector.broadcast %685 : f32 to vector<16x128xf32>
    %858 = arith.select %731, %856, %857 : vector<16x128xi1>, vector<16x128xf32>
    %859 = arith.select %735, %858, %855 : vector<16x128xi1>, vector<16x128xf32>
    %860 = arith.select %739, %859, %852 : vector<16x128xi1>, vector<16x128xf32>
    %861 = vector.broadcast %688 : f32 to vector<16x128xf32>
    %862 = vector.broadcast %687 : f32 to vector<16x128xf32>
    %863 = arith.select %731, %861, %862 : vector<16x128xi1>, vector<16x128xf32>
    %864 = vector.broadcast %690 : f32 to vector<16x128xf32>
    %865 = vector.broadcast %689 : f32 to vector<16x128xf32>
    %866 = arith.select %731, %864, %865 : vector<16x128xi1>, vector<16x128xf32>
    %867 = arith.select %735, %866, %863 : vector<16x128xi1>, vector<16x128xf32>
    %868 = vector.broadcast %692 : f32 to vector<16x128xf32>
    %869 = vector.broadcast %691 : f32 to vector<16x128xf32>
    %870 = arith.select %731, %868, %869 : vector<16x128xi1>, vector<16x128xf32>
    %871 = vector.broadcast %694 : f32 to vector<16x128xf32>
    %872 = vector.broadcast %693 : f32 to vector<16x128xf32>
    %873 = arith.select %731, %871, %872 : vector<16x128xi1>, vector<16x128xf32>
    %874 = arith.select %735, %873, %870 : vector<16x128xi1>, vector<16x128xf32>
    %875 = arith.select %739, %874, %867 : vector<16x128xi1>, vector<16x128xf32>
    %876 = arith.select %743, %875, %860 : vector<16x128xi1>, vector<16x128xf32>
    %877 = arith.select %747, %876, %845 : vector<16x128xi1>, vector<16x128xf32>
    %878 = arith.select %751, %877, %814 : vector<16x128xi1>, vector<16x128xf32>
    %879 = arith.mulf %878, %34 : vector<16x128xf32>
    %cst_134 = arith.constant 0.000000e+00 : f32
    %880 = vector.broadcast %cst_134 : f32 to vector<16x128xf32>
    %881 = arith.select %727, %879, %880 : vector<16x128xi1>, vector<16x128xf32>
    %c2_135 = arith.constant 2 : index
    %c0_136 = arith.constant 0 : index
    %882 = arith.index_cast %3 : i32 to index
    %c0_137 = arith.constant 0 : index
    %883 = vector.load %arg3[%c2_135, %c0_136, %882, %c0_137] : memref<4x2x16x128xf32, #tpu.memory_space<vmem>>, vector<1x1x16x128xf32>
    %884 = vector.shape_cast %883 : vector<1x1x16x128xf32> to vector<16x128xf32>
    %885 = arith.mulf %881, %884 : vector<16x128xf32>
    %c2_138 = arith.constant 2 : index
    %c1_139 = arith.constant 1 : index
    %886 = arith.index_cast %3 : i32 to index
    %c0_140 = arith.constant 0 : index
    %887 = vector.load %arg3[%c2_138, %c1_139, %886, %c0_140] : memref<4x2x16x128xf32, #tpu.memory_space<vmem>>, vector<1x1x16x128xf32>
    %888 = vector.shape_cast %887 : vector<1x1x16x128xf32> to vector<16x128xf32>
    %889 = arith.mulf %881, %888 : vector<16x128xf32>
    %890 = arith.addf %609, %885 : vector<16x128xf32>
    %891 = arith.addf %610, %889 : vector<16x128xf32>
    %892 = arith.addf %616, %885 : vector<16x128xf32>
    %893 = arith.mulf %616, %885 : vector<16x128xf32>
    %cst_141 = arith.constant 1.000000e+00 : f32
    %894 = vector.broadcast %cst_141 : f32 to vector<16x128xf32>
    %895 = arith.subf %894, %893 : vector<16x128xf32>
    %896 = tpu.reciprocal %895 {approx = true} : vector<16x128xf32> -> vector<16x128xf32>
    %897 = arith.mulf %892, %896 : vector<16x128xf32>
    %898 = arith.addf %622, %889 : vector<16x128xf32>
    %899 = arith.mulf %622, %889 : vector<16x128xf32>
    %cst_142 = arith.constant 1.000000e+00 : f32
    %900 = vector.broadcast %cst_142 : f32 to vector<16x128xf32>
    %901 = arith.subf %900, %899 : vector<16x128xf32>
    %902 = tpu.reciprocal %901 {approx = true} : vector<16x128xf32> -> vector<16x128xf32>
    %903 = arith.mulf %898, %902 : vector<16x128xf32>
    %c4_143 = arith.constant 4 : index
    %c0_144 = arith.constant 0 : index
    %904 = arith.index_cast %3 : i32 to index
    %c0_145 = arith.constant 0 : index
    %905 = vector.load %arg5[%c4_143, %c0_144, %904, %c0_145] : memref<8x2x16x128xf32, #tpu.memory_space<vmem>>, vector<1x1x16x128xf32>
    %906 = vector.shape_cast %905 : vector<1x1x16x128xf32> to vector<16x128xf32>
    %907 = vector.shape_cast %697 : vector<16x128xf32> to vector<1x1x16x128xf32>
    tpu.vector_store %arg5[%c4_143, %c0_144, %904, %c0_145], %907 {strides = array<i32>} : memref<8x2x16x128xf32, #tpu.memory_space<vmem>>, vector<1x1x16x128xf32>,
    %c4_146 = arith.constant 4 : index
    %c1_147 = arith.constant 1 : index
    %908 = arith.index_cast %3 : i32 to index
    %c0_148 = arith.constant 0 : index
    %909 = vector.load %arg5[%c4_146, %c1_147, %908, %c0_148] : memref<8x2x16x128xf32, #tpu.memory_space<vmem>>, vector<1x1x16x128xf32>
    %910 = vector.shape_cast %909 : vector<1x1x16x128xf32> to vector<16x128xf32>
    %911 = vector.shape_cast %700 : vector<16x128xf32> to vector<1x1x16x128xf32>
    tpu.vector_store %arg5[%c4_146, %c1_147, %908, %c0_148], %911 {strides = array<i32>} : memref<8x2x16x128xf32, #tpu.memory_space<vmem>>, vector<1x1x16x128xf32>,
    %c192 = arith.constant 192 : index
    %912 = memref.load %arg1[%c192] : memref<256xf32, #tpu.memory_space<smem>>
    %c193 = arith.constant 193 : index
    %913 = memref.load %arg1[%c193] : memref<256xf32, #tpu.memory_space<smem>>
    %c194 = arith.constant 194 : index
    %914 = memref.load %arg1[%c194] : memref<256xf32, #tpu.memory_space<smem>>
    %c195 = arith.constant 195 : index
    %915 = memref.load %arg1[%c195] : memref<256xf32, #tpu.memory_space<smem>>
    %c196 = arith.constant 196 : index
    %916 = memref.load %arg1[%c196] : memref<256xf32, #tpu.memory_space<smem>>
    %c197 = arith.constant 197 : index
    %917 = memref.load %arg1[%c197] : memref<256xf32, #tpu.memory_space<smem>>
    %c198 = arith.constant 198 : index
    %918 = memref.load %arg1[%c198] : memref<256xf32, #tpu.memory_space<smem>>
    %c199 = arith.constant 199 : index
    %919 = memref.load %arg1[%c199] : memref<256xf32, #tpu.memory_space<smem>>
    %c200 = arith.constant 200 : index
    %920 = memref.load %arg1[%c200] : memref<256xf32, #tpu.memory_space<smem>>
    %c201 = arith.constant 201 : index
    %921 = memref.load %arg1[%c201] : memref<256xf32, #tpu.memory_space<smem>>
    %c202 = arith.constant 202 : index
    %922 = memref.load %arg1[%c202] : memref<256xf32, #tpu.memory_space<smem>>
    %c203 = arith.constant 203 : index
    %923 = memref.load %arg1[%c203] : memref<256xf32, #tpu.memory_space<smem>>
    %c204 = arith.constant 204 : index
    %924 = memref.load %arg1[%c204] : memref<256xf32, #tpu.memory_space<smem>>
    %c205 = arith.constant 205 : index
    %925 = memref.load %arg1[%c205] : memref<256xf32, #tpu.memory_space<smem>>
    %c206 = arith.constant 206 : index
    %926 = memref.load %arg1[%c206] : memref<256xf32, #tpu.memory_space<smem>>
    %c207 = arith.constant 207 : index
    %927 = memref.load %arg1[%c207] : memref<256xf32, #tpu.memory_space<smem>>
    %c208 = arith.constant 208 : index
    %928 = memref.load %arg1[%c208] : memref<256xf32, #tpu.memory_space<smem>>
    %c209 = arith.constant 209 : index
    %929 = memref.load %arg1[%c209] : memref<256xf32, #tpu.memory_space<smem>>
    %c210 = arith.constant 210 : index
    %930 = memref.load %arg1[%c210] : memref<256xf32, #tpu.memory_space<smem>>
    %c211 = arith.constant 211 : index
    %931 = memref.load %arg1[%c211] : memref<256xf32, #tpu.memory_space<smem>>
    %c212 = arith.constant 212 : index
    %932 = memref.load %arg1[%c212] : memref<256xf32, #tpu.memory_space<smem>>
    %c213 = arith.constant 213 : index
    %933 = memref.load %arg1[%c213] : memref<256xf32, #tpu.memory_space<smem>>
    %c214 = arith.constant 214 : index
    %934 = memref.load %arg1[%c214] : memref<256xf32, #tpu.memory_space<smem>>
    %c215 = arith.constant 215 : index
    %935 = memref.load %arg1[%c215] : memref<256xf32, #tpu.memory_space<smem>>
    %c216 = arith.constant 216 : index
    %936 = memref.load %arg1[%c216] : memref<256xf32, #tpu.memory_space<smem>>
    %c217 = arith.constant 217 : index
    %937 = memref.load %arg1[%c217] : memref<256xf32, #tpu.memory_space<smem>>
    %c218 = arith.constant 218 : index
    %938 = memref.load %arg1[%c218] : memref<256xf32, #tpu.memory_space<smem>>
    %c219 = arith.constant 219 : index
    %939 = memref.load %arg1[%c219] : memref<256xf32, #tpu.memory_space<smem>>
    %c220 = arith.constant 220 : index
    %940 = memref.load %arg1[%c220] : memref<256xf32, #tpu.memory_space<smem>>
    %c221 = arith.constant 221 : index
    %941 = memref.load %arg1[%c221] : memref<256xf32, #tpu.memory_space<smem>>
    %c222 = arith.constant 222 : index
    %942 = memref.load %arg1[%c222] : memref<256xf32, #tpu.memory_space<smem>>
    %c223 = arith.constant 223 : index
    %943 = memref.load %arg1[%c223] : memref<256xf32, #tpu.memory_space<smem>>
    %c224 = arith.constant 224 : index
    %944 = memref.load %arg1[%c224] : memref<256xf32, #tpu.memory_space<smem>>
    %c225 = arith.constant 225 : index
    %945 = memref.load %arg1[%c225] : memref<256xf32, #tpu.memory_space<smem>>
    %c226 = arith.constant 226 : index
    %946 = memref.load %arg1[%c226] : memref<256xf32, #tpu.memory_space<smem>>
    %c227 = arith.constant 227 : index
    %947 = memref.load %arg1[%c227] : memref<256xf32, #tpu.memory_space<smem>>
    %c228 = arith.constant 228 : index
    %948 = memref.load %arg1[%c228] : memref<256xf32, #tpu.memory_space<smem>>
    %c229 = arith.constant 229 : index
    %949 = memref.load %arg1[%c229] : memref<256xf32, #tpu.memory_space<smem>>
    %c230 = arith.constant 230 : index
    %950 = memref.load %arg1[%c230] : memref<256xf32, #tpu.memory_space<smem>>
    %c231 = arith.constant 231 : index
    %951 = memref.load %arg1[%c231] : memref<256xf32, #tpu.memory_space<smem>>
    %c232 = arith.constant 232 : index
    %952 = memref.load %arg1[%c232] : memref<256xf32, #tpu.memory_space<smem>>
    %c233 = arith.constant 233 : index
    %953 = memref.load %arg1[%c233] : memref<256xf32, #tpu.memory_space<smem>>
    %c234 = arith.constant 234 : index
    %954 = memref.load %arg1[%c234] : memref<256xf32, #tpu.memory_space<smem>>
    %c235 = arith.constant 235 : index
    %955 = memref.load %arg1[%c235] : memref<256xf32, #tpu.memory_space<smem>>
    %c236 = arith.constant 236 : index
    %956 = memref.load %arg1[%c236] : memref<256xf32, #tpu.memory_space<smem>>
    %c237 = arith.constant 237 : index
    %957 = memref.load %arg1[%c237] : memref<256xf32, #tpu.memory_space<smem>>
    %c238 = arith.constant 238 : index
    %958 = memref.load %arg1[%c238] : memref<256xf32, #tpu.memory_space<smem>>
    %c239 = arith.constant 239 : index
    %959 = memref.load %arg1[%c239] : memref<256xf32, #tpu.memory_space<smem>>
    %c240 = arith.constant 240 : index
    %960 = memref.load %arg1[%c240] : memref<256xf32, #tpu.memory_space<smem>>
    %c241 = arith.constant 241 : index
    %961 = memref.load %arg1[%c241] : memref<256xf32, #tpu.memory_space<smem>>
    %c242 = arith.constant 242 : index
    %962 = memref.load %arg1[%c242] : memref<256xf32, #tpu.memory_space<smem>>
    %c243 = arith.constant 243 : index
    %963 = memref.load %arg1[%c243] : memref<256xf32, #tpu.memory_space<smem>>
    %c244 = arith.constant 244 : index
    %964 = memref.load %arg1[%c244] : memref<256xf32, #tpu.memory_space<smem>>
    %c245 = arith.constant 245 : index
    %965 = memref.load %arg1[%c245] : memref<256xf32, #tpu.memory_space<smem>>
    %c246 = arith.constant 246 : index
    %966 = memref.load %arg1[%c246] : memref<256xf32, #tpu.memory_space<smem>>
    %c247 = arith.constant 247 : index
    %967 = memref.load %arg1[%c247] : memref<256xf32, #tpu.memory_space<smem>>
    %c248 = arith.constant 248 : index
    %968 = memref.load %arg1[%c248] : memref<256xf32, #tpu.memory_space<smem>>
    %c249 = arith.constant 249 : index
    %969 = memref.load %arg1[%c249] : memref<256xf32, #tpu.memory_space<smem>>
    %c250 = arith.constant 250 : index
    %970 = memref.load %arg1[%c250] : memref<256xf32, #tpu.memory_space<smem>>
    %c251 = arith.constant 251 : index
    %971 = memref.load %arg1[%c251] : memref<256xf32, #tpu.memory_space<smem>>
    %c252 = arith.constant 252 : index
    %972 = memref.load %arg1[%c252] : memref<256xf32, #tpu.memory_space<smem>>
    %c253 = arith.constant 253 : index
    %973 = memref.load %arg1[%c253] : memref<256xf32, #tpu.memory_space<smem>>
    %c254 = arith.constant 254 : index
    %974 = memref.load %arg1[%c254] : memref<256xf32, #tpu.memory_space<smem>>
    %c255 = arith.constant 255 : index
    %975 = memref.load %arg1[%c255] : memref<256xf32, #tpu.memory_space<smem>>
    %cst_149 = arith.constant 1.000000e-01 : f32
    %976 = vector.broadcast %cst_149 : f32 to vector<16x128xf32>
    %977 = arith.mulf %976, %897 : vector<16x128xf32>
    %978 = arith.addf %697, %977 : vector<16x128xf32>
    %cst_150 = arith.constant 1.000000e-01 : f32
    %979 = vector.broadcast %cst_150 : f32 to vector<16x128xf32>
    %980 = arith.mulf %979, %903 : vector<16x128xf32>
    %981 = arith.addf %700, %980 : vector<16x128xf32>
    %cst_151 = arith.constant 1.000000e+01 : f32
    %982 = vector.broadcast %cst_151 : f32 to vector<16x128xf32>
    %983 = arith.mulf %978, %982 : vector<16x128xf32>
    %984 = math.floor %983 : vector<16x128xf32>
    %cst_152 = arith.constant 0.000000e+00 : f32
    %cst_153 = arith.constant 7.000000e+00 : f32
    %985 = vector.broadcast %cst_152 : f32 to vector<16x128xf32>
    %986 = arith.maximumf %985, %984 : vector<16x128xf32>
    %987 = vector.broadcast %cst_153 : f32 to vector<16x128xf32>
    %988 = arith.minimumf %987, %986 : vector<16x128xf32>
    %989 = arith.fptosi %988 : vector<16x128xf32> to vector<16x128xi32>
    %cst_154 = arith.constant 1.000000e+01 : f32
    %990 = vector.broadcast %cst_154 : f32 to vector<16x128xf32>
    %991 = arith.mulf %981, %990 : vector<16x128xf32>
    %992 = math.floor %991 : vector<16x128xf32>
    %cst_155 = arith.constant 0.000000e+00 : f32
    %cst_156 = arith.constant 7.000000e+00 : f32
    %993 = vector.broadcast %cst_155 : f32 to vector<16x128xf32>
    %994 = arith.maximumf %993, %992 : vector<16x128xf32>
    %995 = vector.broadcast %cst_156 : f32 to vector<16x128xf32>
    %996 = arith.minimumf %995, %994 : vector<16x128xf32>
    %997 = arith.fptosi %996 : vector<16x128xf32> to vector<16x128xi32>
    %cst_157 = arith.constant 0.000000e+00 : f32
    %998 = vector.broadcast %cst_157 : f32 to vector<16x128xf32>
    %999 = arith.cmpf oge, %978, %998 : vector<16x128xf32>
    %cst_158 = arith.constant 8.000000e-01 : f32
    %1000 = vector.broadcast %cst_158 : f32 to vector<16x128xf32>
    %1001 = arith.cmpf olt, %978, %1000 : vector<16x128xf32>
    %1002 = arith.andi %999, %1001 : vector<16x128xi1>
    %cst_159 = arith.constant 0.000000e+00 : f32
    %1003 = vector.broadcast %cst_159 : f32 to vector<16x128xf32>
    %1004 = arith.cmpf oge, %981, %1003 : vector<16x128xf32>
    %1005 = arith.andi %1002, %1004 : vector<16x128xi1>
    %cst_160 = arith.constant 8.000000e-01 : f32
    %1006 = vector.broadcast %cst_160 : f32 to vector<16x128xf32>
    %1007 = arith.cmpf olt, %981, %1006 : vector<16x128xf32>
    %1008 = arith.andi %1005, %1007 : vector<16x128xi1>
    %c1_i32_161 = arith.constant 1 : i32
    %1009 = vector.broadcast %c1_i32_161 : i32 to vector<16x128xi32>
    %1010 = arith.andi %997, %1009 : vector<16x128xi32>
    %c0_i32_162 = arith.constant 0 : i32
    %1011 = vector.broadcast %c0_i32_162 : i32 to vector<16x128xi32>
    %1012 = arith.cmpi ne, %1010, %1011 : vector<16x128xi32>
    %c2_i32_163 = arith.constant 2 : i32
    %1013 = vector.broadcast %c2_i32_163 : i32 to vector<16x128xi32>
    %1014 = arith.andi %997, %1013 : vector<16x128xi32>
    %c0_i32_164 = arith.constant 0 : i32
    %1015 = vector.broadcast %c0_i32_164 : i32 to vector<16x128xi32>
    %1016 = arith.cmpi ne, %1014, %1015 : vector<16x128xi32>
    %c4_i32_165 = arith.constant 4 : i32
    %1017 = vector.broadcast %c4_i32_165 : i32 to vector<16x128xi32>
    %1018 = arith.andi %997, %1017 : vector<16x128xi32>
    %c0_i32_166 = arith.constant 0 : i32
    %1019 = vector.broadcast %c0_i32_166 : i32 to vector<16x128xi32>
    %1020 = arith.cmpi ne, %1018, %1019 : vector<16x128xi32>
    %c1_i32_167 = arith.constant 1 : i32
    %1021 = vector.broadcast %c1_i32_167 : i32 to vector<16x128xi32>
    %1022 = arith.andi %989, %1021 : vector<16x128xi32>
    %c0_i32_168 = arith.constant 0 : i32
    %1023 = vector.broadcast %c0_i32_168 : i32 to vector<16x128xi32>
    %1024 = arith.cmpi ne, %1022, %1023 : vector<16x128xi32>
    %c2_i32_169 = arith.constant 2 : i32
    %1025 = vector.broadcast %c2_i32_169 : i32 to vector<16x128xi32>
    %1026 = arith.andi %989, %1025 : vector<16x128xi32>
    %c0_i32_170 = arith.constant 0 : i32
    %1027 = vector.broadcast %c0_i32_170 : i32 to vector<16x128xi32>
    %1028 = arith.cmpi ne, %1026, %1027 : vector<16x128xi32>
    %c4_i32_171 = arith.constant 4 : i32
    %1029 = vector.broadcast %c4_i32_171 : i32 to vector<16x128xi32>
    %1030 = arith.andi %989, %1029 : vector<16x128xi32>
    %c0_i32_172 = arith.constant 0 : i32
    %1031 = vector.broadcast %c0_i32_172 : i32 to vector<16x128xi32>
    %1032 = arith.cmpi ne, %1030, %1031 : vector<16x128xi32>
    %1033 = vector.broadcast %913 : f32 to vector<16x128xf32>
    %1034 = vector.broadcast %912 : f32 to vector<16x128xf32>
    %1035 = arith.select %1012, %1033, %1034 : vector<16x128xi1>, vector<16x128xf32>
    %1036 = vector.broadcast %915 : f32 to vector<16x128xf32>
    %1037 = vector.broadcast %914 : f32 to vector<16x128xf32>
    %1038 = arith.select %1012, %1036, %1037 : vector<16x128xi1>, vector<16x128xf32>
    %1039 = arith.select %1016, %1038, %1035 : vector<16x128xi1>, vector<16x128xf32>
    %1040 = vector.broadcast %917 : f32 to vector<16x128xf32>
    %1041 = vector.broadcast %916 : f32 to vector<16x128xf32>
    %1042 = arith.select %1012, %1040, %1041 : vector<16x128xi1>, vector<16x128xf32>
    %1043 = vector.broadcast %919 : f32 to vector<16x128xf32>
    %1044 = vector.broadcast %918 : f32 to vector<16x128xf32>
    %1045 = arith.select %1012, %1043, %1044 : vector<16x128xi1>, vector<16x128xf32>
    %1046 = arith.select %1016, %1045, %1042 : vector<16x128xi1>, vector<16x128xf32>
    %1047 = arith.select %1020, %1046, %1039 : vector<16x128xi1>, vector<16x128xf32>
    %1048 = vector.broadcast %921 : f32 to vector<16x128xf32>
    %1049 = vector.broadcast %920 : f32 to vector<16x128xf32>
    %1050 = arith.select %1012, %1048, %1049 : vector<16x128xi1>, vector<16x128xf32>
    %1051 = vector.broadcast %923 : f32 to vector<16x128xf32>
    %1052 = vector.broadcast %922 : f32 to vector<16x128xf32>
    %1053 = arith.select %1012, %1051, %1052 : vector<16x128xi1>, vector<16x128xf32>
    %1054 = arith.select %1016, %1053, %1050 : vector<16x128xi1>, vector<16x128xf32>
    %1055 = vector.broadcast %925 : f32 to vector<16x128xf32>
    %1056 = vector.broadcast %924 : f32 to vector<16x128xf32>
    %1057 = arith.select %1012, %1055, %1056 : vector<16x128xi1>, vector<16x128xf32>
    %1058 = vector.broadcast %927 : f32 to vector<16x128xf32>
    %1059 = vector.broadcast %926 : f32 to vector<16x128xf32>
    %1060 = arith.select %1012, %1058, %1059 : vector<16x128xi1>, vector<16x128xf32>
    %1061 = arith.select %1016, %1060, %1057 : vector<16x128xi1>, vector<16x128xf32>
    %1062 = arith.select %1020, %1061, %1054 : vector<16x128xi1>, vector<16x128xf32>
    %1063 = arith.select %1024, %1062, %1047 : vector<16x128xi1>, vector<16x128xf32>
    %1064 = vector.broadcast %929 : f32 to vector<16x128xf32>
    %1065 = vector.broadcast %928 : f32 to vector<16x128xf32>
    %1066 = arith.select %1012, %1064, %1065 : vector<16x128xi1>, vector<16x128xf32>
    %1067 = vector.broadcast %931 : f32 to vector<16x128xf32>
    %1068 = vector.broadcast %930 : f32 to vector<16x128xf32>
    %1069 = arith.select %1012, %1067, %1068 : vector<16x128xi1>, vector<16x128xf32>
    %1070 = arith.select %1016, %1069, %1066 : vector<16x128xi1>, vector<16x128xf32>
    %1071 = vector.broadcast %933 : f32 to vector<16x128xf32>
    %1072 = vector.broadcast %932 : f32 to vector<16x128xf32>
    %1073 = arith.select %1012, %1071, %1072 : vector<16x128xi1>, vector<16x128xf32>
    %1074 = vector.broadcast %935 : f32 to vector<16x128xf32>
    %1075 = vector.broadcast %934 : f32 to vector<16x128xf32>
    %1076 = arith.select %1012, %1074, %1075 : vector<16x128xi1>, vector<16x128xf32>
    %1077 = arith.select %1016, %1076, %1073 : vector<16x128xi1>, vector<16x128xf32>
    %1078 = arith.select %1020, %1077, %1070 : vector<16x128xi1>, vector<16x128xf32>
    %1079 = vector.broadcast %937 : f32 to vector<16x128xf32>
    %1080 = vector.broadcast %936 : f32 to vector<16x128xf32>
    %1081 = arith.select %1012, %1079, %1080 : vector<16x128xi1>, vector<16x128xf32>
    %1082 = vector.broadcast %939 : f32 to vector<16x128xf32>
    %1083 = vector.broadcast %938 : f32 to vector<16x128xf32>
    %1084 = arith.select %1012, %1082, %1083 : vector<16x128xi1>, vector<16x128xf32>
    %1085 = arith.select %1016, %1084, %1081 : vector<16x128xi1>, vector<16x128xf32>
    %1086 = vector.broadcast %941 : f32 to vector<16x128xf32>
    %1087 = vector.broadcast %940 : f32 to vector<16x128xf32>
    %1088 = arith.select %1012, %1086, %1087 : vector<16x128xi1>, vector<16x128xf32>
    %1089 = vector.broadcast %943 : f32 to vector<16x128xf32>
    %1090 = vector.broadcast %942 : f32 to vector<16x128xf32>
    %1091 = arith.select %1012, %1089, %1090 : vector<16x128xi1>, vector<16x128xf32>
    %1092 = arith.select %1016, %1091, %1088 : vector<16x128xi1>, vector<16x128xf32>
    %1093 = arith.select %1020, %1092, %1085 : vector<16x128xi1>, vector<16x128xf32>
    %1094 = arith.select %1024, %1093, %1078 : vector<16x128xi1>, vector<16x128xf32>
    %1095 = arith.select %1028, %1094, %1063 : vector<16x128xi1>, vector<16x128xf32>
    %1096 = vector.broadcast %945 : f32 to vector<16x128xf32>
    %1097 = vector.broadcast %944 : f32 to vector<16x128xf32>
    %1098 = arith.select %1012, %1096, %1097 : vector<16x128xi1>, vector<16x128xf32>
    %1099 = vector.broadcast %947 : f32 to vector<16x128xf32>
    %1100 = vector.broadcast %946 : f32 to vector<16x128xf32>
    %1101 = arith.select %1012, %1099, %1100 : vector<16x128xi1>, vector<16x128xf32>
    %1102 = arith.select %1016, %1101, %1098 : vector<16x128xi1>, vector<16x128xf32>
    %1103 = vector.broadcast %949 : f32 to vector<16x128xf32>
    %1104 = vector.broadcast %948 : f32 to vector<16x128xf32>
    %1105 = arith.select %1012, %1103, %1104 : vector<16x128xi1>, vector<16x128xf32>
    %1106 = vector.broadcast %951 : f32 to vector<16x128xf32>
    %1107 = vector.broadcast %950 : f32 to vector<16x128xf32>
    %1108 = arith.select %1012, %1106, %1107 : vector<16x128xi1>, vector<16x128xf32>
    %1109 = arith.select %1016, %1108, %1105 : vector<16x128xi1>, vector<16x128xf32>
    %1110 = arith.select %1020, %1109, %1102 : vector<16x128xi1>, vector<16x128xf32>
    %1111 = vector.broadcast %953 : f32 to vector<16x128xf32>
    %1112 = vector.broadcast %952 : f32 to vector<16x128xf32>
    %1113 = arith.select %1012, %1111, %1112 : vector<16x128xi1>, vector<16x128xf32>
    %1114 = vector.broadcast %955 : f32 to vector<16x128xf32>
    %1115 = vector.broadcast %954 : f32 to vector<16x128xf32>
    %1116 = arith.select %1012, %1114, %1115 : vector<16x128xi1>, vector<16x128xf32>
    %1117 = arith.select %1016, %1116, %1113 : vector<16x128xi1>, vector<16x128xf32>
    %1118 = vector.broadcast %957 : f32 to vector<16x128xf32>
    %1119 = vector.broadcast %956 : f32 to vector<16x128xf32>
    %1120 = arith.select %1012, %1118, %1119 : vector<16x128xi1>, vector<16x128xf32>
    %1121 = vector.broadcast %959 : f32 to vector<16x128xf32>
    %1122 = vector.broadcast %958 : f32 to vector<16x128xf32>
    %1123 = arith.select %1012, %1121, %1122 : vector<16x128xi1>, vector<16x128xf32>
    %1124 = arith.select %1016, %1123, %1120 : vector<16x128xi1>, vector<16x128xf32>
    %1125 = arith.select %1020, %1124, %1117 : vector<16x128xi1>, vector<16x128xf32>
    %1126 = arith.select %1024, %1125, %1110 : vector<16x128xi1>, vector<16x128xf32>
    %1127 = vector.broadcast %961 : f32 to vector<16x128xf32>
    %1128 = vector.broadcast %960 : f32 to vector<16x128xf32>
    %1129 = arith.select %1012, %1127, %1128 : vector<16x128xi1>, vector<16x128xf32>
    %1130 = vector.broadcast %963 : f32 to vector<16x128xf32>
    %1131 = vector.broadcast %962 : f32 to vector<16x128xf32>
    %1132 = arith.select %1012, %1130, %1131 : vector<16x128xi1>, vector<16x128xf32>
    %1133 = arith.select %1016, %1132, %1129 : vector<16x128xi1>, vector<16x128xf32>
    %1134 = vector.broadcast %965 : f32 to vector<16x128xf32>
    %1135 = vector.broadcast %964 : f32 to vector<16x128xf32>
    %1136 = arith.select %1012, %1134, %1135 : vector<16x128xi1>, vector<16x128xf32>
    %1137 = vector.broadcast %967 : f32 to vector<16x128xf32>
    %1138 = vector.broadcast %966 : f32 to vector<16x128xf32>
    %1139 = arith.select %1012, %1137, %1138 : vector<16x128xi1>, vector<16x128xf32>
    %1140 = arith.select %1016, %1139, %1136 : vector<16x128xi1>, vector<16x128xf32>
    %1141 = arith.select %1020, %1140, %1133 : vector<16x128xi1>, vector<16x128xf32>
    %1142 = vector.broadcast %969 : f32 to vector<16x128xf32>
    %1143 = vector.broadcast %968 : f32 to vector<16x128xf32>
    %1144 = arith.select %1012, %1142, %1143 : vector<16x128xi1>, vector<16x128xf32>
    %1145 = vector.broadcast %971 : f32 to vector<16x128xf32>
    %1146 = vector.broadcast %970 : f32 to vector<16x128xf32>
    %1147 = arith.select %1012, %1145, %1146 : vector<16x128xi1>, vector<16x128xf32>
    %1148 = arith.select %1016, %1147, %1144 : vector<16x128xi1>, vector<16x128xf32>
    %1149 = vector.broadcast %973 : f32 to vector<16x128xf32>
    %1150 = vector.broadcast %972 : f32 to vector<16x128xf32>
    %1151 = arith.select %1012, %1149, %1150 : vector<16x128xi1>, vector<16x128xf32>
    %1152 = vector.broadcast %975 : f32 to vector<16x128xf32>
    %1153 = vector.broadcast %974 : f32 to vector<16x128xf32>
    %1154 = arith.select %1012, %1152, %1153 : vector<16x128xi1>, vector<16x128xf32>
    %1155 = arith.select %1016, %1154, %1151 : vector<16x128xi1>, vector<16x128xf32>
    %1156 = arith.select %1020, %1155, %1148 : vector<16x128xi1>, vector<16x128xf32>
    %1157 = arith.select %1024, %1156, %1141 : vector<16x128xi1>, vector<16x128xf32>
    %1158 = arith.select %1028, %1157, %1126 : vector<16x128xi1>, vector<16x128xf32>
    %1159 = arith.select %1032, %1158, %1095 : vector<16x128xi1>, vector<16x128xf32>
    %1160 = arith.mulf %1159, %34 : vector<16x128xf32>
    %cst_173 = arith.constant 0.000000e+00 : f32
    %1161 = vector.broadcast %cst_173 : f32 to vector<16x128xf32>
    %1162 = arith.select %1008, %1160, %1161 : vector<16x128xi1>, vector<16x128xf32>
    %c3_174 = arith.constant 3 : index
    %c0_175 = arith.constant 0 : index
    %1163 = arith.index_cast %3 : i32 to index
    %c0_176 = arith.constant 0 : index
    %1164 = vector.load %arg3[%c3_174, %c0_175, %1163, %c0_176] : memref<4x2x16x128xf32, #tpu.memory_space<vmem>>, vector<1x1x16x128xf32>
    %1165 = vector.shape_cast %1164 : vector<1x1x16x128xf32> to vector<16x128xf32>
    %1166 = arith.mulf %1162, %1165 : vector<16x128xf32>
    %c3_177 = arith.constant 3 : index
    %c1_178 = arith.constant 1 : index
    %1167 = arith.index_cast %3 : i32 to index
    %c0_179 = arith.constant 0 : index
    %1168 = vector.load %arg3[%c3_177, %c1_178, %1167, %c0_179] : memref<4x2x16x128xf32, #tpu.memory_space<vmem>>, vector<1x1x16x128xf32>
    %1169 = vector.shape_cast %1168 : vector<1x1x16x128xf32> to vector<16x128xf32>
    %1170 = arith.mulf %1162, %1169 : vector<16x128xf32>
    %1171 = arith.addf %890, %1166 : vector<16x128xf32>
    %1172 = arith.addf %891, %1170 : vector<16x128xf32>
    %1173 = arith.addf %897, %1166 : vector<16x128xf32>
    %1174 = arith.mulf %897, %1166 : vector<16x128xf32>
    %cst_180 = arith.constant 1.000000e+00 : f32
    %1175 = vector.broadcast %cst_180 : f32 to vector<16x128xf32>
    %1176 = arith.subf %1175, %1174 : vector<16x128xf32>
    %1177 = tpu.reciprocal %1176 {approx = true} : vector<16x128xf32> -> vector<16x128xf32>
    %1178 = arith.mulf %1173, %1177 : vector<16x128xf32>
    %1179 = arith.addf %903, %1170 : vector<16x128xf32>
    %1180 = arith.mulf %903, %1170 : vector<16x128xf32>
    %cst_181 = arith.constant 1.000000e+00 : f32
    %1181 = vector.broadcast %cst_181 : f32 to vector<16x128xf32>
    %1182 = arith.subf %1181, %1180 : vector<16x128xf32>
    %1183 = tpu.reciprocal %1182 {approx = true} : vector<16x128xf32> -> vector<16x128xf32>
    %1184 = arith.mulf %1179, %1183 : vector<16x128xf32>
    %c5_182 = arith.constant 5 : index
    %c0_183 = arith.constant 0 : index
    %1185 = arith.index_cast %3 : i32 to index
    %c0_184 = arith.constant 0 : index
    %1186 = vector.load %arg5[%c5_182, %c0_183, %1185, %c0_184] : memref<8x2x16x128xf32, #tpu.memory_space<vmem>>, vector<1x1x16x128xf32>
    %1187 = vector.shape_cast %1186 : vector<1x1x16x128xf32> to vector<16x128xf32>
    %1188 = vector.shape_cast %978 : vector<16x128xf32> to vector<1x1x16x128xf32>
    tpu.vector_store %arg5[%c5_182, %c0_183, %1185, %c0_184], %1188 {strides = array<i32>} : memref<8x2x16x128xf32, #tpu.memory_space<vmem>>, vector<1x1x16x128xf32>,
    %c5_185 = arith.constant 5 : index
    %c1_186 = arith.constant 1 : index
    %1189 = arith.index_cast %3 : i32 to index
    %c0_187 = arith.constant 0 : index
    %1190 = vector.load %arg5[%c5_185, %c1_186, %1189, %c0_187] : memref<8x2x16x128xf32, #tpu.memory_space<vmem>>, vector<1x1x16x128xf32>
    %1191 = vector.shape_cast %1190 : vector<1x1x16x128xf32> to vector<16x128xf32>
    %1192 = vector.shape_cast %981 : vector<16x128xf32> to vector<1x1x16x128xf32>
    tpu.vector_store %arg5[%c5_185, %c1_186, %1189, %c0_187], %1192 {strides = array<i32>} : memref<8x2x16x128xf32, #tpu.memory_space<vmem>>, vector<1x1x16x128xf32>,
    %cst_188 = arith.constant 1.000000e-01 : f32
    %1193 = vector.broadcast %cst_188 : f32 to vector<16x128xf32>
    %1194 = arith.mulf %1193, %1178 : vector<16x128xf32>
    %1195 = arith.addf %978, %1194 : vector<16x128xf32>
    %cst_189 = arith.constant 1.000000e-01 : f32
    %1196 = vector.broadcast %cst_189 : f32 to vector<16x128xf32>
    %1197 = arith.mulf %1196, %1184 : vector<16x128xf32>
    %1198 = arith.addf %981, %1197 : vector<16x128xf32>
    %c6_190 = arith.constant 6 : index
    %c0_191 = arith.constant 0 : index
    %1199 = arith.index_cast %3 : i32 to index
    %c0_192 = arith.constant 0 : index
    %1200 = vector.load %arg5[%c6_190, %c0_191, %1199, %c0_192] : memref<8x2x16x128xf32, #tpu.memory_space<vmem>>, vector<1x1x16x128xf32>
    %1201 = vector.shape_cast %1200 : vector<1x1x16x128xf32> to vector<16x128xf32>
    %1202 = vector.shape_cast %1195 : vector<16x128xf32> to vector<1x1x16x128xf32>
    tpu.vector_store %arg5[%c6_190, %c0_191, %1199, %c0_192], %1202 {strides = array<i32>} : memref<8x2x16x128xf32, #tpu.memory_space<vmem>>, vector<1x1x16x128xf32>,
    %c6_193 = arith.constant 6 : index
    %c1_194 = arith.constant 1 : index
    %1203 = arith.index_cast %3 : i32 to index
    %c0_195 = arith.constant 0 : index
    %1204 = vector.load %arg5[%c6_193, %c1_194, %1203, %c0_195] : memref<8x2x16x128xf32, #tpu.memory_space<vmem>>, vector<1x1x16x128xf32>
    %1205 = vector.shape_cast %1204 : vector<1x1x16x128xf32> to vector<16x128xf32>
    %1206 = vector.shape_cast %1198 : vector<16x128xf32> to vector<1x1x16x128xf32>
    tpu.vector_store %arg5[%c6_193, %c1_194, %1203, %c0_195], %1206 {strides = array<i32>} : memref<8x2x16x128xf32, #tpu.memory_space<vmem>>, vector<1x1x16x128xf32>,
    %cst_196 = arith.constant 1.000000e-01 : f32
    %1207 = vector.broadcast %cst_196 : f32 to vector<16x128xf32>
    %1208 = arith.mulf %1207, %1178 : vector<16x128xf32>
    %1209 = arith.addf %1195, %1208 : vector<16x128xf32>
    %cst_197 = arith.constant 1.000000e-01 : f32
    %1210 = vector.broadcast %cst_197 : f32 to vector<16x128xf32>
    %1211 = arith.mulf %1210, %1184 : vector<16x128xf32>
    %1212 = arith.addf %1198, %1211 : vector<16x128xf32>
    %c7_198 = arith.constant 7 : index
    %c0_199 = arith.constant 0 : index
    %1213 = arith.index_cast %3 : i32 to index
    %c0_200 = arith.constant 0 : index
    %1214 = vector.load %arg5[%c7_198, %c0_199, %1213, %c0_200] : memref<8x2x16x128xf32, #tpu.memory_space<vmem>>, vector<1x1x16x128xf32>
    %1215 = vector.shape_cast %1214 : vector<1x1x16x128xf32> to vector<16x128xf32>
    %1216 = vector.shape_cast %1209 : vector<16x128xf32> to vector<1x1x16x128xf32>
    tpu.vector_store %arg5[%c7_198, %c0_199, %1213, %c0_200], %1216 {strides = array<i32>} : memref<8x2x16x128xf32, #tpu.memory_space<vmem>>, vector<1x1x16x128xf32>,
    %c7_201 = arith.constant 7 : index
    %c1_202 = arith.constant 1 : index
    %1217 = arith.index_cast %3 : i32 to index
    %c0_203 = arith.constant 0 : index
    %1218 = vector.load %arg5[%c7_201, %c1_202, %1217, %c0_203] : memref<8x2x16x128xf32, #tpu.memory_space<vmem>>, vector<1x1x16x128xf32>
    %1219 = vector.shape_cast %1218 : vector<1x1x16x128xf32> to vector<16x128xf32>
    %1220 = vector.shape_cast %1212 : vector<16x128xf32> to vector<1x1x16x128xf32>
    tpu.vector_store %arg5[%c7_201, %c1_202, %1217, %c0_203], %1220 {strides = array<i32>} : memref<8x2x16x128xf32, #tpu.memory_space<vmem>>, vector<1x1x16x128xf32>,
    %c0_204 = arith.constant 0 : index
    %1221 = arith.index_cast %3 : i32 to index
    %c0_205 = arith.constant 0 : index
    %1222 = vector.load %arg4[%c0_204, %1221, %c0_205] : memref<6x16x128xf32, #tpu.memory_space<vmem>>, vector<1x16x128xf32>
    %1223 = vector.shape_cast %1222 : vector<1x16x128xf32> to vector<16x128xf32>
    %1224 = vector.shape_cast %1209 : vector<16x128xf32> to vector<1x16x128xf32>
    tpu.vector_store %arg4[%c0_204, %1221, %c0_205], %1224 {strides = array<i32>} : memref<6x16x128xf32, #tpu.memory_space<vmem>>, vector<1x16x128xf32>,
    %c1_206 = arith.constant 1 : index
    %1225 = arith.index_cast %3 : i32 to index
    %c0_207 = arith.constant 0 : index
    %1226 = vector.load %arg4[%c1_206, %1225, %c0_207] : memref<6x16x128xf32, #tpu.memory_space<vmem>>, vector<1x16x128xf32>
    %1227 = vector.shape_cast %1226 : vector<1x16x128xf32> to vector<16x128xf32>
    %1228 = vector.shape_cast %1212 : vector<16x128xf32> to vector<1x16x128xf32>
    tpu.vector_store %arg4[%c1_206, %1225, %c0_207], %1228 {strides = array<i32>} : memref<6x16x128xf32, #tpu.memory_space<vmem>>, vector<1x16x128xf32>,
    %c3_208 = arith.constant 3 : index
    %1229 = arith.index_cast %3 : i32 to index
    %c0_209 = arith.constant 0 : index
    %1230 = vector.load %arg4[%c3_208, %1229, %c0_209] : memref<6x16x128xf32, #tpu.memory_space<vmem>>, vector<1x16x128xf32>
    %1231 = vector.shape_cast %1230 : vector<1x16x128xf32> to vector<16x128xf32>
    %1232 = vector.shape_cast %1171 : vector<16x128xf32> to vector<1x16x128xf32>
    tpu.vector_store %arg4[%c3_208, %1229, %c0_209], %1232 {strides = array<i32>} : memref<6x16x128xf32, #tpu.memory_space<vmem>>, vector<1x16x128xf32>,
    %c4_210 = arith.constant 4 : index
    %1233 = arith.index_cast %3 : i32 to index
    %c0_211 = arith.constant 0 : index
    %1234 = vector.load %arg4[%c4_210, %1233, %c0_211] : memref<6x16x128xf32, #tpu.memory_space<vmem>>, vector<1x16x128xf32>
    %1235 = vector.shape_cast %1234 : vector<1x16x128xf32> to vector<16x128xf32>
    %1236 = vector.shape_cast %1172 : vector<16x128xf32> to vector<1x16x128xf32>
    tpu.vector_store %arg4[%c4_210, %1233, %c0_211], %1236 {strides = array<i32>} : memref<6x16x128xf32, #tpu.memory_space<vmem>>, vector<1x16x128xf32>,
    %c1_i32_212 = arith.constant 1 : i32
    return
  }
  func.func @transform_0(%arg0: i32) -> i32 {
    %c0_i32 = arith.constant 0 : i32
    %c0_i32_0 = arith.constant 0 : i32
    return %c0_i32 : i32
  }
  func.func @transform_1(%arg0: i32) -> (i32, i32, i32) {
    %c0_i32 = arith.constant 0 : i32
    %c0_i32_0 = arith.constant 0 : i32
    %c0_i32_1 = arith.constant 0 : i32
    return %c0_i32, %arg0, %c0_i32_0 : i32, i32, i32
  }
  func.func @transform_2(%arg0: i32) -> (i32, i32, i32, i32) {
    %c0_i32 = arith.constant 0 : i32
    %c0_i32_0 = arith.constant 0 : i32
    %c0_i32_1 = arith.constant 0 : i32
    %c0_i32_2 = arith.constant 0 : i32
    return %c0_i32, %c0_i32_0, %arg0, %c0_i32_1 : i32, i32, i32, i32
  }
  func.func @transform_3(%arg0: i32) -> (i32, i32, i32) {
    %c0_i32 = arith.constant 0 : i32
    %c0_i32_0 = arith.constant 0 : i32
    %c0_i32_1 = arith.constant 0 : i32
    return %c0_i32, %arg0, %c0_i32_0 : i32, i32, i32
  }
  func.func @transform_4(%arg0: i32) -> (i32, i32, i32, i32) {
    %c0_i32 = arith.constant 0 : i32
    %c0_i32_0 = arith.constant 0 : i32
    %c0_i32_1 = arith.constant 0 : i32
    %c0_i32_2 = arith.constant 0 : i32
    return %c0_i32, %c0_i32_0, %arg0, %c0_i32_1 : i32, i32, i32, i32
  }
}

</mosaic_0001>

<llo_original>
// kernel: volume_forward.1
$region0: #{volume_forward.1}
  #allocation0 [shape = 'u32[]', space=smem, size = 0x4, offset = 0x4, fixed_abs, tag = 'smem constant byte address 0x4 - core index']
  #allocation1 [shape = 'u32[72,128]{1,0:T(1,128)}', space=vmem, size = 0x9000, scoped, tag = 'internal scratch']
  #allocation10 [shape = 's32[]', space=sflag, size = 0x4, offset = 0, fixed_abs, tag = 'sflag constant byte address 0x0 - dummy sync flag']
  #allocation12 [shape = 's32[]', space=sflag, size = 0x4, offset = 0, fixed_abs, tag = 'sflag constant byte address 0x0 - dummy sync flag']
  %s0 = inlined_call_operand.vmem [shape: f32[256], index: 0, kind: input, shape index: {}]
  %s1 = inlined_call_operand.vmem [shape: f32[6,32,128], index: 1, kind: input, shape index: {}, may-alias: {1,3}]
  %s2 = inlined_call_operand.hbm [shape: f32[4,2,32,128], index: 2, kind: input, shape index: {}]
  %s3 = inlined_call_operand.vmem [shape: f32[6,32,128], index: 3, kind: output, shape index: {0}, may-alias: {1,3}]
  %s4 = inlined_call_operand.hbm [shape: f32[8,2,32,128], index: 4, kind: output, shape index: {1}]
  %5 = xla_tuple %s3, %s4
  %s6 = sld [smem:[#allocation0]]
  $region133: #{volume_forward.1} parent=0
    _
  %s8 = ssub.s32 1, %s6
  %s9 = scalar_select 0, %s8, %s6
  $region1: #{volume_forward.1} parent=0
    #allocation2 [shape = 'u8[1024]{0}', space=smem, size = 0x400, scoped, tag = 'input window, operand 0, single buffered']
    #allocation3 [shape = 's32[2]{0}', space=sflag, size = 0x8, scoped, tag = 'scoped memory for volume_forward.1']
    #allocation4 [shape = 's32[2]{0}', space=sflag, size = 0x8, scoped, tag = 'scoped memory for volume_forward.1']
    #allocation5 [shape = 's32[2]{0}', space=sflag, size = 0x8, scoped, tag = 'scoped memory for volume_forward.1']
    #allocation6 [shape = 'u8[98304]{0}', space=vmem, size = 0x18000, scoped, tag = 'input window, operand 1']
    #allocation7 [shape = 'u8[131072]{0}', space=vmem, size = 0x20000, scoped, tag = 'input window, operand 2']
    #allocation8 [shape = 'u8[98304]{0}', space=vmem, size = 0x18000, scoped, tag = 'output window, operand 0']
    #allocation9 [shape = 'u8[262144]{0}', space=vmem, size = 0x40000, scoped, tag = 'output window, operand 1']
    %10 = vsyncpa [#allocation5], 0
    %11 = vsyncpa [#allocation3], 0
    %s12 = scalar_lea.sflag [#allocation3], 1
    %13 = vsyncpa %s12, 0
    %14 = vsyncpa [#allocation4], 0
    %s15 = scalar_lea.sflag [#allocation4], 1
    %16 = vsyncpa %s15, 0
    loop: start=0, step=1, limit=4
    $region2: #{volume_forward.1} parent=1 // loop_pre_header
      _
    $region3: #{volume_forward.1} parent=1 // loop_header
      %s18 = sphi 0, %s22
      %p19 = scmp.ge.s32.totalorder %s18, 4
      %s26 = sphi 0, %s26
      %s28 = sphi 0, %s26
      %s29 = sphi 0, %s28
      %s43 = sphi 0, %s29
      %s49 = sphi 0, %s51
      %s52 = sphi 0, %s49
      %s53 = sphi 0, %s52
      %s69 = sphi 0, %s53
      %s75 = sphi 0, %s77
      %s78 = sphi 0, %s75
      %s79 = sphi 0, %s78
      %s95 = sphi 0, %s79
      %s101 = sphi 0, %s103
      %s104 = sphi 0, %s101
      %s105 = sphi 0, %s104
      %s121 = sphi 0, %s105
      %s127 = sphi 0, %s129
      %s130 = sphi 0, %s127
      %s131 = sphi 0, %s130
      %s147 = sphi 0, %s131
    $region4: #{volume_forward.1} parent=1 // loop_header_branch
      %21 = sbr.rel (%p19) target = $region8
    $region5: #{volume_forward.1} parent=1 // loop_body
      %s23 = ssub.s32 %s18, 1
      %s24 = ssub.s32 %s18, 2
      %s25 = sadd.s32 %s18, 1
      %s27 = sadd.s32 %s26, 1
      %p30 = scmp.eq.s32.totalorder %s18, 1
      %p31 = scmp.ne.s32.totalorder %s26, %s28
      %p32 = scmp.eq.s32.totalorder %s18, 0
      %p33 = por %p31, %p32
      %p34 = scmp.ne.s32.totalorder %s26, %s28
      %p35 = scmp.eq.s32.totalorder %s23, 1
      %p36 = por %p34, %p35
      %p37 = scmp.ne.s32.totalorder %s28, %s29
      %p38 = scmp.eq.s32.totalorder %s23, 0
      %p39 = por %p37, %p38
      %p40 = scmp.ne.s32.totalorder %s28, %s29
      %p41 = scmp.eq.s32.totalorder %s24, 1
      %p42 = por %p40, %p41
      %p44 = scmp.ne.s32.totalorder %s29, %s43
      %p45 = scmp.eq.s32.totalorder %s24, 0
      %p46 = por %p44, %p45
      %s47 = ssub.s32 %s18, %s25
      %p48 = scmp.eq.s32.totalorder %s47, 0
      %s50 = sadd.s32 %s49, 1
      %s51 = scalar_select %p48, %s49, %s50
      %p54 = pneg %p48
      %p55 = scmp.eq.s32.totalorder %s18, 1
      %p56 = por %p54, %p55
      %p57 = scmp.ne.s32.totalorder %s49, %s52
      %p58 = scmp.eq.s32.totalorder %s18, 0
      %p59 = por %p57, %p58
      %p60 = scmp.ne.s32.totalorder %s49, %s52
      %p61 = scmp.eq.s32.totalorder %s23, 1
      %p62 = por %p60, %p61
      %p63 = scmp.ne.s32.totalorder %s52, %s53
      %p64 = scmp.eq.s32.totalorder %s23, 0
      %p65 = por %p63, %p64
      %p66 = scmp.ne.s32.totalorder %s52, %s53
      %p67 = scmp.eq.s32.totalorder %s24, 1
      %p68 = por %p66, %p67
      %p70 = scmp.ne.s32.totalorder %s53, %s69
      %p71 = scmp.eq.s32.totalorder %s24, 0
      %p72 = por %p70, %p71
      %s73 = ssub.s32 %s18, %s25
      %p74 = scmp.eq.s32.totalorder %s73, 0
      %s76 = sadd.s32 %s75, 1
      %s77 = scalar_select %p74, %s75, %s76
      %p80 = pneg %p74
      %p81 = scmp.eq.s32.totalorder %s18, 1
      %p82 = por %p80, %p81
      %p83 = scmp.ne.s32.totalorder %s75, %s78
      %p84 = scmp.eq.s32.totalorder %s18, 0
      %p85 = por %p83, %p84
      %p86 = scmp.ne.s32.totalorder %s75, %s78
      %p87 = scmp.eq.s32.totalorder %s23, 1
      %p88 = por %p86, %p87
      %p89 = scmp.ne.s32.totalorder %s78, %s79
      %p90 = scmp.eq.s32.totalorder %s23, 0
      %p91 = por %p89, %p90
      %p92 = scmp.ne.s32.totalorder %s78, %s79
      %p93 = scmp.eq.s32.totalorder %s24, 1
      %p94 = por %p92, %p93
      %p96 = scmp.ne.s32.totalorder %s79, %s95
      %p97 = scmp.eq.s32.totalorder %s24, 0
      %p98 = por %p96, %p97
      %s99 = ssub.s32 %s18, %s25
      %p100 = scmp.eq.s32.totalorder %s99, 0
      %s102 = sadd.s32 %s101, 1
      %s103 = scalar_select %p100, %s101, %s102
      %p106 = pneg %p100
      %p107 = scmp.eq.s32.totalorder %s18, 1
      %p108 = por %p106, %p107
      %p109 = scmp.ne.s32.totalorder %s101, %s104
      %p110 = scmp.eq.s32.totalorder %s18, 0
      %p111 = por %p109, %p110
      %p112 = scmp.ne.s32.totalorder %s101, %s104
      %p113 = scmp.eq.s32.totalorder %s23, 1
      %p114 = por %p112, %p113
      %p115 = scmp.ne.s32.totalorder %s104, %s105
      %p116 = scmp.eq.s32.totalorder %s23, 0
      %p117 = por %p115, %p116
      %p118 = scmp.ne.s32.totalorder %s104, %s105
      %p119 = scmp.eq.s32.totalorder %s24, 1
      %p120 = por %p118, %p119
      %p122 = scmp.ne.s32.totalorder %s105, %s121
      %p123 = scmp.eq.s32.totalorder %s24, 0
      %p124 = por %p122, %p123
      %s125 = ssub.s32 %s18, %s25
      %p126 = scmp.eq.s32.totalorder %s125, 0
      %s128 = sadd.s32 %s127, 1
      %s129 = scalar_select %p126, %s127, %s128
      %p132 = pneg %p126
      %p133 = scmp.eq.s32.totalorder %s18, 1
      %p134 = por %p132, %p133
      %p135 = scmp.ne.s32.totalorder %s127, %s130
      %p136 = scmp.eq.s32.totalorder %s18, 0
      %p137 = por %p135, %p136
      %p138 = scmp.ne.s32.totalorder %s127, %s130
      %p139 = scmp.eq.s32.totalorder %s23, 1
      %p140 = por %p138, %p139
      %p141 = scmp.ne.s32.totalorder %s130, %s131
      %p142 = scmp.eq.s32.totalorder %s23, 0
      %p143 = por %p141, %p142
      %p144 = scmp.ne.s32.totalorder %s130, %s131
      %p145 = scmp.eq.s32.totalorder %s24, 1
      %p146 = por %p144, %p145
      %p148 = scmp.ne.s32.totalorder %s131, %s147
      %p149 = scmp.eq.s32.totalorder %s24, 0
      %p150 = por %p148, %p149
      %p151 = scmp.le.s32.totalorder 1, %s18
      %p152 = scmp.lt.s32.totalorder %s18, 3
      %p153 = pnand %p151, %p152
      %p154 = pneg %p153
      // Predicated region
      $region9: #{volume_forward.1} parent=5 // pred_check
        _
      $region10: #{volume_forward.1} parent=5 // pred_check_branch
        %156 = sbr.rel (%p153) target = $region12
      $region11: #{volume_forward.1} parent=5 // pred_region
        %s157 = ssub.s32 %s18, 1
        // Predicated region
        $region13: #{volume_forward.1} parent=11 // pred_check
          %p158 = pneg %p39
        $region14: #{volume_forward.1} parent=11 // pred_check_branch
          %160 = sbr.rel (%p158) target = $region16
        $region15: #{volume_forward.1} parent=11 // pred_region
          %162 = vsyncadd [#allocation5], 0
          %s164 = sshll.u32 %s0, 4
          %s165 = int_to_ptr.vmem [resolvable:$true] %s164
          %167 = dma.vmem_to_smem %s165, 32, [#allocation2], [#allocation5]
        $region16: #{volume_forward.1} parent=11 // pred_fallthru
          _
      $region12: #{volume_forward.1} parent=5 // pred_fallthru
        _
      %p168 = scmp.lt.s32.totalorder %s18, 2
      // Predicated region
      $region17: #{volume_forward.1} parent=5 // pred_check
        %p169 = pneg %p168
      $region18: #{volume_forward.1} parent=5 // pred_check_branch
        %171 = sbr.rel (%p169) target = $region20
      $region19: #{volume_forward.1} parent=5 // pred_region
        // Predicated region
        $region21: #{volume_forward.1} parent=19 // pred_check
          %p172 = pneg %p59
        $region22: #{volume_forward.1} parent=19 // pred_check_branch
          %174 = sbr.rel (%p172) target = $region24
        $region23: #{volume_forward.1} parent=19 // pred_region
          %s175 = sand.u32 %s49, 1
          %s176 = sand.u32 %s49, 1
          %s177 = smul.addr %s176, 96
          %s178 = scalar_lea.vmem [#allocation6], %s177
          %s179 = smul.u32 2, %s18
          %s180 = smul.addr %s179, 8
          %s181 = scalar_lea.vmem %s1, %s180
          // Predicated region
          $region25: #{volume_forward.1} parent=23 // pred_check
            _
          $region26: #{volume_forward.1} parent=23 // pred_check_branch
            %183 = sbr.rel (0) target = $region28
          $region27: #{volume_forward.1} parent=23 // pred_region
            // Predicated region
            $region29: #{volume_forward.1} parent=27 // pred_check
              _
            $region30: #{volume_forward.1} parent=27 // pred_check_branch
              %185 = sbr.rel (0) target = $region32
            $region31: #{volume_forward.1} parent=27 // pred_region
              // Predicated region
              $region44: #{volume_forward.1} parent=31 // pred_check
                _
              $region45: #{volume_forward.1} parent=31 // pred_check_branch
                %223 = sbr.rel (0) target = $region47
              $region46: #{volume_forward.1} parent=31 // pred_region
                loop: start=0, step=1, limit=1
                $region48: #{volume_forward.1} parent=46 // loop_pre_header
                  _
                $region49: #{volume_forward.1} parent=46 // loop_header
                  %s225 = sphi 0, %s229
                  %p226 = scmp.ge.s32.totalorder %s225, 1
                  %s230 = sphi %s181, %s181
                  %s231 = sphi %s178, %s178
                $region50: #{volume_forward.1} parent=46 // loop_header_branch
                  %228 = sbr.rel (%p226) target = $region54
                $region51: #{volume_forward.1} parent=46 // loop_body
                  %v232 = vld [vmem:[%s230] sm:$0xff]
                  %233 = vst [vmem:[%s231] sm:$0xff] %v232
                  %v234 = vld [vmem:[%s230 + $0x8] sm:$0xff]
                  %235 = vst [vmem:[%s231 + $0x8] sm:$0xff] %v234
                  %v236 = vld [vmem:[%s230 + $0x20] sm:$0xff]
                  %237 = vst [vmem:[%s231 + $0x10] sm:$0xff] %v236
                  %v238 = vld [vmem:[%s230 + $0x28] sm:$0xff]
                  %239 = vst [vmem:[%s231 + $0x18] sm:$0xff] %v238
                  %v240 = vld [vmem:[%s230 + $0x40] sm:$0xff]
                  %241 = vst [vmem:[%s231 + $0x20] sm:$0xff] %v240
                  %v242 = vld [vmem:[%s230 + $0x48] sm:$0xff]
                  %243 = vst [vmem:[%s231 + $0x28] sm:$0xff] %v242
                  %v244 = vld [vmem:[%s230 + $0x60] sm:$0xff]
                  %245 = vst [vmem:[%s231 + $0x30] sm:$0xff] %v244
                  %v246 = vld [vmem:[%s230 + $0x68] sm:$0xff]
                  %247 = vst [vmem:[%s231 + $0x38] sm:$0xff] %v246
                  %v248 = vld [vmem:[%s230 + $0x80] sm:$0xff]
                  %249 = vst [vmem:[%s231 + $0x40] sm:$0xff] %v248
                  %v250 = vld [vmem:[%s230 + $0x88] sm:$0xff]
                  %251 = vst [vmem:[%s231 + $0x48] sm:$0xff] %v250
                  %v252 = vld [vmem:[%s230 + $0xa0] sm:$0xff]
                  %253 = vst [vmem:[%s231 + $0x50] sm:$0xff] %v252
                  %v254 = vld [vmem:[%s230 + $0xa8] sm:$0xff]
                  %255 = vst [vmem:[%s231 + $0x58] sm:$0xff] %v254
                $region52: #{volume_forward.1} parent=46 // loop_footer
                  %s229 = sadd.s32 1, %s225
                $region53: #{volume_forward.1} parent=46 // loop_footer_branch
                  %224 = sbr.rel target = $region49
                $region54: #{volume_forward.1} parent=46 // loop_exit
                  _
              $region47: #{volume_forward.1} parent=31 // pred_fallthru
                _
              // Predicated region
              $region55: #{volume_forward.1} parent=31 // pred_check
                _
              $region56: #{volume_forward.1} parent=31 // pred_check_branch
                %257 = sbr.rel target = $region58
              $region57: #{volume_forward.1} parent=31 // pred_region
                _
              $region58: #{volume_forward.1} parent=31 // pred_fallthru
                _
            $region32: #{volume_forward.1} parent=27 // pred_fallthru
              _
            // Predicated region
            $region33: #{volume_forward.1} parent=27 // pred_check
              _
            $region34: #{volume_forward.1} parent=27 // pred_check_branch
              %187 = sbr.rel target = $region36
            $region35: #{volume_forward.1} parent=27 // pred_region
              %s189 = ssub.s32 256, 1
              loop: start=0, step=1, limit=1
              $region37: #{volume_forward.1} parent=35 // loop_pre_header
                _
              $region38: #{volume_forward.1} parent=35 // loop_header
                %s191 = sphi 0, %s195
                %p192 = scmp.ge.s32.totalorder %s191, 1
                %s196 = sphi %s181, %s181
                %s197 = sphi %s178, %s178
              $region39: #{volume_forward.1} parent=35 // loop_header_branch
                %194 = sbr.rel (%p192) target = $region43
              $region40: #{volume_forward.1} parent=35 // loop_body
                %v198 = vld [vmem:[%s196] sm:%s189]
                %199 = vst [vmem:[%s197] sm:%s189] %v198
                %v200 = vld [vmem:[%s196 + $0x8] sm:%s189]
                %201 = vst [vmem:[%s197 + $0x8] sm:%s189] %v200
                %v202 = vld [vmem:[%s196 + $0x20] sm:%s189]
                %203 = vst [vmem:[%s197 + $0x10] sm:%s189] %v202
                %v204 = vld [vmem:[%s196 + $0x28] sm:%s189]
                %205 = vst [vmem:[%s197 + $0x18] sm:%s189] %v204
                %v206 = vld [vmem:[%s196 + $0x40] sm:%s189]
                %207 = vst [vmem:[%s197 + $0x20] sm:%s189] %v206
                %v208 = vld [vmem:[%s196 + $0x48] sm:%s189]
                %209 = vst [vmem:[%s197 + $0x28] sm:%s189] %v208
                %v210 = vld [vmem:[%s196 + $0x60] sm:%s189]
                %211 = vst [vmem:[%s197 + $0x30] sm:%s189] %v210
                %v212 = vld [vmem:[%s196 + $0x68] sm:%s189]
                %213 = vst [vmem:[%s197 + $0x38] sm:%s189] %v212
                %v214 = vld [vmem:[%s196 + $0x80] sm:%s189]
                %215 = vst [vmem:[%s197 + $0x40] sm:%s189] %v214
                %v216 = vld [vmem:[%s196 + $0x88] sm:%s189]
                %217 = vst [vmem:[%s197 + $0x48] sm:%s189] %v216
                %v218 = vld [vmem:[%s196 + $0xa0] sm:%s189]
                %219 = vst [vmem:[%s197 + $0x50] sm:%s189] %v218
                %v220 = vld [vmem:[%s196 + $0xa8] sm:%s189]
                %221 = vst [vmem:[%s197 + $0x58] sm:%s189] %v220
              $region41: #{volume_forward.1} parent=35 // loop_footer
                %s195 = sadd.s32 1, %s191
              $region42: #{volume_forward.1} parent=35 // loop_footer_branch
                %190 = sbr.rel target = $region38
              $region43: #{volume_forward.1} parent=35 // loop_exit
                _
            $region36: #{volume_forward.1} parent=27 // pred_fallthru
              _
          $region28: #{volume_forward.1} parent=23 // pred_fallthru
            _
          %258 = vnop
        $region24: #{volume_forward.1} parent=19 // pred_fallthru
          _
        // Predicated region
        $region59: #{volume_forward.1} parent=19 // pred_check
          %p259 = pneg %p85
        $region60: #{volume_forward.1} parent=19 // pred_check_branch
          %261 = sbr.rel (%p259) target = $region62
        $region61: #{volume_forward.1} parent=19 // pred_region
          #allocation11 [shape = 'u32[6]{0}', space=smem, size = 0x18, scoped, tag = 'DMA stride descriptor']
          %s262 = sand.u32 %s75, 1
          %s263 = scalar_lea.sflag [#allocation3], %s262
          %s264 = sand.u32 %s75, 1
          %s265 = smul.addr %s264, 128
          %s266 = scalar_lea.vmem [#allocation7], %s265
          %s267 = smul.u32 2, %s18
          %269 = vsyncadd %s263, 0
          %s270 = smul.addr %s267, 8
          %s271 = scalar_lea.hbm %s2, %s270
          %s273 = sshll.u32 1, 14
          %s274 = sxor.u32 4294967295, %s273
          %s276 = sld [smem:[#allocation0]]
          %s277 = sadd.s32 2, %s276
          %s279 = sshll.u32 7, 26
          %s280 = sxor.u32 4294967295, %s279
          %s281 = sand.u32 0, %s280
          %s282 = sshll.u32 %s277, 26
          %s283 = sor.u32 %s281, %s282
          %s284 = sshll.u32 %s271, 4
          %s285 = int_to_ptr.hbm [resolvable:$true] %s284
          %s286 = sshll.u32 %s266, 4
          %s287 = int_to_ptr.vmem [resolvable:$true] %s286
          %293 = sst [smem:[#allocation11]] 512
          %s294 = scalar_lea.smem [#allocation11], 1
          %295 = sst [smem:[%s294]] 256
          %s296 = scalar_lea.smem [#allocation11], 2
          %297 = sst [smem:[%s296]] 2
          %s298 = scalar_lea.smem [#allocation11], 3
          %299 = sst [smem:[%s298]] 128
          %s300 = scalar_lea.smem [#allocation11], 4
          %301 = sst [smem:[%s300]] 128
          %s302 = scalar_lea.smem [#allocation11], 5
          %303 = sst [smem:[%s302]] 8
          %305 = dma.general %s285, 2048, %s287, %s263, [#allocation10], [#allocation11], %s283, 0
        $region62: #{volume_forward.1} parent=19 // pred_fallthru
          _
      $region20: #{volume_forward.1} parent=5 // pred_fallthru
        _
      %p306 = scmp.le.s32.totalorder 1, %s18
      %p307 = scmp.lt.s32.totalorder %s18, 3
      %p308 = pnand %p306, %p307
      %p309 = pneg %p308
      // Predicated region
      $region63: #{volume_forward.1} parent=5 // pred_check
        _
      $region64: #{volume_forward.1} parent=5 // pred_check_branch
        %311 = sbr.rel (%p308) target = $region66
      $region65: #{volume_forward.1} parent=5 // pred_region
        %s312 = ssub.s32 %s18, 1
        // Predicated region
        $region67: #{volume_forward.1} parent=65 // pred_check
          %p313 = pneg %p39
        $region68: #{volume_forward.1} parent=65 // pred_check_branch
          %315 = sbr.rel (%p313) target = $region70
        $region69: #{volume_forward.1} parent=65 // pred_region
          %317 = dma.done [#allocation5], 32
        $region70: #{volume_forward.1} parent=65 // pred_fallthru
          _
        %s318 = sand.u32 %s52, 1
        %s319 = sand.u32 %s52, 1
        %s320 = smul.addr %s319, 96
        %s321 = scalar_lea.vmem [#allocation6], %s320
        // Predicated region
        $region71: #{volume_forward.1} parent=65 // pred_check
          %p322 = pneg %p65
        $region72: #{volume_forward.1} parent=65 // pred_check_branch
          %324 = sbr.rel (%p322) target = $region74
        $region73: #{volume_forward.1} parent=65 // pred_region
          _
        $region74: #{volume_forward.1} parent=65 // pred_fallthru
          _
        %s325 = sand.u32 %s78, 1
        %s326 = scalar_lea.sflag [#allocation3], %s325
        %s327 = sand.u32 %s78, 1
        %s328 = smul.addr %s327, 128
        %s329 = scalar_lea.vmem [#allocation7], %s328
        // Predicated region
        $region75: #{volume_forward.1} parent=65 // pred_check
          %p330 = pneg %p91
        $region76: #{volume_forward.1} parent=65 // pred_check_branch
          %332 = sbr.rel (%p330) target = $region78
        $region77: #{volume_forward.1} parent=65 // pred_region
          %334 = dma.done %s326, 2048
        $region78: #{volume_forward.1} parent=65 // pred_fallthru
          _
        %335 = sfence
        %p336 = pneg %p39
        %p337 = pneg %p36
        %s338 = sand.u32 %s52, 1
        %s339 = sand.u32 %s52, 1
        %s340 = smul.addr %s339, 96
        %s341 = scalar_lea.vmem [#allocation6], %s340
        %p342 = pneg %p65
        %p343 = pneg %p62
        %s344 = sand.u32 %s78, 1
        %s345 = scalar_lea.sflag [#allocation3], %s344
        %s346 = sand.u32 %s78, 1
        %s347 = smul.addr %s346, 128
        %s348 = scalar_lea.vmem [#allocation7], %s347
        %p349 = pneg %p91
        %p350 = pneg %p88
        %p351 = pneg %p117
        %p352 = pneg %p114
        %s353 = sand.u32 %s104, 1
        %s354 = sand.u32 %s104, 1
        %s355 = smul.addr %s354, 96
        %s356 = scalar_lea.vmem [#allocation8], %s355
        %p357 = pneg %p143
        %p358 = pneg %p140
        %s359 = sand.u32 %s130, 1
        %s360 = scalar_lea.sflag [#allocation4], %s359
        %s361 = sand.u32 %s130, 1
        %s362 = smul.addr %s361, 256
        %s363 = scalar_lea.vmem [#allocation9], %s362
        %s364 = smul.u32 2, %s23
        %s365 = smul.u32 2, %s23
        %s366 = smul.u32 2, %s23
        %s367 = smul.u32 2, %s23
        %v368 = vld [vmem:[%s321] sm:$0xff]
        %v369 = vld [vmem:[%s321 + $0x8] sm:$0xff]
        %s370 = sadd.s32 0, 16
        %s371 = scalar_lea.vmem %s321, %s370 [#allocation6]
        %v372 = vld [vmem:[%s371] sm:$0xff]
        %v373 = vld [vmem:[%s371 + $0x8] sm:$0xff]
        %s374 = sadd.s32 0, 48
        %s375 = scalar_lea.vmem %s321, %s374 [#allocation6]
        %v376 = vld [vmem:[%s375] sm:$0xff]
        %v377 = vld [vmem:[%s375 + $0x8] sm:$0xff]
        %s378 = sadd.s32 0, 64
        %s379 = scalar_lea.vmem %s321, %s378 [#allocation6]
        %v380 = vld [vmem:[%s379] sm:$0xff]
        %v381 = vld [vmem:[%s379 + $0x8] sm:$0xff]
        %s382 = sadd.s32 0, 80
        %s383 = scalar_lea.vmem %s321, %s382 [#allocation6]
        %v384 = vld [vmem:[%s383] sm:$0xff]
        %v385 = vld [vmem:[%s383 + $0x8] sm:$0xff]
        %s386 = scalar_lea.vmem %s356, %s382 [#allocation8]
        %387 = vst [vmem:[%s386] sm:$0xff] %v384
        %388 = vst [vmem:[%s386 + $0x8] sm:$0xff] %v385
        %s389 = sadd.s32 0, 32
        %s390 = scalar_lea.vmem %s321, %s389 [#allocation6]
        %v391 = vld [vmem:[%s390] sm:$0xff]
        %v392 = vld [vmem:[%s390 + $0x8] sm:$0xff]
        %v393 = vsub.f32 %v391, 0.8
        %v394 = vsub.f32 %v392, 0.8
        %s395 = scalar_lea.vmem %s356, %s389 [#allocation8]
        %396 = vst [vmem:[%s395] sm:$0xff] %v393
        %397 = vst [vmem:[%s395 + $0x8] sm:$0xff] %v394
        %v398 = vrcp.pop %v384
        %v399 = vrcp.pop %v385
        %v400 = vmul.f32 %v398, 0.0136
        %v401 = vmul.f32 %v399, 0.0136
        %v402 = vand.u32 2147483647, %v376
        %vm403 = vcmp.le.f32.partialorder %v402, 0.7853982
        %vm404 = vcmp.lt.s32.totalorder %v376, 0
        %v405 = vand.u32 %v376, 2139095040
        %v406 = vshrl.u32 %v405, 23
        %v407 = vsub.s32 %v406, 127
        %v408 = vand.u32 2147483647, %v376
        %v409 = vand.u32 %v408, 8388607
        %v410 = vor.u32 %v409, 8388608
        %v411 = vsub.s32 0, %v410
        %v412 = vadd.s32 %v407, 1
        %vm413 = vcmp.gt.s32.totalorder %v412, 0
        %v414 = vsel %vm413, %v412, 0
        %v415 = vshrl.u32 %v414, 5
        %v416 = vand.u32 %v414, 31
        %v417 = vsub.s32 32, %v416
        %v418 = vshrl.u32 683565275, %v417
        %v419 = vshll.u32 683565275, %v416
        %v420 = vshrl.u32 2475754826, %v417
        %v421 = vor.u32 %v419, %v420
        %v422 = vshll.u32 2475754826, %v416
        %v423 = vshrl.u32 2131351028, %v417
        %v424 = vor.u32 %v422, %v423
        %v425 = vshll.u32 2131351028, %v416
        %v426 = vshrl.u32 2102212464, %v417
        %v427 = vor.u32 %v425, %v426
        %v428 = vshll.u32 2102212464, %v416
        %v429 = vshrl.u32 920167782, %v417
        %v430 = vor.u32 %v428, %v429
        %v431 = vshll.u32 920167782, %v416
        %v432 = vshrl.u32 1326507024, %v417
        %v433 = vor.u32 %v431, %v432
        %vm434 = vcmp.lt.s32.totalorder %v415, 1
        %vm435 = vcmp.lt.s32.totalorder %v415, 2
        %vm436 = vcmp.lt.s32.totalorder %v415, 3
        %vm437 = vcmp.lt.s32.totalorder %v415, 4
        %v438 = vsel %vm434, %v418, %v421
        %v439 = vsel %vm437, %v427, 2102212464
        %v440 = vsel %vm436, %v424, %v439
        %v441 = vsel %vm435, %v438, %v440
        %v442 = vsel %vm434, %v421, %v424
        %v443 = vsel %vm437, %v430, 920167782
        %v444 = vsel %vm436, %v427, %v443
        %v445 = vsel %vm435, %v442, %v444
        %v446 = vsel %vm434, %v424, %v427
        %v447 = vsel %vm437, %v433, 1326507024
        %v448 = vsel %vm436, %v430, %v447
        %v449 = vsel %vm435, %v446, %v448
        %v450 = vshll.u32 %v410, 8
        %v451 = vand.u32 %v450, 65535
        %v452 = vshrl.u32 %v450, 16
        %v453 = vand.u32 %v449, 65535
        %v454 = vshrl.u32 %v449, 16
        %v455 = vmul.u32 %v451, %v453
        %v456 = vmul.u32 %v451, %v454
        %v457 = vmul.u32 %v452, %v453
        %v458 = vmul.u32 %v452, %v454
        %v459 = vshll.u32 %v456, 16
        %v460 = vshrl.u32 %v456, 16
        %v461 = vshll.u32 %v457, 16
        %v462 = vshrl.u32 %v457, 16
        %vm463 = vc.u32 %v455, %v459
        %v464 = vsel %vm463, 1, 0
        %v465 = vadd.s32 %v455, %v459
        %v466 = vadd.s32 %v458, %v464
        %vm467 = vc.u32 %v465, %v461
        %v468 = vsel %vm467, 1, 0
        %v469 = vadd.s32 %v465, %v461
        %v470 = vadd.s32 %v466, %v468
        %v471 = vadd.s32 %v470, %v460
        %v472 = vadd.s32 %v471, %v462
        %v473 = vand.u32 %v450, 65535
        %v474 = vshrl.u32 %v450, 16
        %v475 = vand.u32 %v445, 65535
        %v476 = vshrl.u32 %v445, 16
        %v477 = vmul.u32 %v473, %v475
        %v478 = vmul.u32 %v473, %v476
        %v479 = vmul.u32 %v474, %v475
        %v480 = vmul.u32 %v474, %v476
        %v481 = vshll.u32 %v478, 16
        %v482 = vshrl.u32 %v478, 16
        %v483 = vshll.u32 %v479, 16
        %v484 = vshrl.u32 %v479, 16
        %vm485 = vc.u32 %v477, %v481
        %v486 = vsel %vm485, 1, 0
        %v487 = vadd.s32 %v477, %v481
        %v488 = vadd.s32 %v480, %v486
        %vm489 = vc.u32 %v487, %v483
        %v490 = vsel %vm489, 1, 0
        %v491 = vadd.s32 %v487, %v483
        %v492 = vadd.s32 %v488, %v490
        %v493 = vadd.s32 %v492, %v482
        %v494 = vadd.s32 %v493, %v484
        %v495 = vmul.u32 %v450, %v441
        %v496 = vadd.s32 %v472, %v491
        %vm497 = vc.u32 %v472, %v491
        %v498 = vadd.s32 %v494, 1
        %v499 = vsel %vm497, %v498, %v494
        %v500 = vadd.s32 %v495, %v499
        %v501 = vadd.s32 %v500, 536870912
        %v502 = vshrl.u32 %v501, 30
        %v503 = vshll.u32 %v502, 30
        %v504 = vsub.s32 %v500, %v503
        %vm505 = vcmp.lt.s32.totalorder %v504, 0
        %v506 = vsub.s32 0, %v504
        %v507 = vsel %vm505, %v506, %v504
        %v508 = vclz %v507
        %v509 = vsub.s32 %v508, 2
        %vm510 = vcmp.gt.s32.totalorder 0, %v509
        %v511 = vsel %vm510, 0, %v509
        %v512 = vsub.s32 32, %v511
        %v513 = vshll.u32 %v504, %v511
        %v514 = vshrl.u32 %v496, %v512
        %v515 = vor.u32 %v513, %v514
        %v516 = vsub.s32 4294967266, %v511
        %v517 = vadd.s32 %v516, 127
        %v518 = vshll.u32 %v517, 23
        %v519 = vor.u32 4788187, %v518
        %v520 = vand.u32 2147483647, %v519
        %v522 = vcvt.s32.f32 %v515
        %v523 = vmul.f32 %v522, %v520
        %v524 = vxor.u32 %v523, 2147483648
        %v525 = vsel %vm404, %v524, %v523
        %v526 = vsub.s32 4, %v502
        %v527 = vsel %vm404, %v526, %v502
        %v528 = vsel %vm403, %v376, %v525
        %v529 = vsel %vm403, 0, %v527
        %v530 = vmul.f32 %v528, %v528
        %v531 = vmul.f32 %v530, -0.001358992
        %v532 = vadd.f32 %v531, 0.041655596
        %v533 = vmul.f32 %v530, %v532
        %v534 = vadd.f32 %v533, -0.4999988
        %v535 = vmul.f32 %v530, %v534
        %v536 = vadd.f32 1.0, %v535
        %v537 = vmul.f32 %v528, %v528
        %v538 = vmul.f32 %v537, -0.00019511016
        %v539 = vadd.f32 %v538, 0.008332121
        %v540 = vmul.f32 %v537, %v539
        %v541 = vadd.f32 %v540, -0.16666654
        %v542 = vmul.f32 %v537, %v541
        %v543 = vadd.f32 %v542, 1.0
        %v544 = vmul.f32 %v543, %v528
        %vm545 = vweird.f32 %v376
        %v546 = vadd.s32 %v529, 3
        %v547 = vand.u32 %v546, 3
        %vm548 = vcmp.lt.s32.totalorder %v547, 2
        %vm549 = vcmp.eq.s32.totalorder %v547, 0
        %v550 = vxor.u32 %v544, 2147483648
        %v551 = vsel %vm549, %v536, %v550
        %vm552 = vcmp.eq.s32.totalorder %v547, 2
        %v553 = vxor.u32 %v536, 2147483648
        %v554 = vsel %vm552, %v553, %v544
        %v555 = vsel %vm548, %v551, %v554
        %v556 = vsel %vm545, nan, %v555
        %v557 = vand.u32 2147483647, %v377
        %vm558 = vcmp.le.f32.partialorder %v557, 0.7853982
        %vm559 = vcmp.lt.s32.totalorder %v377, 0
        %v560 = vand.u32 %v377, 2139095040
        %v561 = vshrl.u32 %v560, 23
        %v562 = vsub.s32 %v561, 127
        %v563 = vand.u32 2147483647, %v377
        %v564 = vand.u32 %v563, 8388607
        %v565 = vor.u32 %v564, 8388608
        %v566 = vsub.s32 0, %v565
        %v567 = vadd.s32 %v562, 1
        %vm568 = vcmp.gt.s32.totalorder %v567, 0
        %v569 = vsel %vm568, %v567, 0
        %v570 = vshrl.u32 %v569, 5
        %v571 = vand.u32 %v569, 31
        %v572 = vsub.s32 32, %v571
        %v573 = vshrl.u32 683565275, %v572
        %v574 = vshll.u32 683565275, %v571
        %v575 = vshrl.u32 2475754826, %v572
        %v576 = vor.u32 %v574, %v575
        %v577 = vshll.u32 2475754826, %v571
        %v578 = vshrl.u32 2131351028, %v572
        %v579 = vor.u32 %v577, %v578
        %v580 = vshll.u32 2131351028, %v571
        %v581 = vshrl.u32 2102212464, %v572
        %v582 = vor.u32 %v580, %v581
        %v583 = vshll.u32 2102212464, %v571
        %v584 = vshrl.u32 920167782, %v572
        %v585 = vor.u32 %v583, %v584
        %v586 = vshll.u32 920167782, %v571
        %v587 = vshrl.u32 1326507024, %v572
        %v588 = vor.u32 %v586, %v587
        %vm589 = vcmp.lt.s32.totalorder %v570, 1
        %vm590 = vcmp.lt.s32.totalorder %v570, 2
        %vm591 = vcmp.lt.s32.totalorder %v570, 3
        %vm592 = vcmp.lt.s32.totalorder %v570, 4
        %v593 = vsel %vm589, %v573, %v576
        %v594 = vsel %vm592, %v582, 2102212464
        %v595 = vsel %vm591, %v579, %v594
        %v596 = vsel %vm590, %v593, %v595
        %v597 = vsel %vm589, %v576, %v579
        %v598 = vsel %vm592, %v585, 920167782
        %v599 = vsel %vm591, %v582, %v598
        %v600 = vsel %vm590, %v597, %v599
        %v601 = vsel %vm589, %v579, %v582
        %v602 = vsel %vm592, %v588, 1326507024
        %v603 = vsel %vm591, %v585, %v602
        %v604 = vsel %vm590, %v601, %v603
        %v605 = vshll.u32 %v565, 8
        %v606 = vand.u32 %v605, 65535
        %v607 = vshrl.u32 %v605, 16
        %v608 = vand.u32 %v604, 65535
        %v609 = vshrl.u32 %v604, 16
        %v610 = vmul.u32 %v606, %v608
        %v611 = vmul.u32 %v606, %v609
        %v612 = vmul.u32 %v607, %v608
        %v613 = vmul.u32 %v607, %v609
        %v614 = vshll.u32 %v611, 16
        %v615 = vshrl.u32 %v611, 16
        %v616 = vshll.u32 %v612, 16
        %v617 = vshrl.u32 %v612, 16
        %vm618 = vc.u32 %v610, %v614
        %v619 = vsel %vm618, 1, 0
        %v620 = vadd.s32 %v610, %v614
        %v621 = vadd.s32 %v613, %v619
        %vm622 = vc.u32 %v620, %v616
        %v623 = vsel %vm622, 1, 0
        %v624 = vadd.s32 %v620, %v616
        %v625 = vadd.s32 %v621, %v623
        %v626 = vadd.s32 %v625, %v615
        %v627 = vadd.s32 %v626, %v617
        %v628 = vand.u32 %v605, 65535
        %v629 = vshrl.u32 %v605, 16
        %v630 = vand.u32 %v600, 65535
        %v631 = vshrl.u32 %v600, 16
        %v632 = vmul.u32 %v628, %v630
        %v633 = vmul.u32 %v628, %v631
        %v634 = vmul.u32 %v629, %v630
        %v635 = vmul.u32 %v629, %v631
        %v636 = vshll.u32 %v633, 16
        %v637 = vshrl.u32 %v633, 16
        %v638 = vshll.u32 %v634, 16
        %v639 = vshrl.u32 %v634, 16
        %vm640 = vc.u32 %v632, %v636
        %v641 = vsel %vm640, 1, 0
        %v642 = vadd.s32 %v632, %v636
        %v643 = vadd.s32 %v635, %v641
        %vm644 = vc.u32 %v642, %v638
        %v645 = vsel %vm644, 1, 0
        %v646 = vadd.s32 %v642, %v638
        %v647 = vadd.s32 %v643, %v645
        %v648 = vadd.s32 %v647, %v637
        %v649 = vadd.s32 %v648, %v639
        %v650 = vmul.u32 %v605, %v596
        %v651 = vadd.s32 %v627, %v646
        %vm652 = vc.u32 %v627, %v646
        %v653 = vadd.s32 %v649, 1
        %v654 = vsel %vm652, %v653, %v649
        %v655 = vadd.s32 %v650, %v654
        %v656 = vadd.s32 %v655, 536870912
        %v657 = vshrl.u32 %v656, 30
        %v658 = vshll.u32 %v657, 30
        %v659 = vsub.s32 %v655, %v658
        %vm660 = vcmp.lt.s32.totalorder %v659, 0
        %v661 = vsub.s32 0, %v659
        %v662 = vsel %vm660, %v661, %v659
        %v663 = vclz %v662
        %v664 = vsub.s32 %v663, 2
        %vm665 = vcmp.gt.s32.totalorder 0, %v664
        %v666 = vsel %vm665, 0, %v664
        %v667 = vsub.s32 32, %v666
        %v668 = vshll.u32 %v659, %v666
        %v669 = vshrl.u32 %v651, %v667
        %v670 = vor.u32 %v668, %v669
        %v671 = vsub.s32 4294967266, %v666
        %v672 = vadd.s32 %v671, 127
        %v673 = vshll.u32 %v672, 23
        %v674 = vor.u32 4788187, %v673
        %v675 = vand.u32 2147483647, %v674
        %v677 = vcvt.s32.f32 %v670
        %v678 = vmul.f32 %v677, %v675
        %v679 = vxor.u32 %v678, 2147483648
        %v680 = vsel %vm559, %v679, %v678
        %v681 = vsub.s32 4, %v657
        %v682 = vsel %vm559, %v681, %v657
        %v683 = vsel %vm558, %v377, %v680
        %v684 = vsel %vm558, 0, %v682
        %v685 = vmul.f32 %v683, %v683
        %v686 = vmul.f32 %v685, -0.001358992
        %v687 = vadd.f32 %v686, 0.041655596
        %v688 = vmul.f32 %v685, %v687
        %v689 = vadd.f32 %v688, -0.4999988
        %v690 = vmul.f32 %v685, %v689
        %v691 = vadd.f32 1.0, %v690
        %v692 = vmul.f32 %v683, %v683
        %v693 = vmul.f32 %v692, -0.00019511016
        %v694 = vadd.f32 %v693, 0.008332121
        %v695 = vmul.f32 %v692, %v694
        %v696 = vadd.f32 %v695, -0.16666654
        %v697 = vmul.f32 %v692, %v696
        %v698 = vadd.f32 %v697, 1.0
        %v699 = vmul.f32 %v698, %v683
        %vm700 = vweird.f32 %v377
        %v701 = vadd.s32 %v684, 3
        %v702 = vand.u32 %v701, 3
        %vm703 = vcmp.lt.s32.totalorder %v702, 2
        %vm704 = vcmp.eq.s32.totalorder %v702, 0
        %v705 = vxor.u32 %v699, 2147483648
        %v706 = vsel %vm704, %v691, %v705
        %vm707 = vcmp.eq.s32.totalorder %v702, 2
        %v708 = vxor.u32 %v691, 2147483648
        %v709 = vsel %vm707, %v708, %v699
        %v710 = vsel %vm703, %v706, %v709
        %v711 = vsel %vm700, nan, %v710
        %v712 = vand.u32 2147483647, %v376
        %vm713 = vcmp.le.f32.partialorder %v712, 0.7853982
        %vm714 = vcmp.lt.s32.totalorder %v376, 0
        %v715 = vand.u32 %v376, 2139095040
        %v716 = vshrl.u32 %v715, 23
        %v717 = vsub.s32 %v716, 127
        %v718 = vand.u32 2147483647, %v376
        %v719 = vand.u32 %v718, 8388607
        %v720 = vor.u32 %v719, 8388608
        %v721 = vsub.s32 0, %v720
        %v722 = vadd.s32 %v717, 1
        %vm723 = vcmp.gt.s32.totalorder %v722, 0
        %v724 = vsel %vm723, %v722, 0
        %v725 = vshrl.u32 %v724, 5
        %v726 = vand.u32 %v724, 31
        %v727 = vsub.s32 32, %v726
        %v728 = vshrl.u32 683565275, %v727
        %v729 = vshll.u32 683565275, %v726
        %v730 = vshrl.u32 2475754826, %v727
        %v731 = vor.u32 %v729, %v730
        %v732 = vshll.u32 2475754826, %v726
        %v733 = vshrl.u32 2131351028, %v727
        %v734 = vor.u32 %v732, %v733
        %v735 = vshll.u32 2131351028, %v726
        %v736 = vshrl.u32 2102212464, %v727
        %v737 = vor.u32 %v735, %v736
        %v738 = vshll.u32 2102212464, %v726
        %v739 = vshrl.u32 920167782, %v727
        %v740 = vor.u32 %v738, %v739
        %v741 = vshll.u32 920167782, %v726
        %v742 = vshrl.u32 1326507024, %v727
        %v743 = vor.u32 %v741, %v742
        %vm744 = vcmp.lt.s32.totalorder %v725, 1
        %vm745 = vcmp.lt.s32.totalorder %v725, 2
        %vm746 = vcmp.lt.s32.totalorder %v725, 3
        %vm747 = vcmp.lt.s32.totalorder %v725, 4
        %v748 = vsel %vm744, %v728, %v731
        %v749 = vsel %vm747, %v737, 2102212464
        %v750 = vsel %vm746, %v734, %v749
        %v751 = vsel %vm745, %v748, %v750
        %v752 = vsel %vm744, %v731, %v734
        %v753 = vsel %vm747, %v740, 920167782
        %v754 = vsel %vm746, %v737, %v753
        %v755 = vsel %vm745, %v752, %v754
        %v756 = vsel %vm744, %v734, %v737
        %v757 = vsel %vm747, %v743, 1326507024
        %v758 = vsel %vm746, %v740, %v757
        %v759 = vsel %vm745, %v756, %v758
        %v760 = vshll.u32 %v720, 8
        %v761 = vand.u32 %v760, 65535
        %v762 = vshrl.u32 %v760, 16
        %v763 = vand.u32 %v759, 65535
        %v764 = vshrl.u32 %v759, 16
        %v765 = vmul.u32 %v761, %v763
        %v766 = vmul.u32 %v761, %v764
        %v767 = vmul.u32 %v762, %v763
        %v768 = vmul.u32 %v762, %v764
        %v769 = vshll.u32 %v766, 16
        %v770 = vshrl.u32 %v766, 16
        %v771 = vshll.u32 %v767, 16
        %v772 = vshrl.u32 %v767, 16
        %vm773 = vc.u32 %v765, %v769
        %v774 = vsel %vm773, 1, 0
        %v775 = vadd.s32 %v765, %v769
        %v776 = vadd.s32 %v768, %v774
        %vm777 = vc.u32 %v775, %v771
        %v778 = vsel %vm777, 1, 0
        %v779 = vadd.s32 %v775, %v771
        %v780 = vadd.s32 %v776, %v778
        %v781 = vadd.s32 %v780, %v770
        %v782 = vadd.s32 %v781, %v772
        %v783 = vand.u32 %v760, 65535
        %v784 = vshrl.u32 %v760, 16
        %v785 = vand.u32 %v755, 65535
        %v786 = vshrl.u32 %v755, 16
        %v787 = vmul.u32 %v783, %v785
        %v788 = vmul.u32 %v783, %v786
        %v789 = vmul.u32 %v784, %v785
        %v790 = vmul.u32 %v784, %v786
        %v791 = vshll.u32 %v788, 16
        %v792 = vshrl.u32 %v788, 16
        %v793 = vshll.u32 %v789, 16
        %v794 = vshrl.u32 %v789, 16
        %vm795 = vc.u32 %v787, %v791
        %v796 = vsel %vm795, 1, 0
        %v797 = vadd.s32 %v787, %v791
        %v798 = vadd.s32 %v790, %v796
        %vm799 = vc.u32 %v797, %v793
        %v800 = vsel %vm799, 1, 0
        %v801 = vadd.s32 %v797, %v793
        %v802 = vadd.s32 %v798, %v800
        %v803 = vadd.s32 %v802, %v792
        %v804 = vadd.s32 %v803, %v794
        %v805 = vmul.u32 %v760, %v751
        %v806 = vadd.s32 %v782, %v801
        %vm807 = vc.u32 %v782, %v801
        %v808 = vadd.s32 %v804, 1
        %v809 = vsel %vm807, %v808, %v804
        %v810 = vadd.s32 %v805, %v809
        %v811 = vadd.s32 %v810, 536870912
        %v812 = vshrl.u32 %v811, 30
        %v813 = vshll.u32 %v812, 30
        %v814 = vsub.s32 %v810, %v813
        %vm815 = vcmp.lt.s32.totalorder %v814, 0
        %v816 = vsub.s32 0, %v814
        %v817 = vsel %vm815, %v816, %v814
        %v818 = vclz %v817
        %v819 = vsub.s32 %v818, 2
        %vm820 = vcmp.gt.s32.totalorder 0, %v819
        %v821 = vsel %vm820, 0, %v819
        %v822 = vsub.s32 32, %v821
        %v823 = vshll.u32 %v814, %v821
        %v824 = vshrl.u32 %v806, %v822
        %v825 = vor.u32 %v823, %v824
        %v826 = vsub.s32 4294967266, %v821
        %v827 = vadd.s32 %v826, 127
        %v828 = vshll.u32 %v827, 23
        %v829 = vor.u32 4788187, %v828
        %v830 = vand.u32 2147483647, %v829
        %v832 = vcvt.s32.f32 %v825
        %v833 = vmul.f32 %v832, %v830
        %v834 = vxor.u32 %v833, 2147483648
        %v835 = vsel %vm714, %v834, %v833
        %v836 = vsub.s32 4, %v812
        %v837 = vsel %vm714, %v836, %v812
        %v838 = vsel %vm713, %v376, %v835
        %v839 = vsel %vm713, 0, %v837
        %v840 = vmul.f32 %v838, %v838
        %v841 = vmul.f32 %v840, -0.001358992
        %v842 = vadd.f32 %v841, 0.041655596
        %v843 = vmul.f32 %v840, %v842
        %v844 = vadd.f32 %v843, -0.4999988
        %v845 = vmul.f32 %v840, %v844
        %v846 = vadd.f32 1.0, %v845
        %v847 = vmul.f32 %v838, %v838
        %v848 = vmul.f32 %v847, -0.00019511016
        %v849 = vadd.f32 %v848, 0.008332121
        %v850 = vmul.f32 %v847, %v849
        %v851 = vadd.f32 %v850, -0.16666654
        %v852 = vmul.f32 %v847, %v851
        %v853 = vadd.f32 %v852, 1.0
        %v854 = vmul.f32 %v853, %v838
        %vm855 = vweird.f32 %v376
        %v856 = vand.u32 %v839, 3
        %vm857 = vcmp.lt.s32.totalorder %v856, 2
        %vm858 = vcmp.eq.s32.totalorder %v856, 0
        %v859 = vxor.u32 %v854, 2147483648
        %v860 = vsel %vm858, %v846, %v859
        %vm861 = vcmp.eq.s32.totalorder %v856, 2
        %v862 = vxor.u32 %v846, 2147483648
        %v863 = vsel %vm861, %v862, %v854
        %v864 = vsel %vm857, %v860, %v863
        %v865 = vsel %vm855, nan, %v864
        %v866 = vand.u32 2147483647, %v377
        %vm867 = vcmp.le.f32.partialorder %v866, 0.7853982
        %vm868 = vcmp.lt.s32.totalorder %v377, 0
        %v869 = vand.u32 %v377, 2139095040
        %v870 = vshrl.u32 %v869, 23
        %v871 = vsub.s32 %v870, 127
        %v872 = vand.u32 2147483647, %v377
        %v873 = vand.u32 %v872, 8388607
        %v874 = vor.u32 %v873, 8388608
        %v875 = vsub.s32 0, %v874
        %v876 = vadd.s32 %v871, 1
        %vm877 = vcmp.gt.s32.totalorder %v876, 0
        %v878 = vsel %vm877, %v876, 0
        %v879 = vshrl.u32 %v878, 5
        %v880 = vand.u32 %v878, 31
        %v881 = vsub.s32 32, %v880
        %v882 = vshrl.u32 683565275, %v881
        %v883 = vshll.u32 683565275, %v880
        %v884 = vshrl.u32 2475754826, %v881
        %v885 = vor.u32 %v883, %v884
        %v886 = vshll.u32 2475754826, %v880
        %v887 = vshrl.u32 2131351028, %v881
        %v888 = vor.u32 %v886, %v887
        %v889 = vshll.u32 2131351028, %v880
        %v890 = vshrl.u32 2102212464, %v881
        %v891 = vor.u32 %v889, %v890
        %v892 = vshll.u32 2102212464, %v880
        %v893 = vshrl.u32 920167782, %v881
        %v894 = vor.u32 %v892, %v893
        %v895 = vshll.u32 920167782, %v880
        %v896 = vshrl.u32 1326507024, %v881
        %v897 = vor.u32 %v895, %v896
        %vm898 = vcmp.lt.s32.totalorder %v879, 1
        %vm899 = vcmp.lt.s32.totalorder %v879, 2
        %vm900 = vcmp.lt.s32.totalorder %v879, 3
        %vm901 = vcmp.lt.s32.totalorder %v879, 4
        %v902 = vsel %vm898, %v882, %v885
        %v903 = vsel %vm901, %v891, 2102212464
        %v904 = vsel %vm900, %v888, %v903
        %v905 = vsel %vm899, %v902, %v904
        %v906 = vsel %vm898, %v885, %v888
        %v907 = vsel %vm901, %v894, 920167782
        %v908 = vsel %vm900, %v891, %v907
        %v909 = vsel %vm899, %v906, %v908
        %v910 = vsel %vm898, %v888, %v891
        %v911 = vsel %vm901, %v897, 1326507024
        %v912 = vsel %vm900, %v894, %v911
        %v913 = vsel %vm899, %v910, %v912
        %v914 = vshll.u32 %v874, 8
        %v915 = vand.u32 %v914, 65535
        %v916 = vshrl.u32 %v914, 16
        %v917 = vand.u32 %v913, 65535
        %v918 = vshrl.u32 %v913, 16
        %v919 = vmul.u32 %v915, %v917
        %v920 = vmul.u32 %v915, %v918
        %v921 = vmul.u32 %v916, %v917
        %v922 = vmul.u32 %v916, %v918
        %v923 = vshll.u32 %v920, 16
        %v924 = vshrl.u32 %v920, 16
        %v925 = vshll.u32 %v921, 16
        %v926 = vshrl.u32 %v921, 16
        %vm927 = vc.u32 %v919, %v923
        %v928 = vsel %vm927, 1, 0
        %v929 = vadd.s32 %v919, %v923
        %v930 = vadd.s32 %v922, %v928
        %vm931 = vc.u32 %v929, %v925
        %v932 = vsel %vm931, 1, 0
        %v933 = vadd.s32 %v929, %v925
        %v934 = vadd.s32 %v930, %v932
        %v935 = vadd.s32 %v934, %v924
        %v936 = vadd.s32 %v935, %v926
        %v937 = vand.u32 %v914, 65535
        %v938 = vshrl.u32 %v914, 16
        %v939 = vand.u32 %v909, 65535
        %v940 = vshrl.u32 %v909, 16
        %v941 = vmul.u32 %v937, %v939
        %v942 = vmul.u32 %v937, %v940
        %v943 = vmul.u32 %v938, %v939
        %v944 = vmul.u32 %v938, %v940
        %v945 = vshll.u32 %v942, 16
        %v946 = vshrl.u32 %v942, 16
        %v947 = vshll.u32 %v943, 16
        %v948 = vshrl.u32 %v943, 16
        %vm949 = vc.u32 %v941, %v945
        %v950 = vsel %vm949, 1, 0
        %v951 = vadd.s32 %v941, %v945
        %v952 = vadd.s32 %v944, %v950
        %vm953 = vc.u32 %v951, %v947
        %v954 = vsel %vm953, 1, 0
        %v955 = vadd.s32 %v951, %v947
        %v956 = vadd.s32 %v952, %v954
        %v957 = vadd.s32 %v956, %v946
        %v958 = vadd.s32 %v957, %v948
        %v959 = vmul.u32 %v914, %v905
        %v960 = vadd.s32 %v936, %v955
        %vm961 = vc.u32 %v936, %v955
        %v962 = vadd.s32 %v958, 1
        %v963 = vsel %vm961, %v962, %v958
        %v964 = vadd.s32 %v959, %v963
        %v965 = vadd.s32 %v964, 536870912
        %v966 = vshrl.u32 %v965, 30
        %v967 = vshll.u32 %v966, 30
        %v968 = vsub.s32 %v964, %v967
        %vm969 = vcmp.lt.s32.totalorder %v968, 0
        %v970 = vsub.s32 0, %v968
        %v971 = vsel %vm969, %v970, %v968
        %v972 = vclz %v971
        %v973 = vsub.s32 %v972, 2
        %vm974 = vcmp.gt.s32.totalorder 0, %v973
        %v975 = vsel %vm974, 0, %v973
        %v976 = vsub.s32 32, %v975
        %v977 = vshll.u32 %v968, %v975
        %v978 = vshrl.u32 %v960, %v976
        %v979 = vor.u32 %v977, %v978
        %v980 = vsub.s32 4294967266, %v975
        %v981 = vadd.s32 %v980, 127
        %v982 = vshll.u32 %v981, 23
        %v983 = vor.u32 4788187, %v982
        %v984 = vand.u32 2147483647, %v983
        %v986 = vcvt.s32.f32 %v979
        %v987 = vmul.f32 %v986, %v984
        %v988 = vxor.u32 %v987, 2147483648
        %v989 = vsel %vm868, %v988, %v987
        %v990 = vsub.s32 4, %v966
        %v991 = vsel %vm868, %v990, %v966
        %v992 = vsel %vm867, %v377, %v989
        %v993 = vsel %vm867, 0, %v991
        %v994 = vmul.f32 %v992, %v992
        %v995 = vmul.f32 %v994, -0.001358992
        %v996 = vadd.f32 %v995, 0.041655596
        %v997 = vmul.f32 %v994, %v996
        %v998 = vadd.f32 %v997, -0.4999988
        %v999 = vmul.f32 %v994, %v998
        %v1000 = vadd.f32 1.0, %v999
        %v1001 = vmul.f32 %v992, %v992
        %v1002 = vmul.f32 %v1001, -0.00019511016
        %v1003 = vadd.f32 %v1002, 0.008332121
        %v1004 = vmul.f32 %v1001, %v1003
        %v1005 = vadd.f32 %v1004, -0.16666654
        %v1006 = vmul.f32 %v1001, %v1005
        %v1007 = vadd.f32 %v1006, 1.0
        %v1008 = vmul.f32 %v1007, %v992
        %vm1009 = vweird.f32 %v377
        %v1010 = vand.u32 %v993, 3
        %vm1011 = vcmp.lt.s32.totalorder %v1010, 2
        %vm1012 = vcmp.eq.s32.totalorder %v1010, 0
        %v1013 = vxor.u32 %v1008, 2147483648
        %v1014 = vsel %vm1012, %v1000, %v1013
        %vm1015 = vcmp.eq.s32.totalorder %v1010, 2
        %v1016 = vxor.u32 %v1000, 2147483648
        %v1017 = vsel %vm1015, %v1016, %v1008
        %v1018 = vsel %vm1011, %v1014, %v1017
        %v1019 = vsel %vm1009, nan, %v1018
        %v1020 = vrcp.pop %v865
        %v1021 = vmul.f32 %v865, %v1020
        %v1022 = vsub.f32 1.0, %v1021
        %v1023 = vmul.f32 %v1020, %v1022
        %v1024 = vadd.f32 %v1020, %v1023
        %vm1025 = vweird.f32 %v865
        %vm1026 = vweird.f32 %v1020
        %vm1027 = vmor %vm1025, %vm1026
        %v1028 = vsel %vm1027, %v1020, %v1024
        %v1029 = vand.u32 2147483647, %v865
        %vm1030 = vcmp.eq.f32.partialorder %v1029, 8.507059e+37
        %v1031 = vand.u32 %v865, 2147483648
        %v1032 = vor.u32 1.1754944e-38, %v1031
        %v1033 = vsel %vm1030, %v1032, %v1028
        %v1034 = vmul.f32 %v556, %v1033
        %v1035 = vrcp.pop %v1019
        %v1036 = vmul.f32 %v1019, %v1035
        %v1037 = vsub.f32 1.0, %v1036
        %v1038 = vmul.f32 %v1035, %v1037
        %v1039 = vadd.f32 %v1035, %v1038
        %vm1040 = vweird.f32 %v1019
        %vm1041 = vweird.f32 %v1035
        %vm1042 = vmor %vm1040, %vm1041
        %v1043 = vsel %vm1042, %v1035, %v1039
        %v1044 = vand.u32 2147483647, %v1019
        %vm1045 = vcmp.eq.f32.partialorder %v1044, 8.507059e+37
        %v1046 = vand.u32 %v1019, 2147483648
        %v1047 = vor.u32 1.1754944e-38, %v1046
        %v1048 = vsel %vm1045, %v1047, %v1043
        %v1049 = vmul.f32 %v711, %v1048
        %v1050 = vand.u32 2147483647, %v380
        %vm1051 = vcmp.le.f32.partialorder %v1050, 0.7853982
        %vm1052 = vcmp.lt.s32.totalorder %v380, 0
        %v1053 = vand.u32 %v380, 2139095040
        %v1054 = vshrl.u32 %v1053, 23
        %v1055 = vsub.s32 %v1054, 127
        %v1056 = vand.u32 2147483647, %v380
        %v1057 = vand.u32 %v1056, 8388607
        %v1058 = vor.u32 %v1057, 8388608
        %v1059 = vsub.s32 0, %v1058
        %v1060 = vadd.s32 %v1055, 1
        %vm1061 = vcmp.gt.s32.totalorder %v1060, 0
        %v1062 = vsel %vm1061, %v1060, 0
        %v1063 = vshrl.u32 %v1062, 5
        %v1064 = vand.u32 %v1062, 31
        %v1065 = vsub.s32 32, %v1064
        %v1066 = vshrl.u32 683565275, %v1065
        %v1067 = vshll.u32 683565275, %v1064
        %v1068 = vshrl.u32 2475754826, %v1065
        %v1069 = vor.u32 %v1067, %v1068
        %v1070 = vshll.u32 2475754826, %v1064
        %v1071 = vshrl.u32 2131351028, %v1065
        %v1072 = vor.u32 %v1070, %v1071
        %v1073 = vshll.u32 2131351028, %v1064
        %v1074 = vshrl.u32 2102212464, %v1065
        %v1075 = vor.u32 %v1073, %v1074
        %v1076 = vshll.u32 2102212464, %v1064
        %v1077 = vshrl.u32 920167782, %v1065
        %v1078 = vor.u32 %v1076, %v1077
        %v1079 = vshll.u32 920167782, %v1064
        %v1080 = vshrl.u32 1326507024, %v1065
        %v1081 = vor.u32 %v1079, %v1080
        %vm1082 = vcmp.lt.s32.totalorder %v1063, 1
        %vm1083 = vcmp.lt.s32.totalorder %v1063, 2
        %vm1084 = vcmp.lt.s32.totalorder %v1063, 3
        %vm1085 = vcmp.lt.s32.totalorder %v1063, 4
        %v1086 = vsel %vm1082, %v1066, %v1069
        %v1087 = vsel %vm1085, %v1075, 2102212464
        %v1088 = vsel %vm1084, %v1072, %v1087
        %v1089 = vsel %vm1083, %v1086, %v1088
        %v1090 = vsel %vm1082, %v1069, %v1072
        %v1091 = vsel %vm1085, %v1078, 920167782
        %v1092 = vsel %vm1084, %v1075, %v1091
        %v1093 = vsel %vm1083, %v1090, %v1092
        %v1094 = vsel %vm1082, %v1072, %v1075
        %v1095 = vsel %vm1085, %v1081, 1326507024
        %v1096 = vsel %vm1084, %v1078, %v1095
        %v1097 = vsel %vm1083, %v1094, %v1096
        %v1098 = vshll.u32 %v1058, 8
        %v1099 = vand.u32 %v1098, 65535
        %v1100 = vshrl.u32 %v1098, 16
        %v1101 = vand.u32 %v1097, 65535
        %v1102 = vshrl.u32 %v1097, 16
        %v1103 = vmul.u32 %v1099, %v1101
        %v1104 = vmul.u32 %v1099, %v1102
        %v1105 = vmul.u32 %v1100, %v1101
        %v1106 = vmul.u32 %v1100, %v1102
        %v1107 = vshll.u32 %v1104, 16
        %v1108 = vshrl.u32 %v1104, 16
        %v1109 = vshll.u32 %v1105, 16
        %v1110 = vshrl.u32 %v1105, 16
        %vm1111 = vc.u32 %v1103, %v1107
        %v1112 = vsel %vm1111, 1, 0
        %v1113 = vadd.s32 %v1103, %v1107
        %v1114 = vadd.s32 %v1106, %v1112
        %vm1115 = vc.u32 %v1113, %v1109
        %v1116 = vsel %vm1115, 1, 0
        %v1117 = vadd.s32 %v1113, %v1109
        %v1118 = vadd.s32 %v1114, %v1116
        %v1119 = vadd.s32 %v1118, %v1108
        %v1120 = vadd.s32 %v1119, %v1110
        %v1121 = vand.u32 %v1098, 65535
        %v1122 = vshrl.u32 %v1098, 16
        %v1123 = vand.u32 %v1093, 65535
        %v1124 = vshrl.u32 %v1093, 16
        %v1125 = vmul.u32 %v1121, %v1123
        %v1126 = vmul.u32 %v1121, %v1124
        %v1127 = vmul.u32 %v1122, %v1123
        %v1128 = vmul.u32 %v1122, %v1124
        %v1129 = vshll.u32 %v1126, 16
        %v1130 = vshrl.u32 %v1126, 16
        %v1131 = vshll.u32 %v1127, 16
        %v1132 = vshrl.u32 %v1127, 16
        %vm1133 = vc.u32 %v1125, %v1129
        %v1134 = vsel %vm1133, 1, 0
        %v1135 = vadd.s32 %v1125, %v1129
        %v1136 = vadd.s32 %v1128, %v1134
        %vm1137 = vc.u32 %v1135, %v1131
        %v1138 = vsel %vm1137, 1, 0
        %v1139 = vadd.s32 %v1135, %v1131
        %v1140 = vadd.s32 %v1136, %v1138
        %v1141 = vadd.s32 %v1140, %v1130
        %v1142 = vadd.s32 %v1141, %v1132
        %v1143 = vmul.u32 %v1098, %v1089
        %v1144 = vadd.s32 %v1120, %v1139
        %vm1145 = vc.u32 %v1120, %v1139
        %v1146 = vadd.s32 %v1142, 1
        %v1147 = vsel %vm1145, %v1146, %v1142
        %v1148 = vadd.s32 %v1143, %v1147
        %v1149 = vadd.s32 %v1148, 536870912
        %v1150 = vshrl.u32 %v1149, 30
        %v1151 = vshll.u32 %v1150, 30
        %v1152 = vsub.s32 %v1148, %v1151
        %vm1153 = vcmp.lt.s32.totalorder %v1152, 0
        %v1154 = vsub.s32 0, %v1152
        %v1155 = vsel %vm1153, %v1154, %v1152
        %v1156 = vclz %v1155
        %v1157 = vsub.s32 %v1156, 2
        %vm1158 = vcmp.gt.s32.totalorder 0, %v1157
        %v1159 = vsel %vm1158, 0, %v1157
        %v1160 = vsub.s32 32, %v1159
        %v1161 = vshll.u32 %v1152, %v1159
        %v1162 = vshrl.u32 %v1144, %v1160
        %v1163 = vor.u32 %v1161, %v1162
        %v1164 = vsub.s32 4294967266, %v1159
        %v1165 = vadd.s32 %v1164, 127
        %v1166 = vshll.u32 %v1165, 23
        %v1167 = vor.u32 4788187, %v1166
        %v1168 = vand.u32 2147483647, %v1167
        %v1170 = vcvt.s32.f32 %v1163
        %v1171 = vmul.f32 %v1170, %v1168
        %v1172 = vxor.u32 %v1171, 2147483648
        %v1173 = vsel %vm1052, %v1172, %v1171
        %v1174 = vsub.s32 4, %v1150
        %v1175 = vsel %vm1052, %v1174, %v1150
        %v1176 = vsel %vm1051, %v380, %v1173
        %v1177 = vsel %vm1051, 0, %v1175
        %v1178 = vmul.f32 %v1176, %v1176
        %v1179 = vmul.f32 %v1178, -0.001358992
        %v1180 = vadd.f32 %v1179, 0.041655596
        %v1181 = vmul.f32 %v1178, %v1180
        %v1182 = vadd.f32 %v1181, -0.4999988
        %v1183 = vmul.f32 %v1178, %v1182
        %v1184 = vadd.f32 1.0, %v1183
        %v1185 = vmul.f32 %v1176, %v1176
        %v1186 = vmul.f32 %v1185, -0.00019511016
        %v1187 = vadd.f32 %v1186, 0.008332121
        %v1188 = vmul.f32 %v1185, %v1187
        %v1189 = vadd.f32 %v1188, -0.16666654
        %v1190 = vmul.f32 %v1185, %v1189
        %v1191 = vadd.f32 %v1190, 1.0
        %v1192 = vmul.f32 %v1191, %v1176
        %vm1193 = vweird.f32 %v380
        %v1194 = vadd.s32 %v1177, 3
        %v1195 = vand.u32 %v1194, 3
        %vm1196 = vcmp.lt.s32.totalorder %v1195, 2
        %vm1197 = vcmp.eq.s32.totalorder %v1195, 0
        %v1198 = vxor.u32 %v1192, 2147483648
        %v1199 = vsel %vm1197, %v1184, %v1198
        %vm1200 = vcmp.eq.s32.totalorder %v1195, 2
        %v1201 = vxor.u32 %v1184, 2147483648
        %v1202 = vsel %vm1200, %v1201, %v1192
        %v1203 = vsel %vm1196, %v1199, %v1202
        %v1204 = vsel %vm1193, nan, %v1203
        %v1205 = vand.u32 2147483647, %v381
        %vm1206 = vcmp.le.f32.partialorder %v1205, 0.7853982
        %vm1207 = vcmp.lt.s32.totalorder %v381, 0
        %v1208 = vand.u32 %v381, 2139095040
        %v1209 = vshrl.u32 %v1208, 23
        %v1210 = vsub.s32 %v1209, 127
        %v1211 = vand.u32 2147483647, %v381
        %v1212 = vand.u32 %v1211, 8388607
        %v1213 = vor.u32 %v1212, 8388608
        %v1214 = vsub.s32 0, %v1213
        %v1215 = vadd.s32 %v1210, 1
        %vm1216 = vcmp.gt.s32.totalorder %v1215, 0
        %v1217 = vsel %vm1216, %v1215, 0
        %v1218 = vshrl.u32 %v1217, 5
        %v1219 = vand.u32 %v1217, 31
        %v1220 = vsub.s32 32, %v1219
        %v1221 = vshrl.u32 683565275, %v1220
        %v1222 = vshll.u32 683565275, %v1219
        %v1223 = vshrl.u32 2475754826, %v1220
        %v1224 = vor.u32 %v1222, %v1223
        %v1225 = vshll.u32 2475754826, %v1219
        %v1226 = vshrl.u32 2131351028, %v1220
        %v1227 = vor.u32 %v1225, %v1226
        %v1228 = vshll.u32 2131351028, %v1219
        %v1229 = vshrl.u32 2102212464, %v1220
        %v1230 = vor.u32 %v1228, %v1229
        %v1231 = vshll.u32 2102212464, %v1219
        %v1232 = vshrl.u32 920167782, %v1220
        %v1233 = vor.u32 %v1231, %v1232
        %v1234 = vshll.u32 920167782, %v1219
        %v1235 = vshrl.u32 1326507024, %v1220
        %v1236 = vor.u32 %v1234, %v1235
        %vm1237 = vcmp.lt.s32.totalorder %v1218, 1
        %vm1238 = vcmp.lt.s32.totalorder %v1218, 2
        %vm1239 = vcmp.lt.s32.totalorder %v1218, 3
        %vm1240 = vcmp.lt.s32.totalorder %v1218, 4
        %v1241 = vsel %vm1237, %v1221, %v1224
        %v1242 = vsel %vm1240, %v1230, 2102212464
        %v1243 = vsel %vm1239, %v1227, %v1242
        %v1244 = vsel %vm1238, %v1241, %v1243
        %v1245 = vsel %vm1237, %v1224, %v1227
        %v1246 = vsel %vm1240, %v1233, 920167782
        %v1247 = vsel %vm1239, %v1230, %v1246
        %v1248 = vsel %vm1238, %v1245, %v1247
        %v1249 = vsel %vm1237, %v1227, %v1230
        %v1250 = vsel %vm1240, %v1236, 1326507024
        %v1251 = vsel %vm1239, %v1233, %v1250
        %v1252 = vsel %vm1238, %v1249, %v1251
        %v1253 = vshll.u32 %v1213, 8
        %v1254 = vand.u32 %v1253, 65535
        %v1255 = vshrl.u32 %v1253, 16
        %v1256 = vand.u32 %v1252, 65535
        %v1257 = vshrl.u32 %v1252, 16
        %v1258 = vmul.u32 %v1254, %v1256
        %v1259 = vmul.u32 %v1254, %v1257
        %v1260 = vmul.u32 %v1255, %v1256
        %v1261 = vmul.u32 %v1255, %v1257
        %v1262 = vshll.u32 %v1259, 16
        %v1263 = vshrl.u32 %v1259, 16
        %v1264 = vshll.u32 %v1260, 16
        %v1265 = vshrl.u32 %v1260, 16
        %vm1266 = vc.u32 %v1258, %v1262
        %v1267 = vsel %vm1266, 1, 0
        %v1268 = vadd.s32 %v1258, %v1262
        %v1269 = vadd.s32 %v1261, %v1267
        %vm1270 = vc.u32 %v1268, %v1264
        %v1271 = vsel %vm1270, 1, 0
        %v1272 = vadd.s32 %v1268, %v1264
        %v1273 = vadd.s32 %v1269, %v1271
        %v1274 = vadd.s32 %v1273, %v1263
        %v1275 = vadd.s32 %v1274, %v1265
        %v1276 = vand.u32 %v1253, 65535
        %v1277 = vshrl.u32 %v1253, 16
        %v1278 = vand.u32 %v1248, 65535
        %v1279 = vshrl.u32 %v1248, 16
        %v1280 = vmul.u32 %v1276, %v1278
        %v1281 = vmul.u32 %v1276, %v1279
        %v1282 = vmul.u32 %v1277, %v1278
        %v1283 = vmul.u32 %v1277, %v1279
        %v1284 = vshll.u32 %v1281, 16
        %v1285 = vshrl.u32 %v1281, 16
        %v1286 = vshll.u32 %v1282, 16
        %v1287 = vshrl.u32 %v1282, 16
        %vm1288 = vc.u32 %v1280, %v1284
        %v1289 = vsel %vm1288, 1, 0
        %v1290 = vadd.s32 %v1280, %v1284
        %v1291 = vadd.s32 %v1283, %v1289
        %vm1292 = vc.u32 %v1290, %v1286
        %v1293 = vsel %vm1292, 1, 0
        %v1294 = vadd.s32 %v1290, %v1286
        %v1295 = vadd.s32 %v1291, %v1293
        %v1296 = vadd.s32 %v1295, %v1285
        %v1297 = vadd.s32 %v1296, %v1287
        %v1298 = vmul.u32 %v1253, %v1244
        %v1299 = vadd.s32 %v1275, %v1294
        %vm1300 = vc.u32 %v1275, %v1294
        %v1301 = vadd.s32 %v1297, 1
        %v1302 = vsel %vm1300, %v1301, %v1297
        %v1303 = vadd.s32 %v1298, %v1302
        %v1304 = vadd.s32 %v1303, 536870912
        %v1305 = vshrl.u32 %v1304, 30
        %v1306 = vshll.u32 %v1305, 30
        %v1307 = vsub.s32 %v1303, %v1306
        %vm1308 = vcmp.lt.s32.totalorder %v1307, 0
        %v1309 = vsub.s32 0, %v1307
        %v1310 = vsel %vm1308, %v1309, %v1307
        %v1311 = vclz %v1310
        %v1312 = vsub.s32 %v1311, 2
        %vm1313 = vcmp.gt.s32.totalorder 0, %v1312
        %v1314 = vsel %vm1313, 0, %v1312
        %v1315 = vsub.s32 32, %v1314
        %v1316 = vshll.u32 %v1307, %v1314
        %v1317 = vshrl.u32 %v1299, %v1315
        %v1318 = vor.u32 %v1316, %v1317
        %v1319 = vsub.s32 4294967266, %v1314
        %v1320 = vadd.s32 %v1319, 127
        %v1321 = vshll.u32 %v1320, 23
        %v1322 = vor.u32 4788187, %v1321
        %v1323 = vand.u32 2147483647, %v1322
        %v1325 = vcvt.s32.f32 %v1318
        %v1326 = vmul.f32 %v1325, %v1323
        %v1327 = vxor.u32 %v1326, 2147483648
        %v1328 = vsel %vm1207, %v1327, %v1326
        %v1329 = vsub.s32 4, %v1305
        %v1330 = vsel %vm1207, %v1329, %v1305
        %v1331 = vsel %vm1206, %v381, %v1328
        %v1332 = vsel %vm1206, 0, %v1330
        %v1333 = vmul.f32 %v1331, %v1331
        %v1334 = vmul.f32 %v1333, -0.001358992
        %v1335 = vadd.f32 %v1334, 0.041655596
        %v1336 = vmul.f32 %v1333, %v1335
        %v1337 = vadd.f32 %v1336, -0.4999988
        %v1338 = vmul.f32 %v1333, %v1337
        %v1339 = vadd.f32 1.0, %v1338
        %v1340 = vmul.f32 %v1331, %v1331
        %v1341 = vmul.f32 %v1340, -0.00019511016
        %v1342 = vadd.f32 %v1341, 0.008332121
        %v1343 = vmul.f32 %v1340, %v1342
        %v1344 = vadd.f32 %v1343, -0.16666654
        %v1345 = vmul.f32 %v1340, %v1344
        %v1346 = vadd.f32 %v1345, 1.0
        %v1347 = vmul.f32 %v1346, %v1331
        %vm1348 = vweird.f32 %v381
        %v1349 = vadd.s32 %v1332, 3
        %v1350 = vand.u32 %v1349, 3
        %vm1351 = vcmp.lt.s32.totalorder %v1350, 2
        %vm1352 = vcmp.eq.s32.totalorder %v1350, 0
        %v1353 = vxor.u32 %v1347, 2147483648
        %v1354 = vsel %vm1352, %v1339, %v1353
        %vm1355 = vcmp.eq.s32.totalorder %v1350, 2
        %v1356 = vxor.u32 %v1339, 2147483648
        %v1357 = vsel %vm1355, %v1356, %v1347
        %v1358 = vsel %vm1351, %v1354, %v1357
        %v1359 = vsel %vm1348, nan, %v1358
        %v1360 = vand.u32 2147483647, %v380
        %vm1361 = vcmp.le.f32.partialorder %v1360, 0.7853982
        %vm1362 = vcmp.lt.s32.totalorder %v380, 0
        %v1363 = vand.u32 %v380, 2139095040
        %v1364 = vshrl.u32 %v1363, 23
        %v1365 = vsub.s32 %v1364, 127
        %v1366 = vand.u32 2147483647, %v380
        %v1367 = vand.u32 %v1366, 8388607
        %v1368 = vor.u32 %v1367, 8388608
        %v1369 = vsub.s32 0, %v1368
        %v1370 = vadd.s32 %v1365, 1
        %vm1371 = vcmp.gt.s32.totalorder %v1370, 0
        %v1372 = vsel %vm1371, %v1370, 0
        %v1373 = vshrl.u32 %v1372, 5
        %v1374 = vand.u32 %v1372, 31
        %v1375 = vsub.s32 32, %v1374
        %v1376 = vshrl.u32 683565275, %v1375
        %v1377 = vshll.u32 683565275, %v1374
        %v1378 = vshrl.u32 2475754826, %v1375
        %v1379 = vor.u32 %v1377, %v1378
        %v1380 = vshll.u32 2475754826, %v1374
        %v1381 = vshrl.u32 2131351028, %v1375
        %v1382 = vor.u32 %v1380, %v1381
        %v1383 = vshll.u32 2131351028, %v1374
        %v1384 = vshrl.u32 2102212464, %v1375
        %v1385 = vor.u32 %v1383, %v1384
        %v1386 = vshll.u32 2102212464, %v1374
        %v1387 = vshrl.u32 920167782, %v1375
        %v1388 = vor.u32 %v1386, %v1387
        %v1389 = vshll.u32 920167782, %v1374
        %v1390 = vshrl.u32 1326507024, %v1375
        %v1391 = vor.u32 %v1389, %v1390
        %vm1392 = vcmp.lt.s32.totalorder %v1373, 1
        %vm1393 = vcmp.lt.s32.totalorder %v1373, 2
        %vm1394 = vcmp.lt.s32.totalorder %v1373, 3
        %vm1395 = vcmp.lt.s32.totalorder %v1373, 4
        %v1396 = vsel %vm1392, %v1376, %v1379
        %v1397 = vsel %vm1395, %v1385, 2102212464
        %v1398 = vsel %vm1394, %v1382, %v1397
        %v1399 = vsel %vm1393, %v1396, %v1398
        %v1400 = vsel %vm1392, %v1379, %v1382
        %v1401 = vsel %vm1395, %v1388, 920167782
        %v1402 = vsel %vm1394, %v1385, %v1401
        %v1403 = vsel %vm1393, %v1400, %v1402
        %v1404 = vsel %vm1392, %v1382, %v1385
        %v1405 = vsel %vm1395, %v1391, 1326507024
        %v1406 = vsel %vm1394, %v1388, %v1405
        %v1407 = vsel %vm1393, %v1404, %v1406
        %v1408 = vshll.u32 %v1368, 8
        %v1409 = vand.u32 %v1408, 65535
        %v1410 = vshrl.u32 %v1408, 16
        %v1411 = vand.u32 %v1407, 65535
        %v1412 = vshrl.u32 %v1407, 16
        %v1413 = vmul.u32 %v1409, %v1411
        %v1414 = vmul.u32 %v1409, %v1412
        %v1415 = vmul.u32 %v1410, %v1411
        %v1416 = vmul.u32 %v1410, %v1412
        %v1417 = vshll.u32 %v1414, 16
        %v1418 = vshrl.u32 %v1414, 16
        %v1419 = vshll.u32 %v1415, 16
        %v1420 = vshrl.u32 %v1415, 16
        %vm1421 = vc.u32 %v1413, %v1417
        %v1422 = vsel %vm1421, 1, 0
        %v1423 = vadd.s32 %v1413, %v1417
        %v1424 = vadd.s32 %v1416, %v1422
        %vm1425 = vc.u32 %v1423, %v1419
        %v1426 = vsel %vm1425, 1, 0
        %v1427 = vadd.s32 %v1423, %v1419
        %v1428 = vadd.s32 %v1424, %v1426
        %v1429 = vadd.s32 %v1428, %v1418
        %v1430 = vadd.s32 %v1429, %v1420
        %v1431 = vand.u32 %v1408, 65535
        %v1432 = vshrl.u32 %v1408, 16
        %v1433 = vand.u32 %v1403, 65535
        %v1434 = vshrl.u32 %v1403, 16
        %v1435 = vmul.u32 %v1431, %v1433
        %v1436 = vmul.u32 %v1431, %v1434
        %v1437 = vmul.u32 %v1432, %v1433
        %v1438 = vmul.u32 %v1432, %v1434
        %v1439 = vshll.u32 %v1436, 16
        %v1440 = vshrl.u32 %v1436, 16
        %v1441 = vshll.u32 %v1437, 16
        %v1442 = vshrl.u32 %v1437, 16
        %vm1443 = vc.u32 %v1435, %v1439
        %v1444 = vsel %vm1443, 1, 0
        %v1445 = vadd.s32 %v1435, %v1439
        %v1446 = vadd.s32 %v1438, %v1444
        %vm1447 = vc.u32 %v1445, %v1441
        %v1448 = vsel %vm1447, 1, 0
        %v1449 = vadd.s32 %v1445, %v1441
        %v1450 = vadd.s32 %v1446, %v1448
        %v1451 = vadd.s32 %v1450, %v1440
        %v1452 = vadd.s32 %v1451, %v1442
        %v1453 = vmul.u32 %v1408, %v1399
        %v1454 = vadd.s32 %v1430, %v1449
        %vm1455 = vc.u32 %v1430, %v1449
        %v1456 = vadd.s32 %v1452, 1
        %v1457 = vsel %vm1455, %v1456, %v1452
        %v1458 = vadd.s32 %v1453, %v1457
        %v1459 = vadd.s32 %v1458, 536870912
        %v1460 = vshrl.u32 %v1459, 30
        %v1461 = vshll.u32 %v1460, 30
        %v1462 = vsub.s32 %v1458, %v1461
        %vm1463 = vcmp.lt.s32.totalorder %v1462, 0
        %v1464 = vsub.s32 0, %v1462
        %v1465 = vsel %vm1463, %v1464, %v1462
        %v1466 = vclz %v1465
        %v1467 = vsub.s32 %v1466, 2
        %vm1468 = vcmp.gt.s32.totalorder 0, %v1467
        %v1469 = vsel %vm1468, 0, %v1467
        %v1470 = vsub.s32 32, %v1469
        %v1471 = vshll.u32 %v1462, %v1469
        %v1472 = vshrl.u32 %v1454, %v1470
        %v1473 = vor.u32 %v1471, %v1472
        %v1474 = vsub.s32 4294967266, %v1469
        %v1475 = vadd.s32 %v1474, 127
        %v1476 = vshll.u32 %v1475, 23
        %v1477 = vor.u32 4788187, %v1476
        %v1478 = vand.u32 2147483647, %v1477
        %v1480 = vcvt.s32.f32 %v1473
        %v1481 = vmul.f32 %v1480, %v1478
        %v1482 = vxor.u32 %v1481, 2147483648
        %v1483 = vsel %vm1362, %v1482, %v1481
        %v1484 = vsub.s32 4, %v1460
        %v1485 = vsel %vm1362, %v1484, %v1460
        %v1486 = vsel %vm1361, %v380, %v1483
        %v1487 = vsel %vm1361, 0, %v1485
        %v1488 = vmul.f32 %v1486, %v1486
        %v1489 = vmul.f32 %v1488, -0.001358992
        %v1490 = vadd.f32 %v1489, 0.041655596
        %v1491 = vmul.f32 %v1488, %v1490
        %v1492 = vadd.f32 %v1491, -0.4999988
        %v1493 = vmul.f32 %v1488, %v1492
        %v1494 = vadd.f32 1.0, %v1493
        %v1495 = vmul.f32 %v1486, %v1486
        %v1496 = vmul.f32 %v1495, -0.00019511016
        %v1497 = vadd.f32 %v1496, 0.008332121
        %v1498 = vmul.f32 %v1495, %v1497
        %v1499 = vadd.f32 %v1498, -0.16666654
        %v1500 = vmul.f32 %v1495, %v1499
        %v1501 = vadd.f32 %v1500, 1.0
        %v1502 = vmul.f32 %v1501, %v1486
        %vm1503 = vweird.f32 %v380
        %v1504 = vand.u32 %v1487, 3
        %vm1505 = vcmp.lt.s32.totalorder %v1504, 2
        %vm1506 = vcmp.eq.s32.totalorder %v1504, 0
        %v1507 = vxor.u32 %v1502, 2147483648
        %v1508 = vsel %vm1506, %v1494, %v1507
        %vm1509 = vcmp.eq.s32.totalorder %v1504, 2
        %v1510 = vxor.u32 %v1494, 2147483648
        %v1511 = vsel %vm1509, %v1510, %v1502
        %v1512 = vsel %vm1505, %v1508, %v1511
        %v1513 = vsel %vm1503, nan, %v1512
        %v1514 = vand.u32 2147483647, %v381
        %vm1515 = vcmp.le.f32.partialorder %v1514, 0.7853982
        %vm1516 = vcmp.lt.s32.totalorder %v381, 0
        %v1517 = vand.u32 %v381, 2139095040
        %v1518 = vshrl.u32 %v1517, 23
        %v1519 = vsub.s32 %v1518, 127
        %v1520 = vand.u32 2147483647, %v381
        %v1521 = vand.u32 %v1520, 8388607
        %v1522 = vor.u32 %v1521, 8388608
        %v1523 = vsub.s32 0, %v1522
        %v1524 = vadd.s32 %v1519, 1
        %vm1525 = vcmp.gt.s32.totalorder %v1524, 0
        %v1526 = vsel %vm1525, %v1524, 0
        %v1527 = vshrl.u32 %v1526, 5
        %v1528 = vand.u32 %v1526, 31
        %v1529 = vsub.s32 32, %v1528
        %v1530 = vshrl.u32 683565275, %v1529
        %v1531 = vshll.u32 683565275, %v1528
        %v1532 = vshrl.u32 2475754826, %v1529
        %v1533 = vor.u32 %v1531, %v1532
        %v1534 = vshll.u32 2475754826, %v1528
        %v1535 = vshrl.u32 2131351028, %v1529
        %v1536 = vor.u32 %v1534, %v1535
        %v1537 = vshll.u32 2131351028, %v1528
        %v1538 = vshrl.u32 2102212464, %v1529
        %v1539 = vor.u32 %v1537, %v1538
        %v1540 = vshll.u32 2102212464, %v1528
        %v1541 = vshrl.u32 920167782, %v1529
        %v1542 = vor.u32 %v1540, %v1541
        %v1543 = vshll.u32 920167782, %v1528
        %v1544 = vshrl.u32 1326507024, %v1529
        %v1545 = vor.u32 %v1543, %v1544
        %vm1546 = vcmp.lt.s32.totalorder %v1527, 1
        %vm1547 = vcmp.lt.s32.totalorder %v1527, 2
        %vm1548 = vcmp.lt.s32.totalorder %v1527, 3
        %vm1549 = vcmp.lt.s32.totalorder %v1527, 4
        %v1550 = vsel %vm1546, %v1530, %v1533
        %v1551 = vsel %vm1549, %v1539, 2102212464
        %v1552 = vsel %vm1548, %v1536, %v1551
        %v1553 = vsel %vm1547, %v1550, %v1552
        %v1554 = vsel %vm1546, %v1533, %v1536
        %v1555 = vsel %vm1549, %v1542, 920167782
        %v1556 = vsel %vm1548, %v1539, %v1555
        %v1557 = vsel %vm1547, %v1554, %v1556
        %v1558 = vsel %vm1546, %v1536, %v1539
        %v1559 = vsel %vm1549, %v1545, 1326507024
        %v1560 = vsel %vm1548, %v1542, %v1559
        %v1561 = vsel %vm1547, %v1558, %v1560
        %v1562 = vshll.u32 %v1522, 8
        %v1563 = vand.u32 %v1562, 65535
        %v1564 = vshrl.u32 %v1562, 16
        %v1565 = vand.u32 %v1561, 65535
        %v1566 = vshrl.u32 %v1561, 16
        %v1567 = vmul.u32 %v1563, %v1565
        %v1568 = vmul.u32 %v1563, %v1566
        %v1569 = vmul.u32 %v1564, %v1565
        %v1570 = vmul.u32 %v1564, %v1566
        %v1571 = vshll.u32 %v1568, 16
        %v1572 = vshrl.u32 %v1568, 16
        %v1573 = vshll.u32 %v1569, 16
        %v1574 = vshrl.u32 %v1569, 16
        %vm1575 = vc.u32 %v1567, %v1571
        %v1576 = vsel %vm1575, 1, 0
        %v1577 = vadd.s32 %v1567, %v1571
        %v1578 = vadd.s32 %v1570, %v1576
        %vm1579 = vc.u32 %v1577, %v1573
        %v1580 = vsel %vm1579, 1, 0
        %v1581 = vadd.s32 %v1577, %v1573
        %v1582 = vadd.s32 %v1578, %v1580
        %v1583 = vadd.s32 %v1582, %v1572
        %v1584 = vadd.s32 %v1583, %v1574
        %v1585 = vand.u32 %v1562, 65535
        %v1586 = vshrl.u32 %v1562, 16
        %v1587 = vand.u32 %v1557, 65535
        %v1588 = vshrl.u32 %v1557, 16
        %v1589 = vmul.u32 %v1585, %v1587
        %v1590 = vmul.u32 %v1585, %v1588
        %v1591 = vmul.u32 %v1586, %v1587
        %v1592 = vmul.u32 %v1586, %v1588
        %v1593 = vshll.u32 %v1590, 16
        %v1594 = vshrl.u32 %v1590, 16
        %v1595 = vshll.u32 %v1591, 16
        %v1596 = vshrl.u32 %v1591, 16
        %vm1597 = vc.u32 %v1589, %v1593
        %v1598 = vsel %vm1597, 1, 0
        %v1599 = vadd.s32 %v1589, %v1593
        %v1600 = vadd.s32 %v1592, %v1598
        %vm1601 = vc.u32 %v1599, %v1595
        %v1602 = vsel %vm1601, 1, 0
        %v1603 = vadd.s32 %v1599, %v1595
        %v1604 = vadd.s32 %v1600, %v1602
        %v1605 = vadd.s32 %v1604, %v1594
        %v1606 = vadd.s32 %v1605, %v1596
        %v1607 = vmul.u32 %v1562, %v1553
        %v1608 = vadd.s32 %v1584, %v1603
        %vm1609 = vc.u32 %v1584, %v1603
        %v1610 = vadd.s32 %v1606, 1
        %v1611 = vsel %vm1609, %v1610, %v1606
        %v1612 = vadd.s32 %v1607, %v1611
        %v1613 = vadd.s32 %v1612, 536870912
        %v1614 = vshrl.u32 %v1613, 30
        %v1615 = vshll.u32 %v1614, 30
        %v1616 = vsub.s32 %v1612, %v1615
        %vm1617 = vcmp.lt.s32.totalorder %v1616, 0
        %v1618 = vsub.s32 0, %v1616
        %v1619 = vsel %vm1617, %v1618, %v1616
        %v1620 = vclz %v1619
        %v1621 = vsub.s32 %v1620, 2
        %vm1622 = vcmp.gt.s32.totalorder 0, %v1621
        %v1623 = vsel %vm1622, 0, %v1621
        %v1624 = vsub.s32 32, %v1623
        %v1625 = vshll.u32 %v1616, %v1623
        %v1626 = vshrl.u32 %v1608, %v1624
        %v1627 = vor.u32 %v1625, %v1626
        %v1628 = vsub.s32 4294967266, %v1623
        %v1629 = vadd.s32 %v1628, 127
        %v1630 = vshll.u32 %v1629, 23
        %v1631 = vor.u32 4788187, %v1630
        %v1632 = vand.u32 2147483647, %v1631
        %v1634 = vcvt.s32.f32 %v1627
        %v1635 = vmul.f32 %v1634, %v1632
        %v1636 = vxor.u32 %v1635, 2147483648
        %v1637 = vsel %vm1516, %v1636, %v1635
        %v1638 = vsub.s32 4, %v1614
        %v1639 = vsel %vm1516, %v1638, %v1614
        %v1640 = vsel %vm1515, %v381, %v1637
        %v1641 = vsel %vm1515, 0, %v1639
        %v1642 = vmul.f32 %v1640, %v1640
        %v1643 = vmul.f32 %v1642, -0.001358992
        %v1644 = vadd.f32 %v1643, 0.041655596
        %v1645 = vmul.f32 %v1642, %v1644
        %v1646 = vadd.f32 %v1645, -0.4999988
        %v1647 = vmul.f32 %v1642, %v1646
        %v1648 = vadd.f32 1.0, %v1647
        %v1649 = vmul.f32 %v1640, %v1640
        %v1650 = vmul.f32 %v1649, -0.00019511016
        %v1651 = vadd.f32 %v1650, 0.008332121
        %v1652 = vmul.f32 %v1649, %v1651
        %v1653 = vadd.f32 %v1652, -0.16666654
        %v1654 = vmul.f32 %v1649, %v1653
        %v1655 = vadd.f32 %v1654, 1.0
        %v1656 = vmul.f32 %v1655, %v1640
        %vm1657 = vweird.f32 %v381
        %v1658 = vand.u32 %v1641, 3
        %vm1659 = vcmp.lt.s32.totalorder %v1658, 2
        %vm1660 = vcmp.eq.s32.totalorder %v1658, 0
        %v1661 = vxor.u32 %v1656, 2147483648
        %v1662 = vsel %vm1660, %v1648, %v1661
        %vm1663 = vcmp.eq.s32.totalorder %v1658, 2
        %v1664 = vxor.u32 %v1648, 2147483648
        %v1665 = vsel %vm1663, %v1664, %v1656
        %v1666 = vsel %vm1659, %v1662, %v1665
        %v1667 = vsel %vm1657, nan, %v1666
        %v1668 = vrcp.pop %v1513
        %v1669 = vmul.f32 %v1513, %v1668
        %v1670 = vsub.f32 1.0, %v1669
        %v1671 = vmul.f32 %v1668, %v1670
        %v1672 = vadd.f32 %v1668, %v1671
        %vm1673 = vweird.f32 %v1513
        %vm1674 = vweird.f32 %v1668
        %vm1675 = vmor %vm1673, %vm1674
        %v1676 = vsel %vm1675, %v1668, %v1672
        %v1677 = vand.u32 2147483647, %v1513
        %vm1678 = vcmp.eq.f32.partialorder %v1677, 8.507059e+37
        %v1679 = vand.u32 %v1513, 2147483648
        %v1680 = vor.u32 1.1754944e-38, %v1679
        %v1681 = vsel %vm1678, %v1680, %v1676
        %v1682 = vmul.f32 %v1204, %v1681
        %v1683 = vrcp.pop %v1667
        %v1684 = vmul.f32 %v1667, %v1683
        %v1685 = vsub.f32 1.0, %v1684
        %v1686 = vmul.f32 %v1683, %v1685
        %v1687 = vadd.f32 %v1683, %v1686
        %vm1688 = vweird.f32 %v1667
        %vm1689 = vweird.f32 %v1683
        %vm1690 = vmor %vm1688, %vm1689
        %v1691 = vsel %vm1690, %v1683, %v1687
        %v1692 = vand.u32 2147483647, %v1667
        %vm1693 = vcmp.eq.f32.partialorder %v1692, 8.507059e+37
        %v1694 = vand.u32 %v1667, 2147483648
        %v1695 = vor.u32 1.1754944e-38, %v1694
        %v1696 = vsel %vm1693, %v1695, %v1691
        %v1697 = vmul.f32 %v1359, %v1696
        %v1698 = vmul.f32 %v1034, 0.1
        %v1699 = vmul.f32 %v1049, 0.1
        %v1700 = vadd.f32 %v368, %v1698
        %v1701 = vadd.f32 %v369, %v1699
        %v1702 = vmul.f32 %v1682, 0.1
        %v1703 = vmul.f32 %v1697, 0.1
        %v1704 = vadd.f32 %v372, %v1702
        %v1705 = vadd.f32 %v373, %v1703
        %1706 = vst [vmem:[%s363] sm:$0xff] %v1700
        %1707 = vst [vmem:[%s363 + $0x8] sm:$0xff] %v1701
        %s1708 = scalar_lea.vmem %s363, %s370 [#allocation9]
        %1709 = vst [vmem:[%s1708] sm:$0xff] %v1704
        %1710 = vst [vmem:[%s1708 + $0x8] sm:$0xff] %v1705
        %v1711 = vadd.f32 %v1700, %v1698
        %v1712 = vadd.f32 %v1701, %v1699
        %v1713 = vadd.f32 %v1704, %v1702
        %v1714 = vadd.f32 %v1705, %v1703
        %s1715 = scalar_lea.vmem %s363, %s389 [#allocation9]
        %1716 = vst [vmem:[%s1715] sm:$0xff] %v1711
        %1717 = vst [vmem:[%s1715 + $0x8] sm:$0xff] %v1712
        %s1718 = sadd.s32 %s370, 32
        %s1719 = scalar_lea.vmem %s363, %s1718 [#allocation9]
        %1720 = vst [vmem:[%s1719] sm:$0xff] %v1713
        %1721 = vst [vmem:[%s1719 + $0x8] sm:$0xff] %v1714
        %s1722 = sld [smem:[#allocation2]]
        %s1723 = sld [smem:[#allocation2 + $0x1]]
        %s1724 = sld [smem:[#allocation2 + $0x2]]
        %s1725 = sld [smem:[#allocation2 + $0x3]]
        %s1726 = sld [smem:[#allocation2 + $0x4]]
        %s1727 = sld [smem:[#allocation2 + $0x5]]
        %s1728 = sld [smem:[#allocation2 + $0x6]]
        %s1729 = sld [smem:[#allocation2 + $0x7]]
        %s1730 = sld [smem:[#allocation2 + $0x8]]
        %s1731 = sld [smem:[#allocation2 + $0x9]]
        %s1732 = sld [smem:[#allocation2 + $0xa]]
        %s1733 = sld [smem:[#allocation2 + $0xb]]
        %s1734 = sld [smem:[#allocation2 + $0xc]]
        %s1735 = sld [smem:[#allocation2 + $0xd]]
        %s1736 = sld [smem:[#allocation2 + $0xe]]
        %s1737 = sld [smem:[#allocation2 + $0xf]]
        %s1738 = sld [smem:[#allocation2 + $0x10]]
        %s1739 = sld [smem:[#allocation2 + $0x11]]
        %s1740 = sld [smem:[#allocation2 + $0x12]]
        %s1741 = sld [smem:[#allocation2 + $0x13]]
        %s1742 = sld [smem:[#allocation2 + $0x14]]
        %s1743 = sld [smem:[#allocation2 + $0x15]]
        %s1744 = sld [smem:[#allocation2 + $0x16]]
        %s1745 = sld [smem:[#allocation2 + $0x17]]
        %s1746 = sld [smem:[#allocation2 + $0x18]]
        %s1747 = sld [smem:[#allocation2 + $0x19]]
        %s1748 = sld [smem:[#allocation2 + $0x1a]]
        %s1749 = sld [smem:[#allocation2 + $0x1b]]
        %s1750 = sld [smem:[#allocation2 + $0x1c]]
        %s1751 = sld [smem:[#allocation2 + $0x1d]]
        %s1752 = sld [smem:[#allocation2 + $0x1e]]
        %s1753 = sld [smem:[#allocation2 + $0x1f]]
        %s1754 = sld [smem:[#allocation2 + $0x20]]
        %s1755 = sld [smem:[#allocation2 + $0x21]]
        %s1756 = sld [smem:[#allocation2 + $0x22]]
        %s1757 = sld [smem:[#allocation2 + $0x23]]
        %s1758 = sld [smem:[#allocation2 + $0x24]]
        %s1759 = sld [smem:[#allocation2 + $0x25]]
        %s1760 = sld [smem:[#allocation2 + $0x26]]
        %s1761 = sld [smem:[#allocation2 + $0x27]]
        %s1762 = sld [smem:[#allocation2 + $0x28]]
        %s1763 = sld [smem:[#allocation2 + $0x29]]
        %s1764 = sld [smem:[#allocation2 + $0x2a]]
        %s1765 = sld [smem:[#allocation2 + $0x2b]]
        %s1766 = sld [smem:[#allocation2 + $0x2c]]
        %s1767 = sld [smem:[#allocation2 + $0x2d]]
        %s1768 = sld [smem:[#allocation2 + $0x2e]]
        %s1769 = sld [smem:[#allocation2 + $0x2f]]
        %s1770 = sld [smem:[#allocation2 + $0x30]]
        %s1771 = sld [smem:[#allocation2 + $0x31]]
        %s1772 = sld [smem:[#allocation2 + $0x32]]
        %s1773 = sld [smem:[#allocation2 + $0x33]]
        %s1774 = sld [smem:[#allocation2 + $0x34]]
        %s1775 = sld [smem:[#allocation2 + $0x35]]
        %s1776 = sld [smem:[#allocation2 + $0x36]]
        %s1777 = sld [smem:[#allocation2 + $0x37]]
        %s1778 = sld [smem:[#allocation2 + $0x38]]
        %s1779 = sld [smem:[#allocation2 + $0x39]]
        %s1780 = sld [smem:[#allocation2 + $0x3a]]
        %s1781 = sld [smem:[#allocation2 + $0x3b]]
        %s1782 = sld [smem:[#allocation2 + $0x3c]]
        %s1783 = sld [smem:[#allocation2 + $0x3d]]
        %s1784 = sld [smem:[#allocation2 + $0x3e]]
        %s1785 = sld [smem:[#allocation2 + $0x3f]]
        %v1786 = vadd.f32 %v1711, %v1698
        %v1787 = vadd.f32 %v1712, %v1699
        %v1788 = vadd.f32 %v1713, %v1702
        %v1789 = vadd.f32 %v1714, %v1703
        %v1790 = vmul.f32 %v1786, 10.0
        %v1791 = vmul.f32 %v1787, 10.0
        %v1792 = vfloor.f32 %v1790
        %v1793 = vfloor.f32 %v1791
        %v1794 = vmax.f32 %v1792, 0.0
        %v1795 = vmax.f32 %v1793, 0.0
        %v1796 = vmin.f32 %v1794, 7.0
        %v1797 = vmin.f32 %v1795, 7.0
        %v1798 = vcvt.f32.s32.to.zero.pseudo %v1796
        %v1799 = vcvt.f32.s32.to.zero.pseudo %v1797
        %v1800 = vmul.f32 %v1788, 10.0
        %v1801 = vmul.f32 %v1789, 10.0
        %v1802 = vfloor.f32 %v1800
        %v1803 = vfloor.f32 %v1801
        %v1804 = vmax.f32 %v1802, 0.0
        %v1805 = vmax.f32 %v1803, 0.0
        %v1806 = vmin.f32 %v1804, 7.0
        %v1807 = vmin.f32 %v1805, 7.0
        %v1808 = vcvt.f32.s32.to.zero.pseudo %v1806
        %v1809 = vcvt.f32.s32.to.zero.pseudo %v1807
        %vm1810 = vcmp.ge.f32.partialorder %v1786, 0.0
        %vm1811 = vcmp.ge.f32.partialorder %v1787, 0.0
        %vm1812 = vcmp.lt.f32.partialorder %v1786, 0.8
        %vm1813 = vcmp.lt.f32.partialorder %v1787, 0.8
        %vm1814 = vmand %vm1810, %vm1812
        %vm1815 = vmand %vm1811, %vm1813
        %vm1816 = vcmp.ge.f32.partialorder %v1788, 0.0
        %vm1817 = vcmp.ge.f32.partialorder %v1789, 0.0
        %vm1818 = vmand %vm1814, %vm1816
        %vm1819 = vmand %vm1815, %vm1817
        %vm1820 = vcmp.lt.f32.partialorder %v1788, 0.8
        %vm1821 = vcmp.lt.f32.partialorder %v1789, 0.8
        %vm1822 = vmand %vm1818, %vm1820
        %vm1823 = vmand %vm1819, %vm1821
        %v1824 = vand.u32 %v1808, 1
        %v1825 = vand.u32 %v1809, 1
        %vm1826 = vcmp.ne.s32.totalorder %v1824, 0
        %vm1827 = vcmp.ne.s32.totalorder %v1825, 0
        %v1828 = vand.u32 %v1808, 2
        %v1829 = vand.u32 %v1809, 2
        %vm1830 = vcmp.ne.s32.totalorder %v1828, 0
        %vm1831 = vcmp.ne.s32.totalorder %v1829, 0
        %v1832 = vand.u32 %v1808, 4
        %v1833 = vand.u32 %v1809, 4
        %vm1834 = vcmp.ne.s32.totalorder %v1832, 0
        %vm1835 = vcmp.ne.s32.totalorder %v1833, 0
        %v1836 = vand.u32 %v1798, 1
        %v1837 = vand.u32 %v1799, 1
        %vm1838 = vcmp.ne.s32.totalorder %v1836, 0
        %vm1839 = vcmp.ne.s32.totalorder %v1837, 0
        %v1840 = vand.u32 %v1798, 2
        %v1841 = vand.u32 %v1799, 2
        %vm1842 = vcmp.ne.s32.totalorder %v1840, 0
        %vm1843 = vcmp.ne.s32.totalorder %v1841, 0
        %v1844 = vand.u32 %v1798, 4
        %v1845 = vand.u32 %v1799, 4
        %vm1846 = vcmp.ne.s32.totalorder %v1844, 0
        %vm1847 = vcmp.ne.s32.totalorder %v1845, 0
        %v1848 = vstv %s1723
        %v1849 = vstv %s1722
        %v1850 = vsel %vm1826, %v1848, %v1849
        %v1851 = vsel %vm1827, %v1848, %v1849
        %v1852 = vstv %s1725
        %v1853 = vstv %s1724
        %v1854 = vsel %vm1826, %v1852, %v1853
        %v1855 = vsel %vm1827, %v1852, %v1853
        %v1856 = vsel %vm1830, %v1854, %v1850
        %v1857 = vsel %vm1831, %v1855, %v1851
        %v1858 = vstv %s1727
        %v1859 = vstv %s1726
        %v1860 = vsel %vm1826, %v1858, %v1859
        %v1861 = vsel %vm1827, %v1858, %v1859
        %v1862 = vstv %s1729
        %v1863 = vstv %s1728
        %v1864 = vsel %vm1826, %v1862, %v1863
        %v1865 = vsel %vm1827, %v1862, %v1863
        %v1866 = vsel %vm1830, %v1864, %v1860
        %v1867 = vsel %vm1831, %v1865, %v1861
        %v1868 = vsel %vm1834, %v1866, %v1856
        %v1869 = vsel %vm1835, %v1867, %v1857
        %v1870 = vstv %s1731
        %v1871 = vstv %s1730
        %v1872 = vsel %vm1826, %v1870, %v1871
        %v1873 = vsel %vm1827, %v1870, %v1871
        %v1874 = vstv %s1733
        %v1875 = vstv %s1732
        %v1876 = vsel %vm1826, %v1874, %v1875
        %v1877 = vsel %vm1827, %v1874, %v1875
        %v1878 = vsel %vm1830, %v1876, %v1872
        %v1879 = vsel %vm1831, %v1877, %v1873
        %v1880 = vstv %s1735
        %v1881 = vstv %s1734
        %v1882 = vsel %vm1826, %v1880, %v1881
        %v1883 = vsel %vm1827, %v1880, %v1881
        %v1884 = vstv %s1737
        %v1885 = vstv %s1736
        %v1886 = vsel %vm1826, %v1884, %v1885
        %v1887 = vsel %vm1827, %v1884, %v1885
        %v1888 = vsel %vm1830, %v1886, %v1882
        %v1889 = vsel %vm1831, %v1887, %v1883
        %v1890 = vsel %vm1834, %v1888, %v1878
        %v1891 = vsel %vm1835, %v1889, %v1879
        %v1892 = vsel %vm1838, %v1890, %v1868
        %v1893 = vsel %vm1839, %v1891, %v1869
        %v1894 = vstv %s1739
        %v1895 = vstv %s1738
        %v1896 = vsel %vm1826, %v1894, %v1895
        %v1897 = vsel %vm1827, %v1894, %v1895
        %v1898 = vstv %s1741
        %v1899 = vstv %s1740
        %v1900 = vsel %vm1826, %v1898, %v1899
        %v1901 = vsel %vm1827, %v1898, %v1899
        %v1902 = vsel %vm1830, %v1900, %v1896
        %v1903 = vsel %vm1831, %v1901, %v1897
        %v1904 = vstv %s1743
        %v1905 = vstv %s1742
        %v1906 = vsel %vm1826, %v1904, %v1905
        %v1907 = vsel %vm1827, %v1904, %v1905
        %v1908 = vstv %s1745
        %v1909 = vstv %s1744
        %v1910 = vsel %vm1826, %v1908, %v1909
        %v1911 = vsel %vm1827, %v1908, %v1909
        %v1912 = vsel %vm1830, %v1910, %v1906
        %v1913 = vsel %vm1831, %v1911, %v1907
        %v1914 = vsel %vm1834, %v1912, %v1902
        %v1915 = vsel %vm1835, %v1913, %v1903
        %v1916 = vstv %s1747
        %v1917 = vstv %s1746
        %v1918 = vsel %vm1826, %v1916, %v1917
        %v1919 = vsel %vm1827, %v1916, %v1917
        %v1920 = vstv %s1749
        %v1921 = vstv %s1748
        %v1922 = vsel %vm1826, %v1920, %v1921
        %v1923 = vsel %vm1827, %v1920, %v1921
        %v1924 = vsel %vm1830, %v1922, %v1918
        %v1925 = vsel %vm1831, %v1923, %v1919
        %v1926 = vstv %s1751
        %v1927 = vstv %s1750
        %v1928 = vsel %vm1826, %v1926, %v1927
        %v1929 = vsel %vm1827, %v1926, %v1927
        %v1930 = vstv %s1753
        %v1931 = vstv %s1752
        %v1932 = vsel %vm1826, %v1930, %v1931
        %v1933 = vsel %vm1827, %v1930, %v1931
        %v1934 = vsel %vm1830, %v1932, %v1928
        %v1935 = vsel %vm1831, %v1933, %v1929
        %v1936 = vsel %vm1834, %v1934, %v1924
        %v1937 = vsel %vm1835, %v1935, %v1925
        %v1938 = vsel %vm1838, %v1936, %v1914
        %v1939 = vsel %vm1839, %v1937, %v1915
        %v1940 = vsel %vm1842, %v1938, %v1892
        %v1941 = vsel %vm1843, %v1939, %v1893
        %v1942 = vstv %s1755
        %v1943 = vstv %s1754
        %v1944 = vsel %vm1826, %v1942, %v1943
        %v1945 = vsel %vm1827, %v1942, %v1943
        %v1946 = vstv %s1757
        %v1947 = vstv %s1756
        %v1948 = vsel %vm1826, %v1946, %v1947
        %v1949 = vsel %vm1827, %v1946, %v1947
        %v1950 = vsel %vm1830, %v1948, %v1944
        %v1951 = vsel %vm1831, %v1949, %v1945
        %v1952 = vstv %s1759
        %v1953 = vstv %s1758
        %v1954 = vsel %vm1826, %v1952, %v1953
        %v1955 = vsel %vm1827, %v1952, %v1953
        %v1956 = vstv %s1761
        %v1957 = vstv %s1760
        %v1958 = vsel %vm1826, %v1956, %v1957
        %v1959 = vsel %vm1827, %v1956, %v1957
        %v1960 = vsel %vm1830, %v1958, %v1954
        %v1961 = vsel %vm1831, %v1959, %v1955
        %v1962 = vsel %vm1834, %v1960, %v1950
        %v1963 = vsel %vm1835, %v1961, %v1951
        %v1964 = vstv %s1763
        %v1965 = vstv %s1762
        %v1966 = vsel %vm1826, %v1964, %v1965
        %v1967 = vsel %vm1827, %v1964, %v1965
        %v1968 = vstv %s1765
        %v1969 = vstv %s1764
        %v1970 = vsel %vm1826, %v1968, %v1969
        %v1971 = vsel %vm1827, %v1968, %v1969
        %v1972 = vsel %vm1830, %v1970, %v1966
        %v1973 = vsel %vm1831, %v1971, %v1967
        %v1974 = vstv %s1767
        %v1975 = vstv %s1766
        %v1976 = vsel %vm1826, %v1974, %v1975
        %v1977 = vsel %vm1827, %v1974, %v1975
        %v1978 = vstv %s1769
        %v1979 = vstv %s1768
        %v1980 = vsel %vm1826, %v1978, %v1979
        %v1981 = vsel %vm1827, %v1978, %v1979
        %v1982 = vsel %vm1830, %v1980, %v1976
        %v1983 = vsel %vm1831, %v1981, %v1977
        %v1984 = vsel %vm1834, %v1982, %v1972
        %v1985 = vsel %vm1835, %v1983, %v1973
        %v1986 = vsel %vm1838, %v1984, %v1962
        %v1987 = vsel %vm1839, %v1985, %v1963
        %v1988 = vstv %s1771
        %v1989 = vstv %s1770
        %v1990 = vsel %vm1826, %v1988, %v1989
        %v1991 = vsel %vm1827, %v1988, %v1989
        %v1992 = vstv %s1773
        %v1993 = vstv %s1772
        %v1994 = vsel %vm1826, %v1992, %v1993
        %v1995 = vsel %vm1827, %v1992, %v1993
        %v1996 = vsel %vm1830, %v1994, %v1990
        %v1997 = vsel %vm1831, %v1995, %v1991
        %v1998 = vstv %s1775
        %v1999 = vstv %s1774
        %v2000 = vsel %vm1826, %v1998, %v1999
        %v2001 = vsel %vm1827, %v1998, %v1999
        %v2002 = vstv %s1777
        %v2003 = vstv %s1776
        %v2004 = vsel %vm1826, %v2002, %v2003
        %v2005 = vsel %vm1827, %v2002, %v2003
        %v2006 = vsel %vm1830, %v2004, %v2000
        %v2007 = vsel %vm1831, %v2005, %v2001
        %v2008 = vsel %vm1834, %v2006, %v1996
        %v2009 = vsel %vm1835, %v2007, %v1997
        %v2010 = vstv %s1779
        %v2011 = vstv %s1778
        %v2012 = vsel %vm1826, %v2010, %v2011
        %v2013 = vsel %vm1827, %v2010, %v2011
        %v2014 = vstv %s1781
        %v2015 = vstv %s1780
        %v2016 = vsel %vm1826, %v2014, %v2015
        %v2017 = vsel %vm1827, %v2014, %v2015
        %v2018 = vsel %vm1830, %v2016, %v2012
        %v2019 = vsel %vm1831, %v2017, %v2013
        %v2020 = vstv %s1783
        %v2021 = vstv %s1782
        %v2022 = vsel %vm1826, %v2020, %v2021
        %v2023 = vsel %vm1827, %v2020, %v2021
        %v2024 = vstv %s1785
        %v2025 = vstv %s1784
        %v2026 = vsel %vm1826, %v2024, %v2025
        %v2027 = vsel %vm1827, %v2024, %v2025
        %v2028 = vsel %vm1830, %v2026, %v2022
        %v2029 = vsel %vm1831, %v2027, %v2023
        %v2030 = vsel %vm1834, %v2028, %v2018
        %v2031 = vsel %vm1835, %v2029, %v2019
        %v2032 = vsel %vm1838, %v2030, %v2008
        %v2033 = vsel %vm1839, %v2031, %v2009
        %v2034 = vsel %vm1842, %v2032, %v1986
        %v2035 = vsel %vm1843, %v2033, %v1987
        %v2036 = vsel %vm1846, %v2034, %v1940
        %v2037 = vsel %vm1847, %v2035, %v1941
        %v2038 = vmul.f32 %v2036, %v400
        %v2039 = vmul.f32 %v2037, %v401
        %v2040 = vsel %vm1822, %v2038, 0.0
        %v2041 = vsel %vm1823, %v2039, 0.0
        %v2042 = vld [vmem:[%s329] sm:$0xff]
        %v2043 = vld [vmem:[%s329 + $0x8] sm:$0xff]
        %v2044 = vmul.f32 %v2040, %v2042
        %v2045 = vmul.f32 %v2041, %v2043
        %s2046 = scalar_lea.vmem %s329, %s370 [#allocation7]
        %v2047 = vld [vmem:[%s2046] sm:$0xff]
        %v2048 = vld [vmem:[%s2046 + $0x8] sm:$0xff]
        %v2049 = vmul.f32 %v2040, %v2047
        %v2050 = vmul.f32 %v2041, %v2048
        %v2051 = vadd.f32 %v376, %v2044
        %v2052 = vadd.f32 %v377, %v2045
        %v2053 = vadd.f32 %v380, %v2049
        %v2054 = vadd.f32 %v381, %v2050
        %v2055 = vadd.f32 %v1034, %v2044
        %v2056 = vadd.f32 %v1049, %v2045
        %v2057 = vmul.f32 %v1034, %v2044
        %v2058 = vmul.f32 %v1049, %v2045
        %v2059 = vsub.f32 1.0, %v2057
        %v2060 = vsub.f32 1.0, %v2058
        %v2061 = vrcp.pop %v2059
        %v2062 = vrcp.pop %v2060
        %v2063 = vmul.f32 %v2055, %v2061
        %v2064 = vmul.f32 %v2056, %v2062
        %v2065 = vadd.f32 %v1682, %v2049
        %v2066 = vadd.f32 %v1697, %v2050
        %v2067 = vmul.f32 %v1682, %v2049
        %v2068 = vmul.f32 %v1697, %v2050
        %v2069 = vsub.f32 1.0, %v2067
        %v2070 = vsub.f32 1.0, %v2068
        %v2071 = vrcp.pop %v2069
        %v2072 = vrcp.pop %v2070
        %v2073 = vmul.f32 %v2065, %v2071
        %v2074 = vmul.f32 %v2066, %v2072
        %s2075 = scalar_lea.vmem %s363, %s378 [#allocation9]
        %2076 = vst [vmem:[%s2075] sm:$0xff] %v1786
        %2077 = vst [vmem:[%s2075 + $0x8] sm:$0xff] %v1787
        %s2078 = sadd.s32 %s370, 64
        %s2079 = scalar_lea.vmem %s363, %s2078 [#allocation9]
        %2080 = vst [vmem:[%s2079] sm:$0xff] %v1788
        %2081 = vst [vmem:[%s2079 + $0x8] sm:$0xff] %v1789
        %s2082 = sld [smem:[#allocation2 + $0x40]]
        %s2083 = sld [smem:[#allocation2 + $0x41]]
        %s2084 = sld [smem:[#allocation2 + $0x42]]
        %s2085 = sld [smem:[#allocation2 + $0x43]]
        %s2086 = sld [smem:[#allocation2 + $0x44]]
        %s2087 = sld [smem:[#allocation2 + $0x45]]
        %s2088 = sld [smem:[#allocation2 + $0x46]]
        %s2089 = sld [smem:[#allocation2 + $0x47]]
        %s2090 = sld [smem:[#allocation2 + $0x48]]
        %s2091 = sld [smem:[#allocation2 + $0x49]]
        %s2092 = sld [smem:[#allocation2 + $0x4a]]
        %s2093 = sld [smem:[#allocation2 + $0x4b]]
        %s2094 = sld [smem:[#allocation2 + $0x4c]]
        %s2095 = sld [smem:[#allocation2 + $0x4d]]
        %s2096 = sld [smem:[#allocation2 + $0x4e]]
        %s2097 = sld [smem:[#allocation2 + $0x4f]]
        %s2098 = sld [smem:[#allocation2 + $0x50]]
        %s2099 = sld [smem:[#allocation2 + $0x51]]
        %s2100 = sld [smem:[#allocation2 + $0x52]]
        %s2101 = sld [smem:[#allocation2 + $0x53]]
        %s2102 = sld [smem:[#allocation2 + $0x54]]
        %s2103 = sld [smem:[#allocation2 + $0x55]]
        %s2104 = sld [smem:[#allocation2 + $0x56]]
        %s2105 = sld [smem:[#allocation2 + $0x57]]
        %s2106 = sld [smem:[#allocation2 + $0x58]]
        %s2107 = sld [smem:[#allocation2 + $0x59]]
        %s2108 = sld [smem:[#allocation2 + $0x5a]]
        %s2109 = sld [smem:[#allocation2 + $0x5b]]
        %s2110 = sld [smem:[#allocation2 + $0x5c]]
        %s2111 = sld [smem:[#allocation2 + $0x5d]]
        %s2112 = sld [smem:[#allocation2 + $0x5e]]
        %s2113 = sld [smem:[#allocation2 + $0x5f]]
        %s2114 = sld [smem:[#allocation2 + $0x60]]
        %s2115 = sld [smem:[#allocation2 + $0x61]]
        %s2116 = sld [smem:[#allocation2 + $0x62]]
        %s2117 = sld [smem:[#allocation2 + $0x63]]
        %s2118 = sld [smem:[#allocation2 + $0x64]]
        %s2119 = sld [smem:[#allocation2 + $0x65]]
        %s2120 = sld [smem:[#allocation2 + $0x66]]
        %s2121 = sld [smem:[#allocation2 + $0x67]]
        %s2122 = sld [smem:[#allocation2 + $0x68]]
        %s2123 = sld [smem:[#allocation2 + $0x69]]
        %s2124 = sld [smem:[#allocation2 + $0x6a]]
        %s2125 = sld [smem:[#allocation2 + $0x6b]]
        %s2126 = sld [smem:[#allocation2 + $0x6c]]
        %s2127 = sld [smem:[#allocation2 + $0x6d]]
        %s2128 = sld [smem:[#allocation2 + $0x6e]]
        %s2129 = sld [smem:[#allocation2 + $0x6f]]
        %s2130 = sld [smem:[#allocation2 + $0x70]]
        %s2131 = sld [smem:[#allocation2 + $0x71]]
        %s2132 = sld [smem:[#allocation2 + $0x72]]
        %s2133 = sld [smem:[#allocation2 + $0x73]]
        %s2134 = sld [smem:[#allocation2 + $0x74]]
        %s2135 = sld [smem:[#allocation2 + $0x75]]
        %s2136 = sld [smem:[#allocation2 + $0x76]]
        %s2137 = sld [smem:[#allocation2 + $0x77]]
        %s2138 = sld [smem:[#allocation2 + $0x78]]
        %s2139 = sld [smem:[#allocation2 + $0x79]]
        %s2140 = sld [smem:[#allocation2 + $0x7a]]
        %s2141 = sld [smem:[#allocation2 + $0x7b]]
        %s2142 = sld [smem:[#allocation2 + $0x7c]]
        %s2143 = sld [smem:[#allocation2 + $0x7d]]
        %s2144 = sld [smem:[#allocation2 + $0x7e]]
        %s2145 = sld [smem:[#allocation2 + $0x7f]]
        %v2146 = vmul.f32 %v2063, 0.1
        %v2147 = vmul.f32 %v2064, 0.1
        %v2148 = vadd.f32 %v1786, %v2146
        %v2149 = vadd.f32 %v1787, %v2147
        %v2150 = vmul.f32 %v2073, 0.1
        %v2151 = vmul.f32 %v2074, 0.1
        %v2152 = vadd.f32 %v1788, %v2150
        %v2153 = vadd.f32 %v1789, %v2151
        %v2154 = vmul.f32 %v2148, 10.0
        %v2155 = vmul.f32 %v2149, 10.0
        %v2156 = vfloor.f32 %v2154
        %v2157 = vfloor.f32 %v2155
        %v2158 = vmax.f32 %v2156, 0.0
        %v2159 = vmax.f32 %v2157, 0.0
        %v2160 = vmin.f32 %v2158, 7.0
        %v2161 = vmin.f32 %v2159, 7.0
        %v2162 = vcvt.f32.s32.to.zero.pseudo %v2160
        %v2163 = vcvt.f32.s32.to.zero.pseudo %v2161
        %v2164 = vmul.f32 %v2152, 10.0
        %v2165 = vmul.f32 %v2153, 10.0
        %v2166 = vfloor.f32 %v2164
        %v2167 = vfloor.f32 %v2165
        %v2168 = vmax.f32 %v2166, 0.0
        %v2169 = vmax.f32 %v2167, 0.0
        %v2170 = vmin.f32 %v2168, 7.0
        %v2171 = vmin.f32 %v2169, 7.0
        %v2172 = vcvt.f32.s32.to.zero.pseudo %v2170
        %v2173 = vcvt.f32.s32.to.zero.pseudo %v2171
        %vm2174 = vcmp.ge.f32.partialorder %v2148, 0.0
        %vm2175 = vcmp.ge.f32.partialorder %v2149, 0.0
        %vm2176 = vcmp.lt.f32.partialorder %v2148, 0.8
        %vm2177 = vcmp.lt.f32.partialorder %v2149, 0.8
        %vm2178 = vmand %vm2174, %vm2176
        %vm2179 = vmand %vm2175, %vm2177
        %vm2180 = vcmp.ge.f32.partialorder %v2152, 0.0
        %vm2181 = vcmp.ge.f32.partialorder %v2153, 0.0
        %vm2182 = vmand %vm2178, %vm2180
        %vm2183 = vmand %vm2179, %vm2181
        %vm2184 = vcmp.lt.f32.partialorder %v2152, 0.8
        %vm2185 = vcmp.lt.f32.partialorder %v2153, 0.8
        %vm2186 = vmand %vm2182, %vm2184
        %vm2187 = vmand %vm2183, %vm2185
        %v2188 = vand.u32 %v2172, 1
        %v2189 = vand.u32 %v2173, 1
        %vm2190 = vcmp.ne.s32.totalorder %v2188, 0
        %vm2191 = vcmp.ne.s32.totalorder %v2189, 0
        %v2192 = vand.u32 %v2172, 2
        %v2193 = vand.u32 %v2173, 2
        %vm2194 = vcmp.ne.s32.totalorder %v2192, 0
        %vm2195 = vcmp.ne.s32.totalorder %v2193, 0
        %v2196 = vand.u32 %v2172, 4
        %v2197 = vand.u32 %v2173, 4
        %vm2198 = vcmp.ne.s32.totalorder %v2196, 0
        %vm2199 = vcmp.ne.s32.totalorder %v2197, 0
        %v2200 = vand.u32 %v2162, 1
        %v2201 = vand.u32 %v2163, 1
        %vm2202 = vcmp.ne.s32.totalorder %v2200, 0
        %vm2203 = vcmp.ne.s32.totalorder %v2201, 0
        %v2204 = vand.u32 %v2162, 2
        %v2205 = vand.u32 %v2163, 2
        %vm2206 = vcmp.ne.s32.totalorder %v2204, 0
        %vm2207 = vcmp.ne.s32.totalorder %v2205, 0
        %v2208 = vand.u32 %v2162, 4
        %v2209 = vand.u32 %v2163, 4
        %vm2210 = vcmp.ne.s32.totalorder %v2208, 0
        %vm2211 = vcmp.ne.s32.totalorder %v2209, 0
        %v2212 = vstv %s2083
        %v2213 = vstv %s2082
        %v2214 = vsel %vm2190, %v2212, %v2213
        %v2215 = vsel %vm2191, %v2212, %v2213
        %v2216 = vstv %s2085
        %v2217 = vstv %s2084
        %v2218 = vsel %vm2190, %v2216, %v2217
        %v2219 = vsel %vm2191, %v2216, %v2217
        %v2220 = vsel %vm2194, %v2218, %v2214
        %v2221 = vsel %vm2195, %v2219, %v2215
        %v2222 = vstv %s2087
        %v2223 = vstv %s2086
        %v2224 = vsel %vm2190, %v2222, %v2223
        %v2225 = vsel %vm2191, %v2222, %v2223
        %v2226 = vstv %s2089
        %v2227 = vstv %s2088
        %v2228 = vsel %vm2190, %v2226, %v2227
        %v2229 = vsel %vm2191, %v2226, %v2227
        %v2230 = vsel %vm2194, %v2228, %v2224
        %v2231 = vsel %vm2195, %v2229, %v2225
        %v2232 = vsel %vm2198, %v2230, %v2220
        %v2233 = vsel %vm2199, %v2231, %v2221
        %v2234 = vstv %s2091
        %v2235 = vstv %s2090
        %v2236 = vsel %vm2190, %v2234, %v2235
        %v2237 = vsel %vm2191, %v2234, %v2235
        %v2238 = vstv %s2093
        %v2239 = vstv %s2092
        %v2240 = vsel %vm2190, %v2238, %v2239
        %v2241 = vsel %vm2191, %v2238, %v2239
        %v2242 = vsel %vm2194, %v2240, %v2236
        %v2243 = vsel %vm2195, %v2241, %v2237
        %v2244 = vstv %s2095
        %v2245 = vstv %s2094
        %v2246 = vsel %vm2190, %v2244, %v2245
        %v2247 = vsel %vm2191, %v2244, %v2245
        %v2248 = vstv %s2097
        %v2249 = vstv %s2096
        %v2250 = vsel %vm2190, %v2248, %v2249
        %v2251 = vsel %vm2191, %v2248, %v2249
        %v2252 = vsel %vm2194, %v2250, %v2246
        %v2253 = vsel %vm2195, %v2251, %v2247
        %v2254 = vsel %vm2198, %v2252, %v2242
        %v2255 = vsel %vm2199, %v2253, %v2243
        %v2256 = vsel %vm2202, %v2254, %v2232
        %v2257 = vsel %vm2203, %v2255, %v2233
        %v2258 = vstv %s2099
        %v2259 = vstv %s2098
        %v2260 = vsel %vm2190, %v2258, %v2259
        %v2261 = vsel %vm2191, %v2258, %v2259
        %v2262 = vstv %s2101
        %v2263 = vstv %s2100
        %v2264 = vsel %vm2190, %v2262, %v2263
        %v2265 = vsel %vm2191, %v2262, %v2263
        %v2266 = vsel %vm2194, %v2264, %v2260
        %v2267 = vsel %vm2195, %v2265, %v2261
        %v2268 = vstv %s2103
        %v2269 = vstv %s2102
        %v2270 = vsel %vm2190, %v2268, %v2269
        %v2271 = vsel %vm2191, %v2268, %v2269
        %v2272 = vstv %s2105
        %v2273 = vstv %s2104
        %v2274 = vsel %vm2190, %v2272, %v2273
        %v2275 = vsel %vm2191, %v2272, %v2273
        %v2276 = vsel %vm2194, %v2274, %v2270
        %v2277 = vsel %vm2195, %v2275, %v2271
        %v2278 = vsel %vm2198, %v2276, %v2266
        %v2279 = vsel %vm2199, %v2277, %v2267
        %v2280 = vstv %s2107
        %v2281 = vstv %s2106
        %v2282 = vsel %vm2190, %v2280, %v2281
        %v2283 = vsel %vm2191, %v2280, %v2281
        %v2284 = vstv %s2109
        %v2285 = vstv %s2108
        %v2286 = vsel %vm2190, %v2284, %v2285
        %v2287 = vsel %vm2191, %v2284, %v2285
        %v2288 = vsel %vm2194, %v2286, %v2282
        %v2289 = vsel %vm2195, %v2287, %v2283
        %v2290 = vstv %s2111
        %v2291 = vstv %s2110
        %v2292 = vsel %vm2190, %v2290, %v2291
        %v2293 = vsel %vm2191, %v2290, %v2291
        %v2294 = vstv %s2113
        %v2295 = vstv %s2112
        %v2296 = vsel %vm2190, %v2294, %v2295
        %v2297 = vsel %vm2191, %v2294, %v2295
        %v2298 = vsel %vm2194, %v2296, %v2292
        %v2299 = vsel %vm2195, %v2297, %v2293
        %v2300 = vsel %vm2198, %v2298, %v2288
        %v2301 = vsel %vm2199, %v2299, %v2289
        %v2302 = vsel %vm2202, %v2300, %v2278
        %v2303 = vsel %vm2203, %v2301, %v2279
        %v2304 = vsel %vm2206, %v2302, %v2256
        %v2305 = vsel %vm2207, %v2303, %v2257
        %v2306 = vstv %s2115
        %v2307 = vstv %s2114
        %v2308 = vsel %vm2190, %v2306, %v2307
        %v2309 = vsel %vm2191, %v2306, %v2307
        %v2310 = vstv %s2117
        %v2311 = vstv %s2116
        %v2312 = vsel %vm2190, %v2310, %v2311
        %v2313 = vsel %vm2191, %v2310, %v2311
        %v2314 = vsel %vm2194, %v2312, %v2308
        %v2315 = vsel %vm2195, %v2313, %v2309
        %v2316 = vstv %s2119
        %v2317 = vstv %s2118
        %v2318 = vsel %vm2190, %v2316, %v2317
        %v2319 = vsel %vm2191, %v2316, %v2317
        %v2320 = vstv %s2121
        %v2321 = vstv %s2120
        %v2322 = vsel %vm2190, %v2320, %v2321
        %v2323 = vsel %vm2191, %v2320, %v2321
        %v2324 = vsel %vm2194, %v2322, %v2318
        %v2325 = vsel %vm2195, %v2323, %v2319
        %v2326 = vsel %vm2198, %v2324, %v2314
        %v2327 = vsel %vm2199, %v2325, %v2315
        %v2328 = vstv %s2123
        %v2329 = vstv %s2122
        %v2330 = vsel %vm2190, %v2328, %v2329
        %v2331 = vsel %vm2191, %v2328, %v2329
        %v2332 = vstv %s2125
        %v2333 = vstv %s2124
        %v2334 = vsel %vm2190, %v2332, %v2333
        %v2335 = vsel %vm2191, %v2332, %v2333
        %v2336 = vsel %vm2194, %v2334, %v2330
        %v2337 = vsel %vm2195, %v2335, %v2331
        %v2338 = vstv %s2127
        %v2339 = vstv %s2126
        %v2340 = vsel %vm2190, %v2338, %v2339
        %v2341 = vsel %vm2191, %v2338, %v2339
        %v2342 = vstv %s2129
        %v2343 = vstv %s2128
        %v2344 = vsel %vm2190, %v2342, %v2343
        %v2345 = vsel %vm2191, %v2342, %v2343
        %v2346 = vsel %vm2194, %v2344, %v2340
        %v2347 = vsel %vm2195, %v2345, %v2341
        %v2348 = vsel %vm2198, %v2346, %v2336
        %v2349 = vsel %vm2199, %v2347, %v2337
        %v2350 = vsel %vm2202, %v2348, %v2326
        %v2351 = vsel %vm2203, %v2349, %v2327
        %v2352 = vstv %s2131
        %v2353 = vstv %s2130
        %v2354 = vsel %vm2190, %v2352, %v2353
        %v2355 = vsel %vm2191, %v2352, %v2353
        %v2356 = vstv %s2133
        %v2357 = vstv %s2132
        %v2358 = vsel %vm2190, %v2356, %v2357
        %v2359 = vsel %vm2191, %v2356, %v2357
        %v2360 = vsel %vm2194, %v2358, %v2354
        %v2361 = vsel %vm2195, %v2359, %v2355
        %v2362 = vstv %s2135
        %v2363 = vstv %s2134
        %v2364 = vsel %vm2190, %v2362, %v2363
        %v2365 = vsel %vm2191, %v2362, %v2363
        %v2366 = vstv %s2137
        %v2367 = vstv %s2136
        %v2368 = vsel %vm2190, %v2366, %v2367
        %v2369 = vsel %vm2191, %v2366, %v2367
        %v2370 = vsel %vm2194, %v2368, %v2364
        %v2371 = vsel %vm2195, %v2369, %v2365
        %v2372 = vsel %vm2198, %v2370, %v2360
        %v2373 = vsel %vm2199, %v2371, %v2361
        %v2374 = vstv %s2139
        %v2375 = vstv %s2138
        %v2376 = vsel %vm2190, %v2374, %v2375
        %v2377 = vsel %vm2191, %v2374, %v2375
        %v2378 = vstv %s2141
        %v2379 = vstv %s2140
        %v2380 = vsel %vm2190, %v2378, %v2379
        %v2381 = vsel %vm2191, %v2378, %v2379
        %v2382 = vsel %vm2194, %v2380, %v2376
        %v2383 = vsel %vm2195, %v2381, %v2377
        %v2384 = vstv %s2143
        %v2385 = vstv %s2142
        %v2386 = vsel %vm2190, %v2384, %v2385
        %v2387 = vsel %vm2191, %v2384, %v2385
        %v2388 = vstv %s2145
        %v2389 = vstv %s2144
        %v2390 = vsel %vm2190, %v2388, %v2389
        %v2391 = vsel %vm2191, %v2388, %v2389
        %v2392 = vsel %vm2194, %v2390, %v2386
        %v2393 = vsel %vm2195, %v2391, %v2387
        %v2394 = vsel %vm2198, %v2392, %v2382
        %v2395 = vsel %vm2199, %v2393, %v2383
        %v2396 = vsel %vm2202, %v2394, %v2372
        %v2397 = vsel %vm2203, %v2395, %v2373
        %v2398 = vsel %vm2206, %v2396, %v2350
        %v2399 = vsel %vm2207, %v2397, %v2351
        %v2400 = vsel %vm2210, %v2398, %v2304
        %v2401 = vsel %vm2211, %v2399, %v2305
        %v2402 = vmul.f32 %v2400, %v400
        %v2403 = vmul.f32 %v2401, %v401
        %v2404 = vsel %vm2186, %v2402, 0.0
        %v2405 = vsel %vm2187, %v2403, 0.0
        %s2406 = scalar_lea.vmem %s329, %s389 [#allocation7]
        %v2407 = vld [vmem:[%s2406] sm:$0xff]
        %v2408 = vld [vmem:[%s2406 + $0x8] sm:$0xff]
        %v2409 = vmul.f32 %v2404, %v2407
        %v2410 = vmul.f32 %v2405, %v2408
        %s2411 = scalar_lea.vmem %s329, %s1718 [#allocation7]
        %v2412 = vld [vmem:[%s2411] sm:$0xff]
        %v2413 = vld [vmem:[%s2411 + $0x8] sm:$0xff]
        %v2414 = vmul.f32 %v2404, %v2412
        %v2415 = vmul.f32 %v2405, %v2413
        %v2416 = vadd.f32 %v2051, %v2409
        %v2417 = vadd.f32 %v2052, %v2410
        %v2418 = vadd.f32 %v2053, %v2414
        %v2419 = vadd.f32 %v2054, %v2415
        %v2420 = vadd.f32 %v2063, %v2409
        %v2421 = vadd.f32 %v2064, %v2410
        %v2422 = vmul.f32 %v2063, %v2409
        %v2423 = vmul.f32 %v2064, %v2410
        %v2424 = vsub.f32 1.0, %v2422
        %v2425 = vsub.f32 1.0, %v2423
        %v2426 = vrcp.pop %v2424
        %v2427 = vrcp.pop %v2425
        %v2428 = vmul.f32 %v2420, %v2426
        %v2429 = vmul.f32 %v2421, %v2427
        %v2430 = vadd.f32 %v2073, %v2414
        %v2431 = vadd.f32 %v2074, %v2415
        %v2432 = vmul.f32 %v2073, %v2414
        %v2433 = vmul.f32 %v2074, %v2415
        %v2434 = vsub.f32 1.0, %v2432
        %v2435 = vsub.f32 1.0, %v2433
        %v2436 = vrcp.pop %v2434
        %v2437 = vrcp.pop %v2435
        %v2438 = vmul.f32 %v2430, %v2436
        %v2439 = vmul.f32 %v2431, %v2437
        %s2440 = sadd.s32 0, 96
        %s2441 = scalar_lea.vmem %s363, %s2440 [#allocation9]
        %2442 = vst [vmem:[%s2441] sm:$0xff] %v2148
        %2443 = vst [vmem:[%s2441 + $0x8] sm:$0xff] %v2149
        %s2444 = sadd.s32 %s370, 96
        %s2445 = scalar_lea.vmem %s363, %s2444 [#allocation9]
        %2446 = vst [vmem:[%s2445] sm:$0xff] %v2152
        %2447 = vst [vmem:[%s2445 + $0x8] sm:$0xff] %v2153
        %s2448 = sld [smem:[#allocation2 + $0x80]]
        %s2449 = sld [smem:[#allocation2 + $0x81]]
        %s2450 = sld [smem:[#allocation2 + $0x82]]
        %s2451 = sld [smem:[#allocation2 + $0x83]]
        %s2452 = sld [smem:[#allocation2 + $0x84]]
        %s2453 = sld [smem:[#allocation2 + $0x85]]
        %s2454 = sld [smem:[#allocation2 + $0x86]]
        %s2455 = sld [smem:[#allocation2 + $0x87]]
        %s2456 = sld [smem:[#allocation2 + $0x88]]
        %s2457 = sld [smem:[#allocation2 + $0x89]]
        %s2458 = sld [smem:[#allocation2 + $0x8a]]
        %s2459 = sld [smem:[#allocation2 + $0x8b]]
        %s2460 = sld [smem:[#allocation2 + $0x8c]]
        %s2461 = sld [smem:[#allocation2 + $0x8d]]
        %s2462 = sld [smem:[#allocation2 + $0x8e]]
        %s2463 = sld [smem:[#allocation2 + $0x8f]]
        %s2464 = sld [smem:[#allocation2 + $0x90]]
        %s2465 = sld [smem:[#allocation2 + $0x91]]
        %s2466 = sld [smem:[#allocation2 + $0x92]]
        %s2467 = sld [smem:[#allocation2 + $0x93]]
        %s2468 = sld [smem:[#allocation2 + $0x94]]
        %s2469 = sld [smem:[#allocation2 + $0x95]]
        %s2470 = sld [smem:[#allocation2 + $0x96]]
        %s2471 = sld [smem:[#allocation2 + $0x97]]
        %s2472 = sld [smem:[#allocation2 + $0x98]]
        %s2473 = sld [smem:[#allocation2 + $0x99]]
        %s2474 = sld [smem:[#allocation2 + $0x9a]]
        %s2475 = sld [smem:[#allocation2 + $0x9b]]
        %s2476 = sld [smem:[#allocation2 + $0x9c]]
        %s2477 = sld [smem:[#allocation2 + $0x9d]]
        %s2478 = sld [smem:[#allocation2 + $0x9e]]
        %s2479 = sld [smem:[#allocation2 + $0x9f]]
        %s2480 = sld [smem:[#allocation2 + $0xa0]]
        %s2481 = sld [smem:[#allocation2 + $0xa1]]
        %s2482 = sld [smem:[#allocation2 + $0xa2]]
        %s2483 = sld [smem:[#allocation2 + $0xa3]]
        %s2484 = sld [smem:[#allocation2 + $0xa4]]
        %s2485 = sld [smem:[#allocation2 + $0xa5]]
        %s2486 = sld [smem:[#allocation2 + $0xa6]]
        %s2487 = sld [smem:[#allocation2 + $0xa7]]
        %s2488 = sld [smem:[#allocation2 + $0xa8]]
        %s2489 = sld [smem:[#allocation2 + $0xa9]]
        %s2490 = sld [smem:[#allocation2 + $0xaa]]
        %s2491 = sld [smem:[#allocation2 + $0xab]]
        %s2492 = sld [smem:[#allocation2 + $0xac]]
        %s2493 = sld [smem:[#allocation2 + $0xad]]
        %s2494 = sld [smem:[#allocation2 + $0xae]]
        %s2495 = sld [smem:[#allocation2 + $0xaf]]
        %s2496 = sld [smem:[#allocation2 + $0xb0]]
        %s2497 = sld [smem:[#allocation2 + $0xb1]]
        %s2498 = sld [smem:[#allocation2 + $0xb2]]
        %s2499 = sld [smem:[#allocation2 + $0xb3]]
        %s2500 = sld [smem:[#allocation2 + $0xb4]]
        %s2501 = sld [smem:[#allocation2 + $0xb5]]
        %s2502 = sld [smem:[#allocation2 + $0xb6]]
        %s2503 = sld [smem:[#allocation2 + $0xb7]]
        %s2504 = sld [smem:[#allocation2 + $0xb8]]
        %s2505 = sld [smem:[#allocation2 + $0xb9]]
        %s2506 = sld [smem:[#allocation2 + $0xba]]
        %s2507 = sld [smem:[#allocation2 + $0xbb]]
        %s2508 = sld [smem:[#allocation2 + $0xbc]]
        %s2509 = sld [smem:[#allocation2 + $0xbd]]
        %s2510 = sld [smem:[#allocation2 + $0xbe]]
        %s2511 = sld [smem:[#allocation2 + $0xbf]]
        %v2512 = vmul.f32 %v2428, 0.1
        %v2513 = vmul.f32 %v2429, 0.1
        %v2514 = vadd.f32 %v2148, %v2512
        %v2515 = vadd.f32 %v2149, %v2513
        %v2516 = vmul.f32 %v2438, 0.1
        %v2517 = vmul.f32 %v2439, 0.1
        %v2518 = vadd.f32 %v2152, %v2516
        %v2519 = vadd.f32 %v2153, %v2517
        %v2520 = vmul.f32 %v2514, 10.0
        %v2521 = vmul.f32 %v2515, 10.0
        %v2522 = vfloor.f32 %v2520
        %v2523 = vfloor.f32 %v2521
        %v2524 = vmax.f32 %v2522, 0.0
        %v2525 = vmax.f32 %v2523, 0.0
        %v2526 = vmin.f32 %v2524, 7.0
        %v2527 = vmin.f32 %v2525, 7.0
        %v2528 = vcvt.f32.s32.to.zero.pseudo %v2526
        %v2529 = vcvt.f32.s32.to.zero.pseudo %v2527
        %v2530 = vmul.f32 %v2518, 10.0
        %v2531 = vmul.f32 %v2519, 10.0
        %v2532 = vfloor.f32 %v2530
        %v2533 = vfloor.f32 %v2531
        %v2534 = vmax.f32 %v2532, 0.0
        %v2535 = vmax.f32 %v2533, 0.0
        %v2536 = vmin.f32 %v2534, 7.0
        %v2537 = vmin.f32 %v2535, 7.0
        %v2538 = vcvt.f32.s32.to.zero.pseudo %v2536
        %v2539 = vcvt.f32.s32.to.zero.pseudo %v2537
        %vm2540 = vcmp.ge.f32.partialorder %v2514, 0.0
        %vm2541 = vcmp.ge.f32.partialorder %v2515, 0.0
        %vm2542 = vcmp.lt.f32.partialorder %v2514, 0.8
        %vm2543 = vcmp.lt.f32.partialorder %v2515, 0.8
        %vm2544 = vmand %vm2540, %vm2542
        %vm2545 = vmand %vm2541, %vm2543
        %vm2546 = vcmp.ge.f32.partialorder %v2518, 0.0
        %vm2547 = vcmp.ge.f32.partialorder %v2519, 0.0
        %vm2548 = vmand %vm2544, %vm2546
        %vm2549 = vmand %vm2545, %vm2547
        %vm2550 = vcmp.lt.f32.partialorder %v2518, 0.8
        %vm2551 = vcmp.lt.f32.partialorder %v2519, 0.8
        %vm2552 = vmand %vm2548, %vm2550
        %vm2553 = vmand %vm2549, %vm2551
        %v2554 = vand.u32 %v2538, 1
        %v2555 = vand.u32 %v2539, 1
        %vm2556 = vcmp.ne.s32.totalorder %v2554, 0
        %vm2557 = vcmp.ne.s32.totalorder %v2555, 0
        %v2558 = vand.u32 %v2538, 2
        %v2559 = vand.u32 %v2539, 2
        %vm2560 = vcmp.ne.s32.totalorder %v2558, 0
        %vm2561 = vcmp.ne.s32.totalorder %v2559, 0
        %v2562 = vand.u32 %v2538, 4
        %v2563 = vand.u32 %v2539, 4
        %vm2564 = vcmp.ne.s32.totalorder %v2562, 0
        %vm2565 = vcmp.ne.s32.totalorder %v2563, 0
        %v2566 = vand.u32 %v2528, 1
        %v2567 = vand.u32 %v2529, 1
        %vm2568 = vcmp.ne.s32.totalorder %v2566, 0
        %vm2569 = vcmp.ne.s32.totalorder %v2567, 0
        %v2570 = vand.u32 %v2528, 2
        %v2571 = vand.u32 %v2529, 2
        %vm2572 = vcmp.ne.s32.totalorder %v2570, 0
        %vm2573 = vcmp.ne.s32.totalorder %v2571, 0
        %v2574 = vand.u32 %v2528, 4
        %v2575 = vand.u32 %v2529, 4
        %vm2576 = vcmp.ne.s32.totalorder %v2574, 0
        %vm2577 = vcmp.ne.s32.totalorder %v2575, 0
        %v2578 = vstv %s2449
        %v2579 = vstv %s2448
        %v2580 = vsel %vm2556, %v2578, %v2579
        %v2581 = vsel %vm2557, %v2578, %v2579
        %v2582 = vstv %s2451
        %v2583 = vstv %s2450
        %v2584 = vsel %vm2556, %v2582, %v2583
        %v2585 = vsel %vm2557, %v2582, %v2583
        %v2586 = vsel %vm2560, %v2584, %v2580
        %v2587 = vsel %vm2561, %v2585, %v2581
        %v2588 = vstv %s2453
        %v2589 = vstv %s2452
        %v2590 = vsel %vm2556, %v2588, %v2589
        %v2591 = vsel %vm2557, %v2588, %v2589
        %v2592 = vstv %s2455
        %v2593 = vstv %s2454
        %v2594 = vsel %vm2556, %v2592, %v2593
        %v2595 = vsel %vm2557, %v2592, %v2593
        %v2596 = vsel %vm2560, %v2594, %v2590
        %v2597 = vsel %vm2561, %v2595, %v2591
        %v2598 = vsel %vm2564, %v2596, %v2586
        %v2599 = vsel %vm2565, %v2597, %v2587
        %v2600 = vstv %s2457
        %v2601 = vstv %s2456
        %v2602 = vsel %vm2556, %v2600, %v2601
        %v2603 = vsel %vm2557, %v2600, %v2601
        %v2604 = vstv %s2459
        %v2605 = vstv %s2458
        %v2606 = vsel %vm2556, %v2604, %v2605
        %v2607 = vsel %vm2557, %v2604, %v2605
        %v2608 = vsel %vm2560, %v2606, %v2602
        %v2609 = vsel %vm2561, %v2607, %v2603
        %v2610 = vstv %s2461
        %v2611 = vstv %s2460
        %v2612 = vsel %vm2556, %v2610, %v2611
        %v2613 = vsel %vm2557, %v2610, %v2611
        %v2614 = vstv %s2463
        %v2615 = vstv %s2462
        %v2616 = vsel %vm2556, %v2614, %v2615
        %v2617 = vsel %vm2557, %v2614, %v2615
        %v2618 = vsel %vm2560, %v2616, %v2612
        %v2619 = vsel %vm2561, %v2617, %v2613
        %v2620 = vsel %vm2564, %v2618, %v2608
        %v2621 = vsel %vm2565, %v2619, %v2609
        %v2622 = vsel %vm2568, %v2620, %v2598
        %v2623 = vsel %vm2569, %v2621, %v2599
        %v2624 = vstv %s2465
        %v2625 = vstv %s2464
        %v2626 = vsel %vm2556, %v2624, %v2625
        %v2627 = vsel %vm2557, %v2624, %v2625
        %v2628 = vstv %s2467
        %v2629 = vstv %s2466
        %v2630 = vsel %vm2556, %v2628, %v2629
        %v2631 = vsel %vm2557, %v2628, %v2629
        %v2632 = vsel %vm2560, %v2630, %v2626
        %v2633 = vsel %vm2561, %v2631, %v2627
        %v2634 = vstv %s2469
        %v2635 = vstv %s2468
        %v2636 = vsel %vm2556, %v2634, %v2635
        %v2637 = vsel %vm2557, %v2634, %v2635
        %v2638 = vstv %s2471
        %v2639 = vstv %s2470
        %v2640 = vsel %vm2556, %v2638, %v2639
        %v2641 = vsel %vm2557, %v2638, %v2639
        %v2642 = vsel %vm2560, %v2640, %v2636
        %v2643 = vsel %vm2561, %v2641, %v2637
        %v2644 = vsel %vm2564, %v2642, %v2632
        %v2645 = vsel %vm2565, %v2643, %v2633
        %v2646 = vstv %s2473
        %v2647 = vstv %s2472
        %v2648 = vsel %vm2556, %v2646, %v2647
        %v2649 = vsel %vm2557, %v2646, %v2647
        %v2650 = vstv %s2475
        %v2651 = vstv %s2474
        %v2652 = vsel %vm2556, %v2650, %v2651
        %v2653 = vsel %vm2557, %v2650, %v2651
        %v2654 = vsel %vm2560, %v2652, %v2648
        %v2655 = vsel %vm2561, %v2653, %v2649
        %v2656 = vstv %s2477
        %v2657 = vstv %s2476
        %v2658 = vsel %vm2556, %v2656, %v2657
        %v2659 = vsel %vm2557, %v2656, %v2657
        %v2660 = vstv %s2479
        %v2661 = vstv %s2478
        %v2662 = vsel %vm2556, %v2660, %v2661
        %v2663 = vsel %vm2557, %v2660, %v2661
        %v2664 = vsel %vm2560, %v2662, %v2658
        %v2665 = vsel %vm2561, %v2663, %v2659
        %v2666 = vsel %vm2564, %v2664, %v2654
        %v2667 = vsel %vm2565, %v2665, %v2655
        %v2668 = vsel %vm2568, %v2666, %v2644
        %v2669 = vsel %vm2569, %v2667, %v2645
        %v2670 = vsel %vm2572, %v2668, %v2622
        %v2671 = vsel %vm2573, %v2669, %v2623
        %v2672 = vstv %s2481
        %v2673 = vstv %s2480
        %v2674 = vsel %vm2556, %v2672, %v2673
        %v2675 = vsel %vm2557, %v2672, %v2673
        %v2676 = vstv %s2483
        %v2677 = vstv %s2482
        %v2678 = vsel %vm2556, %v2676, %v2677
        %v2679 = vsel %vm2557, %v2676, %v2677
        %v2680 = vsel %vm2560, %v2678, %v2674
        %v2681 = vsel %vm2561, %v2679, %v2675
        %v2682 = vstv %s2485
        %v2683 = vstv %s2484
        %v2684 = vsel %vm2556, %v2682, %v2683
        %v2685 = vsel %vm2557, %v2682, %v2683
        %v2686 = vstv %s2487
        %v2687 = vstv %s2486
        %v2688 = vsel %vm2556, %v2686, %v2687
        %v2689 = vsel %vm2557, %v2686, %v2687
        %v2690 = vsel %vm2560, %v2688, %v2684
        %v2691 = vsel %vm2561, %v2689, %v2685
        %v2692 = vsel %vm2564, %v2690, %v2680
        %v2693 = vsel %vm2565, %v2691, %v2681
        %v2694 = vstv %s2489
        %v2695 = vstv %s2488
        %v2696 = vsel %vm2556, %v2694, %v2695
        %v2697 = vsel %vm2557, %v2694, %v2695
        %v2698 = vstv %s2491
        %v2699 = vstv %s2490
        %v2700 = vsel %vm2556, %v2698, %v2699
        %v2701 = vsel %vm2557, %v2698, %v2699
        %v2702 = vsel %vm2560, %v2700, %v2696
        %v2703 = vsel %vm2561, %v2701, %v2697
        %v2704 = vstv %s2493
        %v2705 = vstv %s2492
        %v2706 = vsel %vm2556, %v2704, %v2705
        %v2707 = vsel %vm2557, %v2704, %v2705
        %v2708 = vstv %s2495
        %v2709 = vstv %s2494
        %v2710 = vsel %vm2556, %v2708, %v2709
        %v2711 = vsel %vm2557, %v2708, %v2709
        %v2712 = vsel %vm2560, %v2710, %v2706
        %v2713 = vsel %vm2561, %v2711, %v2707
        %v2714 = vsel %vm2564, %v2712, %v2702
        %v2715 = vsel %vm2565, %v2713, %v2703
        %v2716 = vsel %vm2568, %v2714, %v2692
        %v2717 = vsel %vm2569, %v2715, %v2693
        %v2718 = vstv %s2497
        %v2719 = vstv %s2496
        %v2720 = vsel %vm2556, %v2718, %v2719
        %v2721 = vsel %vm2557, %v2718, %v2719
        %v2722 = vstv %s2499
        %v2723 = vstv %s2498
        %v2724 = vsel %vm2556, %v2722, %v2723
        %v2725 = vsel %vm2557, %v2722, %v2723
        %v2726 = vsel %vm2560, %v2724, %v2720
        %v2727 = vsel %vm2561, %v2725, %v2721
        %v2728 = vstv %s2501
        %v2729 = vstv %s2500
        %v2730 = vsel %vm2556, %v2728, %v2729
        %v2731 = vsel %vm2557, %v2728, %v2729
        %v2732 = vstv %s2503
        %v2733 = vstv %s2502
        %v2734 = vsel %vm2556, %v2732, %v2733
        %v2735 = vsel %vm2557, %v2732, %v2733
        %v2736 = vsel %vm2560, %v2734, %v2730
        %v2737 = vsel %vm2561, %v2735, %v2731
        %v2738 = vsel %vm2564, %v2736, %v2726
        %v2739 = vsel %vm2565, %v2737, %v2727
        %v2740 = vstv %s2505
        %v2741 = vstv %s2504
        %v2742 = vsel %vm2556, %v2740, %v2741
        %v2743 = vsel %vm2557, %v2740, %v2741
        %v2744 = vstv %s2507
        %v2745 = vstv %s2506
        %v2746 = vsel %vm2556, %v2744, %v2745
        %v2747 = vsel %vm2557, %v2744, %v2745
        %v2748 = vsel %vm2560, %v2746, %v2742
        %v2749 = vsel %vm2561, %v2747, %v2743
        %v2750 = vstv %s2509
        %v2751 = vstv %s2508
        %v2752 = vsel %vm2556, %v2750, %v2751
        %v2753 = vsel %vm2557, %v2750, %v2751
        %v2754 = vstv %s2511
        %v2755 = vstv %s2510
        %v2756 = vsel %vm2556, %v2754, %v2755
        %v2757 = vsel %vm2557, %v2754, %v2755
        %v2758 = vsel %vm2560, %v2756, %v2752
        %v2759 = vsel %vm2561, %v2757, %v2753
        %v2760 = vsel %vm2564, %v2758, %v2748
        %v2761 = vsel %vm2565, %v2759, %v2749
        %v2762 = vsel %vm2568, %v2760, %v2738
        %v2763 = vsel %vm2569, %v2761, %v2739
        %v2764 = vsel %vm2572, %v2762, %v2716
        %v2765 = vsel %vm2573, %v2763, %v2717
        %v2766 = vsel %vm2576, %v2764, %v2670
        %v2767 = vsel %vm2577, %v2765, %v2671
        %v2768 = vmul.f32 %v2766, %v400
        %v2769 = vmul.f32 %v2767, %v401
        %v2770 = vsel %vm2552, %v2768, 0.0
        %v2771 = vsel %vm2553, %v2769, 0.0
        %s2772 = scalar_lea.vmem %s329, %s378 [#allocation7]
        %v2773 = vld [vmem:[%s2772] sm:$0xff]
        %v2774 = vld [vmem:[%s2772 + $0x8] sm:$0xff]
        %v2775 = vmul.f32 %v2770, %v2773
        %v2776 = vmul.f32 %v2771, %v2774
        %s2777 = scalar_lea.vmem %s329, %s2078 [#allocation7]
        %v2778 = vld [vmem:[%s2777] sm:$0xff]
        %v2779 = vld [vmem:[%s2777 + $0x8] sm:$0xff]
        %v2780 = vmul.f32 %v2770, %v2778
        %v2781 = vmul.f32 %v2771, %v2779
        %v2782 = vadd.f32 %v2416, %v2775
        %v2783 = vadd.f32 %v2417, %v2776
        %v2784 = vadd.f32 %v2418, %v2780
        %v2785 = vadd.f32 %v2419, %v2781
        %v2786 = vadd.f32 %v2428, %v2775
        %v2787 = vadd.f32 %v2429, %v2776
        %v2788 = vmul.f32 %v2428, %v2775
        %v2789 = vmul.f32 %v2429, %v2776
        %v2790 = vsub.f32 1.0, %v2788
        %v2791 = vsub.f32 1.0, %v2789
        %v2792 = vrcp.pop %v2790
        %v2793 = vrcp.pop %v2791
        %v2794 = vmul.f32 %v2786, %v2792
        %v2795 = vmul.f32 %v2787, %v2793
        %v2796 = vadd.f32 %v2438, %v2780
        %v2797 = vadd.f32 %v2439, %v2781
        %v2798 = vmul.f32 %v2438, %v2780
        %v2799 = vmul.f32 %v2439, %v2781
        %v2800 = vsub.f32 1.0, %v2798
        %v2801 = vsub.f32 1.0, %v2799
        %v2802 = vrcp.pop %v2800
        %v2803 = vrcp.pop %v2801
        %v2804 = vmul.f32 %v2796, %v2802
        %v2805 = vmul.f32 %v2797, %v2803
        %s2806 = sadd.s32 0, 128
        %s2807 = scalar_lea.vmem %s363, %s2806 [#allocation9]
        %2808 = vst [vmem:[%s2807] sm:$0xff] %v2514
        %2809 = vst [vmem:[%s2807 + $0x8] sm:$0xff] %v2515
        %s2810 = sadd.s32 %s370, 128
        %s2811 = scalar_lea.vmem %s363, %s2810 [#allocation9]
        %2812 = vst [vmem:[%s2811] sm:$0xff] %v2518
        %2813 = vst [vmem:[%s2811 + $0x8] sm:$0xff] %v2519
        %s2814 = sld [smem:[#allocation2 + $0xc0]]
        %s2815 = sld [smem:[#allocation2 + $0xc1]]
        %s2816 = sld [smem:[#allocation2 + $0xc2]]
        %s2817 = sld [smem:[#allocation2 + $0xc3]]
        %s2818 = sld [smem:[#allocation2 + $0xc4]]
        %s2819 = sld [smem:[#allocation2 + $0xc5]]
        %s2820 = sld [smem:[#allocation2 + $0xc6]]
        %s2821 = sld [smem:[#allocation2 + $0xc7]]
        %s2822 = sld [smem:[#allocation2 + $0xc8]]
        %s2823 = sld [smem:[#allocation2 + $0xc9]]
        %s2824 = sld [smem:[#allocation2 + $0xca]]
        %s2825 = sld [smem:[#allocation2 + $0xcb]]
        %s2826 = sld [smem:[#allocation2 + $0xcc]]
        %s2827 = sld [smem:[#allocation2 + $0xcd]]
        %s2828 = sld [smem:[#allocation2 + $0xce]]
        %s2829 = sld [smem:[#allocation2 + $0xcf]]
        %s2830 = sld [smem:[#allocation2 + $0xd0]]
        %s2831 = sld [smem:[#allocation2 + $0xd1]]
        %s2832 = sld [smem:[#allocation2 + $0xd2]]
        %s2833 = sld [smem:[#allocation2 + $0xd3]]
        %s2834 = sld [smem:[#allocation2 + $0xd4]]
        %s2835 = sld [smem:[#allocation2 + $0xd5]]
        %s2836 = sld [smem:[#allocation2 + $0xd6]]
        %s2837 = sld [smem:[#allocation2 + $0xd7]]
        %s2838 = sld [smem:[#allocation2 + $0xd8]]
        %s2839 = sld [smem:[#allocation2 + $0xd9]]
        %s2840 = sld [smem:[#allocation2 + $0xda]]
        %s2841 = sld [smem:[#allocation2 + $0xdb]]
        %s2842 = sld [smem:[#allocation2 + $0xdc]]
        %s2843 = sld [smem:[#allocation2 + $0xdd]]
        %s2844 = sld [smem:[#allocation2 + $0xde]]
        %s2845 = sld [smem:[#allocation2 + $0xdf]]
        %s2846 = sld [smem:[#allocation2 + $0xe0]]
        %s2847 = sld [smem:[#allocation2 + $0xe1]]
        %s2848 = sld [smem:[#allocation2 + $0xe2]]
        %s2849 = sld [smem:[#allocation2 + $0xe3]]
        %s2850 = sld [smem:[#allocation2 + $0xe4]]
        %s2851 = sld [smem:[#allocation2 + $0xe5]]
        %s2852 = sld [smem:[#allocation2 + $0xe6]]
        %s2853 = sld [smem:[#allocation2 + $0xe7]]
        %s2854 = sld [smem:[#allocation2 + $0xe8]]
        %s2855 = sld [smem:[#allocation2 + $0xe9]]
        %s2856 = sld [smem:[#allocation2 + $0xea]]
        %s2857 = sld [smem:[#allocation2 + $0xeb]]
        %s2858 = sld [smem:[#allocation2 + $0xec]]
        %s2859 = sld [smem:[#allocation2 + $0xed]]
        %s2860 = sld [smem:[#allocation2 + $0xee]]
        %s2861 = sld [smem:[#allocation2 + $0xef]]
        %s2862 = sld [smem:[#allocation2 + $0xf0]]
        %s2863 = sld [smem:[#allocation2 + $0xf1]]
        %s2864 = sld [smem:[#allocation2 + $0xf2]]
        %s2865 = sld [smem:[#allocation2 + $0xf3]]
        %s2866 = sld [smem:[#allocation2 + $0xf4]]
        %s2867 = sld [smem:[#allocation2 + $0xf5]]
        %s2868 = sld [smem:[#allocation2 + $0xf6]]
        %s2869 = sld [smem:[#allocation2 + $0xf7]]
        %s2870 = sld [smem:[#allocation2 + $0xf8]]
        %s2871 = sld [smem:[#allocation2 + $0xf9]]
        %s2872 = sld [smem:[#allocation2 + $0xfa]]
        %s2873 = sld [smem:[#allocation2 + $0xfb]]
        %s2874 = sld [smem:[#allocation2 + $0xfc]]
        %s2875 = sld [smem:[#allocation2 + $0xfd]]
        %s2876 = sld [smem:[#allocation2 + $0xfe]]
        %s2877 = sld [smem:[#allocation2 + $0xff]]
        %v2878 = vmul.f32 %v2794, 0.1
        %v2879 = vmul.f32 %v2795, 0.1
        %v2880 = vadd.f32 %v2514, %v2878
        %v2881 = vadd.f32 %v2515, %v2879
        %v2882 = vmul.f32 %v2804, 0.1
        %v2883 = vmul.f32 %v2805, 0.1
        %v2884 = vadd.f32 %v2518, %v2882
        %v2885 = vadd.f32 %v2519, %v2883
        %v2886 = vmul.f32 %v2880, 10.0
        %v2887 = vmul.f32 %v2881, 10.0
        %v2888 = vfloor.f32 %v2886
        %v2889 = vfloor.f32 %v2887
        %v2890 = vmax.f32 %v2888, 0.0
        %v2891 = vmax.f32 %v2889, 0.0
        %v2892 = vmin.f32 %v2890, 7.0
        %v2893 = vmin.f32 %v2891, 7.0
        %v2894 = vcvt.f32.s32.to.zero.pseudo %v2892
        %v2895 = vcvt.f32.s32.to.zero.pseudo %v2893
        %v2896 = vmul.f32 %v2884, 10.0
        %v2897 = vmul.f32 %v2885, 10.0
        %v2898 = vfloor.f32 %v2896
        %v2899 = vfloor.f32 %v2897
        %v2900 = vmax.f32 %v2898, 0.0
        %v2901 = vmax.f32 %v2899, 0.0
        %v2902 = vmin.f32 %v2900, 7.0
        %v2903 = vmin.f32 %v2901, 7.0
        %v2904 = vcvt.f32.s32.to.zero.pseudo %v2902
        %v2905 = vcvt.f32.s32.to.zero.pseudo %v2903
        %vm2906 = vcmp.ge.f32.partialorder %v2880, 0.0
        %vm2907 = vcmp.ge.f32.partialorder %v2881, 0.0
        %vm2908 = vcmp.lt.f32.partialorder %v2880, 0.8
        %vm2909 = vcmp.lt.f32.partialorder %v2881, 0.8
        %vm2910 = vmand %vm2906, %vm2908
        %vm2911 = vmand %vm2907, %vm2909
        %vm2912 = vcmp.ge.f32.partialorder %v2884, 0.0
        %vm2913 = vcmp.ge.f32.partialorder %v2885, 0.0
        %vm2914 = vmand %vm2910, %vm2912
        %vm2915 = vmand %vm2911, %vm2913
        %vm2916 = vcmp.lt.f32.partialorder %v2884, 0.8
        %vm2917 = vcmp.lt.f32.partialorder %v2885, 0.8
        %vm2918 = vmand %vm2914, %vm2916
        %vm2919 = vmand %vm2915, %vm2917
        %v2920 = vand.u32 %v2904, 1
        %v2921 = vand.u32 %v2905, 1
        %vm2922 = vcmp.ne.s32.totalorder %v2920, 0
        %vm2923 = vcmp.ne.s32.totalorder %v2921, 0
        %v2924 = vand.u32 %v2904, 2
        %v2925 = vand.u32 %v2905, 2
        %vm2926 = vcmp.ne.s32.totalorder %v2924, 0
        %vm2927 = vcmp.ne.s32.totalorder %v2925, 0
        %v2928 = vand.u32 %v2904, 4
        %v2929 = vand.u32 %v2905, 4
        %vm2930 = vcmp.ne.s32.totalorder %v2928, 0
        %vm2931 = vcmp.ne.s32.totalorder %v2929, 0
        %v2932 = vand.u32 %v2894, 1
        %v2933 = vand.u32 %v2895, 1
        %vm2934 = vcmp.ne.s32.totalorder %v2932, 0
        %vm2935 = vcmp.ne.s32.totalorder %v2933, 0
        %v2936 = vand.u32 %v2894, 2
        %v2937 = vand.u32 %v2895, 2
        %vm2938 = vcmp.ne.s32.totalorder %v2936, 0
        %vm2939 = vcmp.ne.s32.totalorder %v2937, 0
        %v2940 = vand.u32 %v2894, 4
        %v2941 = vand.u32 %v2895, 4
        %vm2942 = vcmp.ne.s32.totalorder %v2940, 0
        %vm2943 = vcmp.ne.s32.totalorder %v2941, 0
        %v2944 = vstv %s2815
        %v2945 = vstv %s2814
        %v2946 = vsel %vm2922, %v2944, %v2945
        %v2947 = vsel %vm2923, %v2944, %v2945
        %v2948 = vstv %s2817
        %v2949 = vstv %s2816
        %v2950 = vsel %vm2922, %v2948, %v2949
        %v2951 = vsel %vm2923, %v2948, %v2949
        %v2952 = vsel %vm2926, %v2950, %v2946
        %v2953 = vsel %vm2927, %v2951, %v2947
        %v2954 = vstv %s2819
        %v2955 = vstv %s2818
        %v2956 = vsel %vm2922, %v2954, %v2955
        %v2957 = vsel %vm2923, %v2954, %v2955
        %v2958 = vstv %s2821
        %v2959 = vstv %s2820
        %v2960 = vsel %vm2922, %v2958, %v2959
        %v2961 = vsel %vm2923, %v2958, %v2959
        %v2962 = vsel %vm2926, %v2960, %v2956
        %v2963 = vsel %vm2927, %v2961, %v2957
        %v2964 = vsel %vm2930, %v2962, %v2952
        %v2965 = vsel %vm2931, %v2963, %v2953
        %v2966 = vstv %s2823
        %v2967 = vstv %s2822
        %v2968 = vsel %vm2922, %v2966, %v2967
        %v2969 = vsel %vm2923, %v2966, %v2967
        %v2970 = vstv %s2825
        %v2971 = vstv %s2824
        %v2972 = vsel %vm2922, %v2970, %v2971
        %v2973 = vsel %vm2923, %v2970, %v2971
        %v2974 = vsel %vm2926, %v2972, %v2968
        %v2975 = vsel %vm2927, %v2973, %v2969
        %v2976 = vstv %s2827
        %v2977 = vstv %s2826
        %v2978 = vsel %vm2922, %v2976, %v2977
        %v2979 = vsel %vm2923, %v2976, %v2977
        %v2980 = vstv %s2829
        %v2981 = vstv %s2828
        %v2982 = vsel %vm2922, %v2980, %v2981
        %v2983 = vsel %vm2923, %v2980, %v2981
        %v2984 = vsel %vm2926, %v2982, %v2978
        %v2985 = vsel %vm2927, %v2983, %v2979
        %v2986 = vsel %vm2930, %v2984, %v2974
        %v2987 = vsel %vm2931, %v2985, %v2975
        %v2988 = vsel %vm2934, %v2986, %v2964
        %v2989 = vsel %vm2935, %v2987, %v2965
        %v2990 = vstv %s2831
        %v2991 = vstv %s2830
        %v2992 = vsel %vm2922, %v2990, %v2991
        %v2993 = vsel %vm2923, %v2990, %v2991
        %v2994 = vstv %s2833
        %v2995 = vstv %s2832
        %v2996 = vsel %vm2922, %v2994, %v2995
        %v2997 = vsel %vm2923, %v2994, %v2995
        %v2998 = vsel %vm2926, %v2996, %v2992
        %v2999 = vsel %vm2927, %v2997, %v2993
        %v3000 = vstv %s2835
        %v3001 = vstv %s2834
        %v3002 = vsel %vm2922, %v3000, %v3001
        %v3003 = vsel %vm2923, %v3000, %v3001
        %v3004 = vstv %s2837
        %v3005 = vstv %s2836
        %v3006 = vsel %vm2922, %v3004, %v3005
        %v3007 = vsel %vm2923, %v3004, %v3005
        %v3008 = vsel %vm2926, %v3006, %v3002
        %v3009 = vsel %vm2927, %v3007, %v3003
        %v3010 = vsel %vm2930, %v3008, %v2998
        %v3011 = vsel %vm2931, %v3009, %v2999
        %v3012 = vstv %s2839
        %v3013 = vstv %s2838
        %v3014 = vsel %vm2922, %v3012, %v3013
        %v3015 = vsel %vm2923, %v3012, %v3013
        %v3016 = vstv %s2841
        %v3017 = vstv %s2840
        %v3018 = vsel %vm2922, %v3016, %v3017
        %v3019 = vsel %vm2923, %v3016, %v3017
        %v3020 = vsel %vm2926, %v3018, %v3014
        %v3021 = vsel %vm2927, %v3019, %v3015
        %v3022 = vstv %s2843
        %v3023 = vstv %s2842
        %v3024 = vsel %vm2922, %v3022, %v3023
        %v3025 = vsel %vm2923, %v3022, %v3023
        %v3026 = vstv %s2845
        %v3027 = vstv %s2844
        %v3028 = vsel %vm2922, %v3026, %v3027
        %v3029 = vsel %vm2923, %v3026, %v3027
        %v3030 = vsel %vm2926, %v3028, %v3024
        %v3031 = vsel %vm2927, %v3029, %v3025
        %v3032 = vsel %vm2930, %v3030, %v3020
        %v3033 = vsel %vm2931, %v3031, %v3021
        %v3034 = vsel %vm2934, %v3032, %v3010
        %v3035 = vsel %vm2935, %v3033, %v3011
        %v3036 = vsel %vm2938, %v3034, %v2988
        %v3037 = vsel %vm2939, %v3035, %v2989
        %v3038 = vstv %s2847
        %v3039 = vstv %s2846
        %v3040 = vsel %vm2922, %v3038, %v3039
        %v3041 = vsel %vm2923, %v3038, %v3039
        %v3042 = vstv %s2849
        %v3043 = vstv %s2848
        %v3044 = vsel %vm2922, %v3042, %v3043
        %v3045 = vsel %vm2923, %v3042, %v3043
        %v3046 = vsel %vm2926, %v3044, %v3040
        %v3047 = vsel %vm2927, %v3045, %v3041
        %v3048 = vstv %s2851
        %v3049 = vstv %s2850
        %v3050 = vsel %vm2922, %v3048, %v3049
        %v3051 = vsel %vm2923, %v3048, %v3049
        %v3052 = vstv %s2853
        %v3053 = vstv %s2852
        %v3054 = vsel %vm2922, %v3052, %v3053
        %v3055 = vsel %vm2923, %v3052, %v3053
        %v3056 = vsel %vm2926, %v3054, %v3050
        %v3057 = vsel %vm2927, %v3055, %v3051
        %v3058 = vsel %vm2930, %v3056, %v3046
        %v3059 = vsel %vm2931, %v3057, %v3047
        %v3060 = vstv %s2855
        %v3061 = vstv %s2854
        %v3062 = vsel %vm2922, %v3060, %v3061
        %v3063 = vsel %vm2923, %v3060, %v3061
        %v3064 = vstv %s2857
        %v3065 = vstv %s2856
        %v3066 = vsel %vm2922, %v3064, %v3065
        %v3067 = vsel %vm2923, %v3064, %v3065
        %v3068 = vsel %vm2926, %v3066, %v3062
        %v3069 = vsel %vm2927, %v3067, %v3063
        %v3070 = vstv %s2859
        %v3071 = vstv %s2858
        %v3072 = vsel %vm2922, %v3070, %v3071
        %v3073 = vsel %vm2923, %v3070, %v3071
        %v3074 = vstv %s2861
        %v3075 = vstv %s2860
        %v3076 = vsel %vm2922, %v3074, %v3075
        %v3077 = vsel %vm2923, %v3074, %v3075
        %v3078 = vsel %vm2926, %v3076, %v3072
        %v3079 = vsel %vm2927, %v3077, %v3073
        %v3080 = vsel %vm2930, %v3078, %v3068
        %v3081 = vsel %vm2931, %v3079, %v3069
        %v3082 = vsel %vm2934, %v3080, %v3058
        %v3083 = vsel %vm2935, %v3081, %v3059
        %v3084 = vstv %s2863
        %v3085 = vstv %s2862
        %v3086 = vsel %vm2922, %v3084, %v3085
        %v3087 = vsel %vm2923, %v3084, %v3085
        %v3088 = vstv %s2865
        %v3089 = vstv %s2864
        %v3090 = vsel %vm2922, %v3088, %v3089
        %v3091 = vsel %vm2923, %v3088, %v3089
        %v3092 = vsel %vm2926, %v3090, %v3086
        %v3093 = vsel %vm2927, %v3091, %v3087
        %v3094 = vstv %s2867
        %v3095 = vstv %s2866
        %v3096 = vsel %vm2922, %v3094, %v3095
        %v3097 = vsel %vm2923, %v3094, %v3095
        %v3098 = vstv %s2869
        %v3099 = vstv %s2868
        %v3100 = vsel %vm2922, %v3098, %v3099
        %v3101 = vsel %vm2923, %v3098, %v3099
        %v3102 = vsel %vm2926, %v3100, %v3096
        %v3103 = vsel %vm2927, %v3101, %v3097
        %v3104 = vsel %vm2930, %v3102, %v3092
        %v3105 = vsel %vm2931, %v3103, %v3093
        %v3106 = vstv %s2871
        %v3107 = vstv %s2870
        %v3108 = vsel %vm2922, %v3106, %v3107
        %v3109 = vsel %vm2923, %v3106, %v3107
        %v3110 = vstv %s2873
        %v3111 = vstv %s2872
        %v3112 = vsel %vm2922, %v3110, %v3111
        %v3113 = vsel %vm2923, %v3110, %v3111
        %v3114 = vsel %vm2926, %v3112, %v3108
        %v3115 = vsel %vm2927, %v3113, %v3109
        %v3116 = vstv %s2875
        %v3117 = vstv %s2874
        %v3118 = vsel %vm2922, %v3116, %v3117
        %v3119 = vsel %vm2923, %v3116, %v3117
        %v3120 = vstv %s2877
        %v3121 = vstv %s2876
        %v3122 = vsel %vm2922, %v3120, %v3121
        %v3123 = vsel %vm2923, %v3120, %v3121
        %v3124 = vsel %vm2926, %v3122, %v3118
        %v3125 = vsel %vm2927, %v3123, %v3119
        %v3126 = vsel %vm2930, %v3124, %v3114
        %v3127 = vsel %vm2931, %v3125, %v3115
        %v3128 = vsel %vm2934, %v3126, %v3104
        %v3129 = vsel %vm2935, %v3127, %v3105
        %v3130 = vsel %vm2938, %v3128, %v3082
        %v3131 = vsel %vm2939, %v3129, %v3083
        %v3132 = vsel %vm2942, %v3130, %v3036
        %v3133 = vsel %vm2943, %v3131, %v3037
        %v3134 = vmul.f32 %v3132, %v400
        %v3135 = vmul.f32 %v3133, %v401
        %v3136 = vsel %vm2918, %v3134, 0.0
        %v3137 = vsel %vm2919, %v3135, 0.0
        %s3138 = scalar_lea.vmem %s329, %s2440 [#allocation7]
        %v3139 = vld [vmem:[%s3138] sm:$0xff]
        %v3140 = vld [vmem:[%s3138 + $0x8] sm:$0xff]
        %v3141 = vmul.f32 %v3136, %v3139
        %v3142 = vmul.f32 %v3137, %v3140
        %s3143 = scalar_lea.vmem %s329, %s2444 [#allocation7]
        %v3144 = vld [vmem:[%s3143] sm:$0xff]
        %v3145 = vld [vmem:[%s3143 + $0x8] sm:$0xff]
        %v3146 = vmul.f32 %v3136, %v3144
        %v3147 = vmul.f32 %v3137, %v3145
        %v3148 = vadd.f32 %v2782, %v3141
        %v3149 = vadd.f32 %v2783, %v3142
        %v3150 = vadd.f32 %v2784, %v3146
        %v3151 = vadd.f32 %v2785, %v3147
        %v3152 = vadd.f32 %v2794, %v3141
        %v3153 = vadd.f32 %v2795, %v3142
        %v3154 = vmul.f32 %v2794, %v3141
        %v3155 = vmul.f32 %v2795, %v3142
        %v3156 = vsub.f32 1.0, %v3154
        %v3157 = vsub.f32 1.0, %v3155
        %v3158 = vrcp.pop %v3156
        %v3159 = vrcp.pop %v3157
        %v3160 = vmul.f32 %v3152, %v3158
        %v3161 = vmul.f32 %v3153, %v3159
        %v3162 = vadd.f32 %v2804, %v3146
        %v3163 = vadd.f32 %v2805, %v3147
        %v3164 = vmul.f32 %v2804, %v3146
        %v3165 = vmul.f32 %v2805, %v3147
        %v3166 = vsub.f32 1.0, %v3164
        %v3167 = vsub.f32 1.0, %v3165
        %v3168 = vrcp.pop %v3166
        %v3169 = vrcp.pop %v3167
        %v3170 = vmul.f32 %v3162, %v3168
        %v3171 = vmul.f32 %v3163, %v3169
        %s3172 = sadd.s32 0, 160
        %s3173 = scalar_lea.vmem %s363, %s3172 [#allocation9]
        %3174 = vst [vmem:[%s3173] sm:$0xff] %v2880
        %3175 = vst [vmem:[%s3173 + $0x8] sm:$0xff] %v2881
        %s3176 = sadd.s32 %s370, 160
        %s3177 = scalar_lea.vmem %s363, %s3176 [#allocation9]
        %3178 = vst [vmem:[%s3177] sm:$0xff] %v2884
        %3179 = vst [vmem:[%s3177 + $0x8] sm:$0xff] %v2885
        %v3180 = vmul.f32 %v3160, 0.1
        %v3181 = vmul.f32 %v3161, 0.1
        %v3182 = vadd.f32 %v2880, %v3180
        %v3183 = vadd.f32 %v2881, %v3181
        %v3184 = vmul.f32 %v3170, 0.1
        %v3185 = vmul.f32 %v3171, 0.1
        %v3186 = vadd.f32 %v2884, %v3184
        %v3187 = vadd.f32 %v2885, %v3185
        %s3188 = sadd.s32 0, 192
        %s3189 = scalar_lea.vmem %s363, %s3188 [#allocation9]
        %3190 = vst [vmem:[%s3189] sm:$0xff] %v3182
        %3191 = vst [vmem:[%s3189 + $0x8] sm:$0xff] %v3183
        %s3192 = sadd.s32 %s370, 192
        %s3193 = scalar_lea.vmem %s363, %s3192 [#allocation9]
        %3194 = vst [vmem:[%s3193] sm:$0xff] %v3186
        %3195 = vst [vmem:[%s3193 + $0x8] sm:$0xff] %v3187
        %v3196 = vadd.f32 %v3182, %v3180
        %v3197 = vadd.f32 %v3183, %v3181
        %v3198 = vadd.f32 %v3186, %v3184
        %v3199 = vadd.f32 %v3187, %v3185
        %s3200 = sadd.s32 0, 224
        %s3201 = scalar_lea.vmem %s363, %s3200 [#allocation9]
        %3202 = vst [vmem:[%s3201] sm:$0xff] %v3196
        %3203 = vst [vmem:[%s3201 + $0x8] sm:$0xff] %v3197
        %s3204 = sadd.s32 %s370, 224
        %s3205 = scalar_lea.vmem %s363, %s3204 [#allocation9]
        %3206 = vst [vmem:[%s3205] sm:$0xff] %v3198
        %3207 = vst [vmem:[%s3205 + $0x8] sm:$0xff] %v3199
        %3208 = vst [vmem:[%s356] sm:$0xff] %v3196
        %3209 = vst [vmem:[%s356 + $0x8] sm:$0xff] %v3197
        %s3210 = scalar_lea.vmem %s356, %s370 [#allocation8]
        %3211 = vst [vmem:[%s3210] sm:$0xff] %v3198
        %3212 = vst [vmem:[%s3210 + $0x8] sm:$0xff] %v3199
        %s3213 = scalar_lea.vmem %s356, %s374 [#allocation8]
        %3214 = vst [vmem:[%s3213] sm:$0xff] %v3148
        %3215 = vst [vmem:[%s3213 + $0x8] sm:$0xff] %v3149
        %s3216 = scalar_lea.vmem %s356, %s378 [#allocation8]
        %3217 = vst [vmem:[%s3216] sm:$0xff] %v3150
        %3218 = vst [vmem:[%s3216 + $0x8] sm:$0xff] %v3151
        %s3219 = sand.u32 %s104, 1
        %s3220 = sand.u32 %s104, 1
        %s3221 = smul.addr %s3220, 96
        %s3222 = scalar_lea.vmem [#allocation8], %s3221
        %s3223 = sand.u32 %s130, 1
        %s3224 = scalar_lea.sflag [#allocation4], %s3223
        %s3225 = sand.u32 %s130, 1
        %s3226 = smul.addr %s3225, 256
        %s3227 = scalar_lea.vmem [#allocation9], %s3226
        // Predicated region
        $region79: #{volume_forward.1} parent=65 // pred_check
          %p3228 = pneg %p114
        $region80: #{volume_forward.1} parent=65 // pred_check_branch
          %3230 = sbr.rel (%p3228) target = $region82
        $region81: #{volume_forward.1} parent=65 // pred_region
          %s3231 = smul.u32 2, %s23
          %s3232 = smul.addr %s3231, 8
          %s3233 = scalar_lea.vmem %s3, %s3232
          // Predicated region
          $region83: #{volume_forward.1} parent=81 // pred_check
            _
          $region84: #{volume_forward.1} parent=81 // pred_check_branch
            %3235 = sbr.rel (0) target = $region86
          $region85: #{volume_forward.1} parent=81 // pred_region
            // Predicated region
            $region87: #{volume_forward.1} parent=85 // pred_check
              _
            $region88: #{volume_forward.1} parent=85 // pred_check_branch
              %3237 = sbr.rel (0) target = $region90
            $region89: #{volume_forward.1} parent=85 // pred_region
              // Predicated region
              $region102: #{volume_forward.1} parent=89 // pred_check
                _
              $region103: #{volume_forward.1} parent=89 // pred_check_branch
                %3275 = sbr.rel (0) target = $region105
              $region104: #{volume_forward.1} parent=89 // pred_region
                loop: start=0, step=1, limit=1
                $region106: #{volume_forward.1} parent=104 // loop_pre_header
                  _
                $region107: #{volume_forward.1} parent=104 // loop_header
                  %s3277 = sphi 0, %s3281
                  %p3278 = scmp.ge.s32.totalorder %s3277, 1
                  %s3282 = sphi %s3222, %s3222
                  %s3283 = sphi %s3233, %s3233
                $region108: #{volume_forward.1} parent=104 // loop_header_branch
                  %3280 = sbr.rel (%p3278) target = $region112
                $region109: #{volume_forward.1} parent=104 // loop_body
                  %v3284 = vld [vmem:[%s3282] sm:$0xff]
                  %3285 = vst [vmem:[%s3283] sm:$0xff] %v3284
                  %v3286 = vld [vmem:[%s3282 + $0x8] sm:$0xff]
                  %3287 = vst [vmem:[%s3283 + $0x8] sm:$0xff] %v3286
                  %v3288 = vld [vmem:[%s3282 + $0x10] sm:$0xff]
                  %3289 = vst [vmem:[%s3283 + $0x20] sm:$0xff] %v3288
                  %v3290 = vld [vmem:[%s3282 + $0x18] sm:$0xff]
                  %3291 = vst [vmem:[%s3283 + $0x28] sm:$0xff] %v3290
                  %v3292 = vld [vmem:[%s3282 + $0x20] sm:$0xff]
                  %3293 = vst [vmem:[%s3283 + $0x40] sm:$0xff] %v3292
                  %v3294 = vld [vmem:[%s3282 + $0x28] sm:$0xff]
                  %3295 = vst [vmem:[%s3283 + $0x48] sm:$0xff] %v3294
                  %v3296 = vld [vmem:[%s3282 + $0x30] sm:$0xff]
                  %3297 = vst [vmem:[%s3283 + $0x60] sm:$0xff] %v3296
                  %v3298 = vld [vmem:[%s3282 + $0x38] sm:$0xff]
                  %3299 = vst [vmem:[%s3283 + $0x68] sm:$0xff] %v3298
                  %v3300 = vld [vmem:[%s3282 + $0x40] sm:$0xff]
                  %3301 = vst [vmem:[%s3283 + $0x80] sm:$0xff] %v3300
                  %v3302 = vld [vmem:[%s3282 + $0x48] sm:$0xff]
                  %3303 = vst [vmem:[%s3283 + $0x88] sm:$0xff] %v3302
                  %v3304 = vld [vmem:[%s3282 + $0x50] sm:$0xff]
                  %3305 = vst [vmem:[%s3283 + $0xa0] sm:$0xff] %v3304
                  %v3306 = vld [vmem:[%s3282 + $0x58] sm:$0xff]
                  %3307 = vst [vmem:[%s3283 + $0xa8] sm:$0xff] %v3306
                $region110: #{volume_forward.1} parent=104 // loop_footer
                  %s3281 = sadd.s32 1, %s3277
                $region111: #{volume_forward.1} parent=104 // loop_footer_branch
                  %3276 = sbr.rel target = $region107
                $region112: #{volume_forward.1} parent=104 // loop_exit
                  _
              $region105: #{volume_forward.1} parent=89 // pred_fallthru
                _
              // Predicated region
              $region113: #{volume_forward.1} parent=89 // pred_check
                _
              $region114: #{volume_forward.1} parent=89 // pred_check_branch
                %3309 = sbr.rel target = $region116
              $region115: #{volume_forward.1} parent=89 // pred_region
                _
              $region116: #{volume_forward.1} parent=89 // pred_fallthru
                _
            $region90: #{volume_forward.1} parent=85 // pred_fallthru
              _
            // Predicated region
            $region91: #{volume_forward.1} parent=85 // pred_check
              _
            $region92: #{volume_forward.1} parent=85 // pred_check_branch
              %3239 = sbr.rel target = $region94
            $region93: #{volume_forward.1} parent=85 // pred_region
              %s3241 = ssub.s32 256, 1
              loop: start=0, step=1, limit=1
              $region95: #{volume_forward.1} parent=93 // loop_pre_header
                _
              $region96: #{volume_forward.1} parent=93 // loop_header
                %s3243 = sphi 0, %s3247
                %p3244 = scmp.ge.s32.totalorder %s3243, 1
                %s3248 = sphi %s3222, %s3222
                %s3249 = sphi %s3233, %s3233
              $region97: #{volume_forward.1} parent=93 // loop_header_branch
                %3246 = sbr.rel (%p3244) target = $region101
              $region98: #{volume_forward.1} parent=93 // loop_body
                %v3250 = vld [vmem:[%s3248] sm:%s3241]
                %3251 = vst [vmem:[%s3249] sm:%s3241] %v3250
                %v3252 = vld [vmem:[%s3248 + $0x8] sm:%s3241]
                %3253 = vst [vmem:[%s3249 + $0x8] sm:%s3241] %v3252
                %v3254 = vld [vmem:[%s3248 + $0x10] sm:%s3241]
                %3255 = vst [vmem:[%s3249 + $0x20] sm:%s3241] %v3254
                %v3256 = vld [vmem:[%s3248 + $0x18] sm:%s3241]
                %3257 = vst [vmem:[%s3249 + $0x28] sm:%s3241] %v3256
                %v3258 = vld [vmem:[%s3248 + $0x20] sm:%s3241]
                %3259 = vst [vmem:[%s3249 + $0x40] sm:%s3241] %v3258
                %v3260 = vld [vmem:[%s3248 + $0x28] sm:%s3241]
                %3261 = vst [vmem:[%s3249 + $0x48] sm:%s3241] %v3260
                %v3262 = vld [vmem:[%s3248 + $0x30] sm:%s3241]
                %3263 = vst [vmem:[%s3249 + $0x60] sm:%s3241] %v3262
                %v3264 = vld [vmem:[%s3248 + $0x38] sm:%s3241]
                %3265 = vst [vmem:[%s3249 + $0x68] sm:%s3241] %v3264
                %v3266 = vld [vmem:[%s3248 + $0x40] sm:%s3241]
                %3267 = vst [vmem:[%s3249 + $0x80] sm:%s3241] %v3266
                %v3268 = vld [vmem:[%s3248 + $0x48] sm:%s3241]
                %3269 = vst [vmem:[%s3249 + $0x88] sm:%s3241] %v3268
                %v3270 = vld [vmem:[%s3248 + $0x50] sm:%s3241]
                %3271 = vst [vmem:[%s3249 + $0xa0] sm:%s3241] %v3270
                %v3272 = vld [vmem:[%s3248 + $0x58] sm:%s3241]
                %3273 = vst [vmem:[%s3249 + $0xa8] sm:%s3241] %v3272
              $region99: #{volume_forward.1} parent=93 // loop_footer
                %s3247 = sadd.s32 1, %s3243
              $region100: #{volume_forward.1} parent=93 // loop_footer_branch
                %3242 = sbr.rel target = $region96
              $region101: #{volume_forward.1} parent=93 // loop_exit
                _
            $region94: #{volume_forward.1} parent=85 // pred_fallthru
              _
          $region86: #{volume_forward.1} parent=81 // pred_fallthru
            _
          %3310 = vnop
        $region82: #{volume_forward.1} parent=65 // pred_fallthru
          _
        // Predicated region
        $region117: #{volume_forward.1} parent=65 // pred_check
          %p3311 = pneg %p140
        $region118: #{volume_forward.1} parent=65 // pred_check_branch
          %3313 = sbr.rel (%p3311) target = $region120
        $region119: #{volume_forward.1} parent=65 // pred_region
          #allocation13 [shape = 'u32[6]{0}', space=smem, size = 0x18, scoped, tag = 'DMA stride descriptor']
          %s3314 = smul.u32 2, %s23
          %3316 = vsyncadd %s3224, 0
          %s3317 = smul.addr %s3314, 8
          %s3318 = scalar_lea.hbm %s4, %s3317
          %s3320 = sshll.u32 1, 14
          %s3321 = sxor.u32 4294967295, %s3320
          %s3324 = sshll.u32 7, 18
          %s3325 = sxor.u32 4294967295, %s3324
          %s3326 = sand.u32 0, %s3325
          %s3328 = sor.u32 %s3326, 0
          %s3329 = sshll.u32 %s3227, 4
          %s3330 = int_to_ptr.vmem [resolvable:$true] %s3329
          %s3331 = sshll.u32 %s3318, 4
          %s3332 = int_to_ptr.hbm [resolvable:$true] %s3331
          %3338 = sst [smem:[#allocation13]] 256
          %s3339 = scalar_lea.smem [#allocation13], 1
          %3340 = sst [smem:[%s3339]] 512
          %s3341 = scalar_lea.smem [#allocation13], 2
          %3342 = sst [smem:[%s3341]] 2
          %s3343 = scalar_lea.smem [#allocation13], 3
          %3344 = sst [smem:[%s3343]] 128
          %s3345 = scalar_lea.smem [#allocation13], 4
          %3346 = sst [smem:[%s3345]] 128
          %s3347 = scalar_lea.smem [#allocation13], 5
          %3348 = sst [smem:[%s3347]] 8
          %3350 = dma.general %s3330, 4096, %s3332, %s3224, [#allocation12], [#allocation13], %s3328, 0
        $region120: #{volume_forward.1} parent=65 // pred_fallthru
          _
      $region66: #{volume_forward.1} parent=5 // pred_fallthru
        _
      %p3351 = scmp.le.s32.totalorder 2, %s18
      // Predicated region
      $region121: #{volume_forward.1} parent=5 // pred_check
        %p3352 = pneg %p3351
      $region122: #{volume_forward.1} parent=5 // pred_check_branch
        %3354 = sbr.rel (%p3352) target = $region124
      $region123: #{volume_forward.1} parent=5 // pred_region
        %s3355 = ssub.s32 %s18, 2
        // Predicated region
        $region125: #{volume_forward.1} parent=123 // pred_check
          %p3356 = pneg %p120
        $region126: #{volume_forward.1} parent=123 // pred_check_branch
          %3358 = sbr.rel (%p3356) target = $region128
        $region127: #{volume_forward.1} parent=123 // pred_region
          %s3359 = sand.u32 %s105, 1
          %s3360 = sand.u32 %s105, 1
          %s3361 = smul.addr %s3360, 96
          %s3362 = scalar_lea.vmem [#allocation8], %s3361
        $region128: #{volume_forward.1} parent=123 // pred_fallthru
          _
        // Predicated region
        $region129: #{volume_forward.1} parent=123 // pred_check
          %p3363 = pneg %p146
        $region130: #{volume_forward.1} parent=123 // pred_check_branch
          %3365 = sbr.rel (%p3363) target = $region132
        $region131: #{volume_forward.1} parent=123 // pred_region
          %s3366 = sand.u32 %s131, 1
          %s3367 = scalar_lea.sflag [#allocation4], %s3366
          %s3368 = sand.u32 %s131, 1
          %s3369 = smul.addr %s3368, 256
          %s3370 = scalar_lea.vmem [#allocation9], %s3369
          %3372 = dma.done %s3367, 4096
        $region132: #{volume_forward.1} parent=123 // pred_fallthru
          _
      $region124: #{volume_forward.1} parent=5 // pred_fallthru
        _
    $region6: #{volume_forward.1} parent=1 // loop_footer
      %s22 = sadd.s32 1, %s18
    $region7: #{volume_forward.1} parent=1 // loop_footer_branch
      %17 = sbr.rel target = $region3
    $region8: #{volume_forward.1} parent=1 // loop_exit
      _
    %3373 = vsyncpa [#allocation3], 1
    %s3374 = scalar_lea.sflag [#allocation3], 1
    %3375 = vsyncpa %s3374, 1
    %3376 = vsyncpa [#allocation4], 1
    %s3377 = scalar_lea.sflag [#allocation4], 1
    %3378 = vsyncpa %s3377, 1
    %3379 = vsyncpa [#allocation5], 1
    %s3380 = scalar_lea.sflag [#allocation5], 1
    %3381 = vsyncpa %s3380, 1

</llo_original>
